<compile_context>
chip_gen: v7x
topology: tpu7x:2x2x1
jax: 0.10.0
libtpu: 0.0.40
codegen_flags: <defaults>
</compile_context>

<pallas_src>
import jax
import jax.numpy as jnp
import numpy as np
from jax.experimental import pallas as pl
from jax.experimental.pallas import tpu as pltpu


# --------------------------------------------------------------------------
# In-kernel helpers (pure functions of loaded values / refs, traced inline).
# --------------------------------------------------------------------------
def _conv_im2col_relu(pad_ref, w_col, b_row, Hc, Wc, Cin):
    """3x3 conv (halo already materialized in pad_ref) + bias + ReLU as ONE matmul.

    pad_ref: VMEM ref (Hc+2, Wc+2, Cin) with a zero border.
    w_col  : (9*Cin, Cout) with rows ordered (ky, kx, cin)  [= w.reshape(9*Cin, Cout)].
    b_row  : (1, Cout).
    Returns (Hc*Wc, Cout) float32, post-ReLU.
    """
    patches = []
    for dy in range(3):
        for dx in range(3):
            patches.append(
                pad_ref[dy:dy + Hc, dx:dx + Wc, :].reshape(Hc * Wc, Cin))
    x_col = jnp.concatenate(patches, axis=-1)                 # (Hc*Wc, 9*Cin)
    y = jnp.dot(x_col, w_col, preferred_element_type=jnp.float32)
    return jnp.maximum(y + b_row, 0.0)


def _maxpool2x2(y, Hc, Wc, C):
    """y: (Hc*Wc, C), rows in (h, w) row-major order -> pooled (Hc//2, Wc//2, C)."""
    yr = y.reshape(Hc // 2, 2, Wc, C)
    m = jnp.maximum(yr[:, 0, :, :], yr[:, 1, :, :])           # (Hc//2, Wc, C)
    mr = m.reshape(Hc // 2, Wc // 2, 2, C)
    return jnp.maximum(mr[:, :, 0, :], mr[:, :, 1, :])        # (Hc//2, Wc//2, C)


# --------------------------------------------------------------------------
# Fused encoder kernel: conv1+relu+pool + conv2+relu+pool + conv3+relu,
# one image per grid step, all intermediates in VMEM.
# --------------------------------------------------------------------------
def encoder_kernel(x_ref, w1_ref, b1_ref, w2_ref, b2_ref, w3_ref, b3_ref,
                   o_ref, pad1, pad2, pad3):
    # x_ref : (1, H, W, 3)                NHWC input tile
    # w1_ref: (3, 3, 3, 32)   b1_ref: (1, 32)
    # w2_ref: (288, 64)       b2_ref: (1, 64)     (im2col weights, rows = ky,kx,cin)
    # w3_ref: (576, 128)      b3_ref: (1, 128)
    # o_ref : (1, H//4, W//4, 128)
    # pad1/2/3: VMEM halo scratch for each conv's (zero-padded) input.
    _, H, W, _ = x_ref.shape
    H2, W2 = H // 2, W // 2
    H4, W4 = H // 4, W // 4

    # ---- layer 1: conv(3->32) + ReLU + pool --------------------------------
    pad1[...] = jnp.zeros_like(pad1)                          # zero halo border
    pad1[1:H + 1, 1:W + 1, :] = x_ref[0]
    acc = jnp.zeros((H * W, 32), jnp.float32)
    for dy in range(3):                   # Cin=3 -> 9 tiny dots; negligible work
        for dx in range(3):
            patch = pad1[dy:dy + H, dx:dx + W, :].reshape(H * W, 3)
            acc = acc + jnp.dot(patch, w1_ref[dy, dx],
                                preferred_element_type=jnp.float32)
    y1 = jnp.maximum(acc + b1_ref[...], 0.0)                  # (H*W, 32)
    p1 = _maxpool2x2(y1, H, W, 32)                            # (H2, W2, 32)

    # ---- layer 2: conv(32->64) + ReLU + pool (single K=288 matmul) ---------
    pad2[...] = jnp.zeros_like(pad2)
    pad2[1:H2 + 1, 1:W2 + 1, :] = p1
    y2 = _conv_im2col_relu(pad2, w2_ref[...], b2_ref[...], H2, W2, 32)
    p2 = _maxpool2x2(y2, H2, W2, 64)                          # (H4, W4, 64)

    # ---- layer 3 (bottleneck): conv(64->128) + ReLU (single K=576 matmul) --
    pad3[...] = jnp.zeros_like(pad3)
    pad3[1:H4 + 1, 1:W4 + 1, :] = p2
    y3 = _conv_im2col_relu(pad3, w3_ref[...], b3_ref[...], H4, W4, 64)

    o_ref[...] = y3.reshape(1, H4, W4, 128).astype(o_ref.dtype)


def encoder_pallas_nhwc(x_nhwc, w1, b1, w2_col, b2, w3_col, b3):
    N, H, W, _ = x_nhwc.shape
    assert H % 4 == 0 and W % 4 == 0
    H2, W2, H4, W4 = H // 2, W // 2, H // 4, W // 4
    # TODO(synk): for large H,W (e.g. 224) add a row-strip grid axis with a
    # 1-row halo so blocks fit v7x's smaller VMEM and both TCs get work.
    return pl.pallas_call(
        encoder_kernel,
        out_shape=jax.ShapeDtypeStruct((N, H4, W4, 128), jnp.float32),
        grid=(N,),
        in_specs=[
            pl.BlockSpec((1, H, W, 3), lambda n: (n, 0, 0, 0)),
            pl.BlockSpec((3, 3, 3, 32), lambda n: (0, 0, 0, 0)),
            pl.BlockSpec((1, 32), lambda n: (0, 0)),
            pl.BlockSpec((9 * 32, 64), lambda n: (0, 0)),
            pl.BlockSpec((1, 64), lambda n: (0, 0)),
            pl.BlockSpec((9 * 64, 128), lambda n: (0, 0)),
            pl.BlockSpec((1, 128), lambda n: (0, 0)),
        ],
        out_specs=pl.BlockSpec((1, H4, W4, 128), lambda n: (n, 0, 0, 0)),
        scratch_shapes=[
            pltpu.VMEM((H + 2, W + 2, 3), jnp.float32),
            pltpu.VMEM((H2 + 2, W2 + 2, 32), jnp.float32),
            pltpu.VMEM((H4 + 2, W4 + 2, 64), jnp.float32),
        ],
        compiler_params=pltpu.CompilerParams(
            dimension_semantics=("parallel",)),
    )(x_nhwc, w1, b1.reshape(1, 32), w2_col, b2.reshape(1, 64),
      w3_col, b3.reshape(1, 128))


# --------------------------------------------------------------------------
# Parameters (deterministic, PyTorch-default-style uniform init), HWIO layout.
# --------------------------------------------------------------------------
def init_params(key):
    ks = jax.random.split(key, 6)

    def conv_init(kw, kb, cin, cout):
        bound = 1.0 / np.sqrt(cin * 3 * 3)
        w = jax.random.uniform(kw, (3, 3, cin, cout), jnp.float32, -bound, bound)
        b = jax.random.uniform(kb, (cout,), jnp.float32, -bound, bound)
        return w, b

    w1, b1 = conv_init(ks[0], ks[1], 3, 32)
    w2, b2 = conv_init(ks[2], ks[3], 32, 64)
    w3, b3 = conv_init(ks[4], ks[5], 64, 128)
    return (w1, b1, w2, b2, w3, b3)


# --------------------------------------------------------------------------
# Full Encoder forward (NCHW in, NCHW out — matches the nn.Module).
# --------------------------------------------------------------------------
@jax.jit
def encoder_forward(x_nchw, params):
    w1, b1, w2, b2, w3, b3 = params
    x = jnp.transpose(x_nchw, (0, 2, 3, 1))                   # NCHW -> NHWC
    w2_col = w2.reshape(9 * 32, 64)                           # rows = (ky, kx, cin)
    w3_col = w3.reshape(9 * 64, 128)
    y = encoder_pallas_nhwc(x, w1, b1, w2_col, b2, w3_col, b3)
    return jnp.transpose(y, (0, 3, 1, 2))                     # NHWC -> NCHW


# Pure-JAX reference (same math via XLA convs) for correctness checking.
def encoder_reference(x_nchw, params):
    w1, b1, w2, b2, w3, b3 = params
    x = jnp.transpose(x_nchw, (0, 2, 3, 1))

    def conv(x, w, b):
        y = jax.lax.conv_general_dilated(
            x, w, window_strides=(1, 1), padding=((1, 1), (1, 1)),
            dimension_numbers=("NHWC", "HWIO", "NHWC"))
        return jax.nn.relu(y + b)

    def pool(x):
        return jax.lax.reduce_window(
            x, -jnp.inf, jax.lax.max, (1, 2, 2, 1), (1, 2, 2, 1), "VALID")

    x = pool(conv(x, w1, b1))
    x = pool(conv(x, w2, b2))
    x = conv(x, w3, b3)
    return jnp.transpose(x, (0, 3, 1, 2))


if __name__ == "__main__":
    key = jax.random.PRNGKey(0)
    k_x, k_p = jax.random.split(key)

    # Small input consistent with the module: NCHW, 3 input channels.
    x = jax.random.normal(k_x, (2, 3, 16, 16), jnp.float32)
    params = init_params(k_p)

    out = encoder_forward(x, params)
    out = jax.block_until_ready(out)

    assert out.shape == (2, 128, 4, 4), out.shape

    ref = jax.block_until_ready(encoder_reference(x, params))
    np.testing.assert_allclose(np.asarray(out), np.asarray(ref),
                               rtol=1e-3, atol=1e-3)

    print("KERNEL_OK")
</pallas_src>

<mosaic_0001>
module attributes {stable_mosaic.version = 11 : i64} {
  func.func @encoder_kernel(%arg0: i32, %arg1: memref<1x16x16x3xf32, #tpu.memory_space<vmem>>, %arg2: memref<3x3x3x32xf32, #tpu.memory_space<vmem>>, %arg3: memref<1x32xf32, #tpu.memory_space<vmem>>, %arg4: memref<288x64xf32, #tpu.memory_space<vmem>>, %arg5: memref<1x64xf32, #tpu.memory_space<vmem>>, %arg6: memref<576x128xf32, #tpu.memory_space<vmem>>, %arg7: memref<1x128xf32, #tpu.memory_space<vmem>>, %arg8: memref<1x4x4x128xf32, #tpu.memory_space<vmem>>, %arg9: memref<18x18x3xf32, #tpu.memory_space<vmem>>, %arg10: memref<10x10x32xf32, #tpu.memory_space<vmem>>, %arg11: memref<6x6x64xf32, #tpu.memory_space<vmem>>) attributes {dimension_semantics = [#tpu.dimension_semantics<parallel>], iteration_bounds = array<i64: 2>, scalar_prefetch = 0 : i64, scratch_operands = 3 : i64, tpu.core_type = #tpu.core_type<tc>, window_params = [{transform_indices = @transform_0, window_bounds = array<i64: 1, 16, 16, 3>}, {pipeline_mode = #tpu.pipeline_mode<synchronous>, transform_indices = @transform_1, window_bounds = array<i64: 3, 3, 3, 32>}, {pipeline_mode = #tpu.pipeline_mode<synchronous>, transform_indices = @transform_2, window_bounds = array<i64: 1, 32>}, {pipeline_mode = #tpu.pipeline_mode<synchronous>, transform_indices = @transform_3, window_bounds = array<i64: 288, 64>}, {pipeline_mode = #tpu.pipeline_mode<synchronous>, transform_indices = @transform_4, window_bounds = array<i64: 1, 64>}, {pipeline_mode = #tpu.pipeline_mode<synchronous>, transform_indices = @transform_5, window_bounds = array<i64: 576, 128>}, {pipeline_mode = #tpu.pipeline_mode<synchronous>, transform_indices = @transform_6, window_bounds = array<i64: 1, 128>}, {transform_indices = @transform_7, window_bounds = array<i64: 1, 4, 4, 128>}]} {
    %cst = arith.constant 0.000000e+00 : f32
    %0 = vector.broadcast %cst : f32 to vector<18x18x3xf32>
    %c0 = arith.constant 0 : index
    %c0_0 = arith.constant 0 : index
    %c0_1 = arith.constant 0 : index
    %1 = vector.load %arg9[%c0, %c0_0, %c0_1] : memref<18x18x3xf32, #tpu.memory_space<vmem>>, vector<18x18x3xf32>
    tpu.vector_store %arg9[%c0, %c0_0, %c0_1], %0 {strides = array<i32>} : memref<18x18x3xf32, #tpu.memory_space<vmem>>, vector<18x18x3xf32>,
    %c0_2 = arith.constant 0 : index
    %c0_3 = arith.constant 0 : index
    %c0_4 = arith.constant 0 : index
    %c0_5 = arith.constant 0 : index
    %2 = vector.load %arg1[%c0_2, %c0_3, %c0_4, %c0_5] : memref<1x16x16x3xf32, #tpu.memory_space<vmem>>, vector<1x16x16x3xf32>
    %3 = vector.shape_cast %2 : vector<1x16x16x3xf32> to vector<16x16x3xf32>
    %c1 = arith.constant 1 : index
    %c1_6 = arith.constant 1 : index
    %c0_7 = arith.constant 0 : index
    %4 = vector.load %arg9[%c1, %c1_6, %c0_7] : memref<18x18x3xf32, #tpu.memory_space<vmem>>, vector<16x16x3xf32>
    tpu.vector_store %arg9[%c1, %c1_6, %c0_7], %3 {strides = array<i32>} : memref<18x18x3xf32, #tpu.memory_space<vmem>>, vector<16x16x3xf32>,
    %cst_8 = arith.constant 0.000000e+00 : f32
    %5 = vector.broadcast %cst_8 : f32 to vector<256x32xf32>
    %c0_9 = arith.constant 0 : index
    %c0_10 = arith.constant 0 : index
    %c0_11 = arith.constant 0 : index
    %6 = vector.load %arg9[%c0_9, %c0_10, %c0_11] : memref<18x18x3xf32, #tpu.memory_space<vmem>>, vector<16x16x3xf32>
    %7 = vector.shape_cast %6 : vector<16x16x3xf32> to vector<256x3xf32>
    %c0_12 = arith.constant 0 : index
    %c0_13 = arith.constant 0 : index
    %c0_14 = arith.constant 0 : index
    %c0_15 = arith.constant 0 : index
    %8 = vector.load %arg2[%c0_12, %c0_13, %c0_14, %c0_15] : memref<3x3x3x32xf32, #tpu.memory_space<vmem>>, vector<1x1x3x32xf32>
    %9 = vector.shape_cast %8 : vector<1x1x3x32xf32> to vector<3x32xf32>
    %cst_16 = arith.constant dense<0.000000e+00> : vector<256x32xf32>
    %10 = tpu.matmul %7, %9, %cst_16 {dimension_numbers = #tpu.dot_dimension_numbers<[1], [0], [0], [1], [0, 0, 1, 1], [], []>} : vector<256x3xf32>, vector<3x32xf32>, vector<256x32xf32> -> vector<256x32xf32>
    %11 = arith.addf %5, %10 : vector<256x32xf32>
    %c0_17 = arith.constant 0 : index
    %c1_18 = arith.constant 1 : index
    %c0_19 = arith.constant 0 : index
    %12 = vector.load %arg9[%c0_17, %c1_18, %c0_19] : memref<18x18x3xf32, #tpu.memory_space<vmem>>, vector<16x16x3xf32>
    %13 = vector.shape_cast %12 : vector<16x16x3xf32> to vector<256x3xf32>
    %c0_20 = arith.constant 0 : index
    %c1_21 = arith.constant 1 : index
    %c0_22 = arith.constant 0 : index
    %c0_23 = arith.constant 0 : index
    %14 = vector.load %arg2[%c0_20, %c1_21, %c0_22, %c0_23] : memref<3x3x3x32xf32, #tpu.memory_space<vmem>>, vector<1x1x3x32xf32>
    %15 = vector.shape_cast %14 : vector<1x1x3x32xf32> to vector<3x32xf32>
    %cst_24 = arith.constant dense<0.000000e+00> : vector<256x32xf32>
    %16 = tpu.matmul %13, %15, %cst_24 {dimension_numbers = #tpu.dot_dimension_numbers<[1], [0], [0], [1], [0, 0, 1, 1], [], []>} : vector<256x3xf32>, vector<3x32xf32>, vector<256x32xf32> -> vector<256x32xf32>
    %17 = arith.addf %11, %16 : vector<256x32xf32>
    %c0_25 = arith.constant 0 : index
    %c2 = arith.constant 2 : index
    %c0_26 = arith.constant 0 : index
    %18 = vector.load %arg9[%c0_25, %c2, %c0_26] : memref<18x18x3xf32, #tpu.memory_space<vmem>>, vector<16x16x3xf32>
    %19 = vector.shape_cast %18 : vector<16x16x3xf32> to vector<256x3xf32>
    %c0_27 = arith.constant 0 : index
    %c2_28 = arith.constant 2 : index
    %c0_29 = arith.constant 0 : index
    %c0_30 = arith.constant 0 : index
    %20 = vector.load %arg2[%c0_27, %c2_28, %c0_29, %c0_30] : memref<3x3x3x32xf32, #tpu.memory_space<vmem>>, vector<1x1x3x32xf32>
    %21 = vector.shape_cast %20 : vector<1x1x3x32xf32> to vector<3x32xf32>
    %cst_31 = arith.constant dense<0.000000e+00> : vector<256x32xf32>
    %22 = tpu.matmul %19, %21, %cst_31 {dimension_numbers = #tpu.dot_dimension_numbers<[1], [0], [0], [1], [0, 0, 1, 1], [], []>} : vector<256x3xf32>, vector<3x32xf32>, vector<256x32xf32> -> vector<256x32xf32>
    %23 = arith.addf %17, %22 : vector<256x32xf32>
    %c1_32 = arith.constant 1 : index
    %c0_33 = arith.constant 0 : index
    %c0_34 = arith.constant 0 : index
    %24 = vector.load %arg9[%c1_32, %c0_33, %c0_34] : memref<18x18x3xf32, #tpu.memory_space<vmem>>, vector<16x16x3xf32>
    %25 = vector.shape_cast %24 : vector<16x16x3xf32> to vector<256x3xf32>
    %c1_35 = arith.constant 1 : index
    %c0_36 = arith.constant 0 : index
    %c0_37 = arith.constant 0 : index
    %c0_38 = arith.constant 0 : index
    %26 = vector.load %arg2[%c1_35, %c0_36, %c0_37, %c0_38] : memref<3x3x3x32xf32, #tpu.memory_space<vmem>>, vector<1x1x3x32xf32>
    %27 = vector.shape_cast %26 : vector<1x1x3x32xf32> to vector<3x32xf32>
    %cst_39 = arith.constant dense<0.000000e+00> : vector<256x32xf32>
    %28 = tpu.matmul %25, %27, %cst_39 {dimension_numbers = #tpu.dot_dimension_numbers<[1], [0], [0], [1], [0, 0, 1, 1], [], []>} : vector<256x3xf32>, vector<3x32xf32>, vector<256x32xf32> -> vector<256x32xf32>
    %29 = arith.addf %23, %28 : vector<256x32xf32>
    %c1_40 = arith.constant 1 : index
    %c1_41 = arith.constant 1 : index
    %c0_42 = arith.constant 0 : index
    %30 = vector.load %arg9[%c1_40, %c1_41, %c0_42] : memref<18x18x3xf32, #tpu.memory_space<vmem>>, vector<16x16x3xf32>
    %31 = vector.shape_cast %30 : vector<16x16x3xf32> to vector<256x3xf32>
    %c1_43 = arith.constant 1 : index
    %c1_44 = arith.constant 1 : index
    %c0_45 = arith.constant 0 : index
    %c0_46 = arith.constant 0 : index
    %32 = vector.load %arg2[%c1_43, %c1_44, %c0_45, %c0_46] : memref<3x3x3x32xf32, #tpu.memory_space<vmem>>, vector<1x1x3x32xf32>
    %33 = vector.shape_cast %32 : vector<1x1x3x32xf32> to vector<3x32xf32>
    %cst_47 = arith.constant dense<0.000000e+00> : vector<256x32xf32>
    %34 = tpu.matmul %31, %33, %cst_47 {dimension_numbers = #tpu.dot_dimension_numbers<[1], [0], [0], [1], [0, 0, 1, 1], [], []>} : vector<256x3xf32>, vector<3x32xf32>, vector<256x32xf32> -> vector<256x32xf32>
    %35 = arith.addf %29, %34 : vector<256x32xf32>
    %c1_48 = arith.constant 1 : index
    %c2_49 = arith.constant 2 : index
    %c0_50 = arith.constant 0 : index
    %36 = vector.load %arg9[%c1_48, %c2_49, %c0_50] : memref<18x18x3xf32, #tpu.memory_space<vmem>>, vector<16x16x3xf32>
    %37 = vector.shape_cast %36 : vector<16x16x3xf32> to vector<256x3xf32>
    %c1_51 = arith.constant 1 : index
    %c2_52 = arith.constant 2 : index
    %c0_53 = arith.constant 0 : index
    %c0_54 = arith.constant 0 : index
    %38 = vector.load %arg2[%c1_51, %c2_52, %c0_53, %c0_54] : memref<3x3x3x32xf32, #tpu.memory_space<vmem>>, vector<1x1x3x32xf32>
    %39 = vector.shape_cast %38 : vector<1x1x3x32xf32> to vector<3x32xf32>
    %cst_55 = arith.constant dense<0.000000e+00> : vector<256x32xf32>
    %40 = tpu.matmul %37, %39, %cst_55 {dimension_numbers = #tpu.dot_dimension_numbers<[1], [0], [0], [1], [0, 0, 1, 1], [], []>} : vector<256x3xf32>, vector<3x32xf32>, vector<256x32xf32> -> vector<256x32xf32>
    %41 = arith.addf %35, %40 : vector<256x32xf32>
    %c2_56 = arith.constant 2 : index
    %c0_57 = arith.constant 0 : index
    %c0_58 = arith.constant 0 : index
    %42 = vector.load %arg9[%c2_56, %c0_57, %c0_58] : memref<18x18x3xf32, #tpu.memory_space<vmem>>, vector<16x16x3xf32>
    %43 = vector.shape_cast %42 : vector<16x16x3xf32> to vector<256x3xf32>
    %c2_59 = arith.constant 2 : index
    %c0_60 = arith.constant 0 : index
    %c0_61 = arith.constant 0 : index
    %c0_62 = arith.constant 0 : index
    %44 = vector.load %arg2[%c2_59, %c0_60, %c0_61, %c0_62] : memref<3x3x3x32xf32, #tpu.memory_space<vmem>>, vector<1x1x3x32xf32>
    %45 = vector.shape_cast %44 : vector<1x1x3x32xf32> to vector<3x32xf32>
    %cst_63 = arith.constant dense<0.000000e+00> : vector<256x32xf32>
    %46 = tpu.matmul %43, %45, %cst_63 {dimension_numbers = #tpu.dot_dimension_numbers<[1], [0], [0], [1], [0, 0, 1, 1], [], []>} : vector<256x3xf32>, vector<3x32xf32>, vector<256x32xf32> -> vector<256x32xf32>
    %47 = arith.addf %41, %46 : vector<256x32xf32>
    %c2_64 = arith.constant 2 : index
    %c1_65 = arith.constant 1 : index
    %c0_66 = arith.constant 0 : index
    %48 = vector.load %arg9[%c2_64, %c1_65, %c0_66] : memref<18x18x3xf32, #tpu.memory_space<vmem>>, vector<16x16x3xf32>
    %49 = vector.shape_cast %48 : vector<16x16x3xf32> to vector<256x3xf32>
    %c2_67 = arith.constant 2 : index
    %c1_68 = arith.constant 1 : index
    %c0_69 = arith.constant 0 : index
    %c0_70 = arith.constant 0 : index
    %50 = vector.load %arg2[%c2_67, %c1_68, %c0_69, %c0_70] : memref<3x3x3x32xf32, #tpu.memory_space<vmem>>, vector<1x1x3x32xf32>
    %51 = vector.shape_cast %50 : vector<1x1x3x32xf32> to vector<3x32xf32>
    %cst_71 = arith.constant dense<0.000000e+00> : vector<256x32xf32>
    %52 = tpu.matmul %49, %51, %cst_71 {dimension_numbers = #tpu.dot_dimension_numbers<[1], [0], [0], [1], [0, 0, 1, 1], [], []>} : vector<256x3xf32>, vector<3x32xf32>, vector<256x32xf32> -> vector<256x32xf32>
    %53 = arith.addf %47, %52 : vector<256x32xf32>
    %c2_72 = arith.constant 2 : index
    %c2_73 = arith.constant 2 : index
    %c0_74 = arith.constant 0 : index
    %54 = vector.load %arg9[%c2_72, %c2_73, %c0_74] : memref<18x18x3xf32, #tpu.memory_space<vmem>>, vector<16x16x3xf32>
    %55 = vector.shape_cast %54 : vector<16x16x3xf32> to vector<256x3xf32>
    %c2_75 = arith.constant 2 : index
    %c2_76 = arith.constant 2 : index
    %c0_77 = arith.constant 0 : index
    %c0_78 = arith.constant 0 : index
    %56 = vector.load %arg2[%c2_75, %c2_76, %c0_77, %c0_78] : memref<3x3x3x32xf32, #tpu.memory_space<vmem>>, vector<1x1x3x32xf32>
    %57 = vector.shape_cast %56 : vector<1x1x3x32xf32> to vector<3x32xf32>
    %cst_79 = arith.constant dense<0.000000e+00> : vector<256x32xf32>
    %58 = tpu.matmul %55, %57, %cst_79 {dimension_numbers = #tpu.dot_dimension_numbers<[1], [0], [0], [1], [0, 0, 1, 1], [], []>} : vector<256x3xf32>, vector<3x32xf32>, vector<256x32xf32> -> vector<256x32xf32>
    %59 = arith.addf %53, %58 : vector<256x32xf32>
    %c0_80 = arith.constant 0 : index
    %c0_81 = arith.constant 0 : index
    %60 = vector.load %arg3[%c0_80, %c0_81] : memref<1x32xf32, #tpu.memory_space<vmem>>, vector<1x32xf32>
    %61 = vector.broadcast %60 : vector<1x32xf32> to vector<256x32xf32>
    %62 = arith.addf %59, %61 : vector<256x32xf32>
    %cst_82 = arith.constant 0.000000e+00 : f32
    %63 = vector.broadcast %cst_82 : f32 to vector<256x32xf32>
    %64 = arith.maximumf %62, %63 : vector<256x32xf32>
    %65 = vector.shape_cast %64 : vector<256x32xf32> to vector<8x2x16x32xf32>
    %66 = vector.extract_strided_slice %65 {offsets = [0, 0, 0, 0], sizes = [8, 1, 16, 32], strides = [1, 1, 1, 1]} : vector<8x2x16x32xf32> to vector<8x1x16x32xf32>
    %67 = vector.shape_cast %66 : vector<8x1x16x32xf32> to vector<8x16x32xf32>
    %68 = vector.extract_strided_slice %65 {offsets = [0, 1, 0, 0], sizes = [8, 1, 16, 32], strides = [1, 1, 1, 1]} : vector<8x2x16x32xf32> to vector<8x1x16x32xf32>
    %69 = vector.shape_cast %68 : vector<8x1x16x32xf32> to vector<8x16x32xf32>
    %70 = arith.maximumf %67, %69 : vector<8x16x32xf32>
    %71 = vector.shape_cast %70 : vector<8x16x32xf32> to vector<8x8x2x32xf32>
    %72 = vector.extract_strided_slice %71 {offsets = [0, 0, 0, 0], sizes = [8, 8, 1, 32], strides = [1, 1, 1, 1]} : vector<8x8x2x32xf32> to vector<8x8x1x32xf32>
    %73 = vector.shape_cast %72 : vector<8x8x1x32xf32> to vector<8x8x32xf32>
    %74 = vector.extract_strided_slice %71 {offsets = [0, 0, 1, 0], sizes = [8, 8, 1, 32], strides = [1, 1, 1, 1]} : vector<8x8x2x32xf32> to vector<8x8x1x32xf32>
    %75 = vector.shape_cast %74 : vector<8x8x1x32xf32> to vector<8x8x32xf32>
    %76 = arith.maximumf %73, %75 : vector<8x8x32xf32>
    %cst_83 = arith.constant 0.000000e+00 : f32
    %77 = vector.broadcast %cst_83 : f32 to vector<10x10x32xf32>
    %c0_84 = arith.constant 0 : index
    %c0_85 = arith.constant 0 : index
    %c0_86 = arith.constant 0 : index
    %78 = vector.load %arg10[%c0_84, %c0_85, %c0_86] : memref<10x10x32xf32, #tpu.memory_space<vmem>>, vector<10x10x32xf32>
    tpu.vector_store %arg10[%c0_84, %c0_85, %c0_86], %77 {strides = array<i32>} : memref<10x10x32xf32, #tpu.memory_space<vmem>>, vector<10x10x32xf32>,
    %c1_87 = arith.constant 1 : index
    %c1_88 = arith.constant 1 : index
    %c0_89 = arith.constant 0 : index
    %79 = vector.load %arg10[%c1_87, %c1_88, %c0_89] : memref<10x10x32xf32, #tpu.memory_space<vmem>>, vector<8x8x32xf32>
    tpu.vector_store %arg10[%c1_87, %c1_88, %c0_89], %76 {strides = array<i32>} : memref<10x10x32xf32, #tpu.memory_space<vmem>>, vector<8x8x32xf32>,
    %c0_90 = arith.constant 0 : index
    %c0_91 = arith.constant 0 : index
    %80 = vector.load %arg4[%c0_90, %c0_91] : memref<288x64xf32, #tpu.memory_space<vmem>>, vector<288x64xf32>
    %c0_92 = arith.constant 0 : index
    %c0_93 = arith.constant 0 : index
    %81 = vector.load %arg5[%c0_92, %c0_93] : memref<1x64xf32, #tpu.memory_space<vmem>>, vector<1x64xf32>
    %c0_94 = arith.constant 0 : index
    %c0_95 = arith.constant 0 : index
    %c0_96 = arith.constant 0 : index
    %82 = vector.load %arg10[%c0_94, %c0_95, %c0_96] : memref<10x10x32xf32, #tpu.memory_space<vmem>>, vector<8x8x32xf32>
    %83 = vector.shape_cast %82 : vector<8x8x32xf32> to vector<64x32xf32>
    %c0_97 = arith.constant 0 : index
    %c1_98 = arith.constant 1 : index
    %c0_99 = arith.constant 0 : index
    %84 = vector.load %arg10[%c0_97, %c1_98, %c0_99] : memref<10x10x32xf32, #tpu.memory_space<vmem>>, vector<8x8x32xf32>
    %85 = vector.shape_cast %84 : vector<8x8x32xf32> to vector<64x32xf32>
    %c0_100 = arith.constant 0 : index
    %c2_101 = arith.constant 2 : index
    %c0_102 = arith.constant 0 : index
    %86 = vector.load %arg10[%c0_100, %c2_101, %c0_102] : memref<10x10x32xf32, #tpu.memory_space<vmem>>, vector<8x8x32xf32>
    %87 = vector.shape_cast %86 : vector<8x8x32xf32> to vector<64x32xf32>
    %c1_103 = arith.constant 1 : index
    %c0_104 = arith.constant 0 : index
    %c0_105 = arith.constant 0 : index
    %88 = vector.load %arg10[%c1_103, %c0_104, %c0_105] : memref<10x10x32xf32, #tpu.memory_space<vmem>>, vector<8x8x32xf32>
    %89 = vector.shape_cast %88 : vector<8x8x32xf32> to vector<64x32xf32>
    %c1_106 = arith.constant 1 : index
    %c1_107 = arith.constant 1 : index
    %c0_108 = arith.constant 0 : index
    %90 = vector.load %arg10[%c1_106, %c1_107, %c0_108] : memref<10x10x32xf32, #tpu.memory_space<vmem>>, vector<8x8x32xf32>
    %91 = vector.shape_cast %90 : vector<8x8x32xf32> to vector<64x32xf32>
    %c1_109 = arith.constant 1 : index
    %c2_110 = arith.constant 2 : index
    %c0_111 = arith.constant 0 : index
    %92 = vector.load %arg10[%c1_109, %c2_110, %c0_111] : memref<10x10x32xf32, #tpu.memory_space<vmem>>, vector<8x8x32xf32>
    %93 = vector.shape_cast %92 : vector<8x8x32xf32> to vector<64x32xf32>
    %c2_112 = arith.constant 2 : index
    %c0_113 = arith.constant 0 : index
    %c0_114 = arith.constant 0 : index
    %94 = vector.load %arg10[%c2_112, %c0_113, %c0_114] : memref<10x10x32xf32, #tpu.memory_space<vmem>>, vector<8x8x32xf32>
    %95 = vector.shape_cast %94 : vector<8x8x32xf32> to vector<64x32xf32>
    %c2_115 = arith.constant 2 : index
    %c1_116 = arith.constant 1 : index
    %c0_117 = arith.constant 0 : index
    %96 = vector.load %arg10[%c2_115, %c1_116, %c0_117] : memref<10x10x32xf32, #tpu.memory_space<vmem>>, vector<8x8x32xf32>
    %97 = vector.shape_cast %96 : vector<8x8x32xf32> to vector<64x32xf32>
    %c2_118 = arith.constant 2 : index
    %c2_119 = arith.constant 2 : index
    %c0_120 = arith.constant 0 : index
    %98 = vector.load %arg10[%c2_118, %c2_119, %c0_120] : memref<10x10x32xf32, #tpu.memory_space<vmem>>, vector<8x8x32xf32>
    %99 = vector.shape_cast %98 : vector<8x8x32xf32> to vector<64x32xf32>
    %100 = tpu.concatenate %83, %85, %87, %89, %91, %93, %95, %97, %99 in 1 : vector<64x32xf32>, vector<64x32xf32>, vector<64x32xf32>, vector<64x32xf32>, vector<64x32xf32>, vector<64x32xf32>, vector<64x32xf32>, vector<64x32xf32>, vector<64x32xf32> -> vector<64x288xf32>
    %cst_121 = arith.constant dense<0.000000e+00> : vector<64x64xf32>
    %101 = tpu.matmul %100, %80, %cst_121 {dimension_numbers = #tpu.dot_dimension_numbers<[1], [0], [0], [1], [0, 0, 1, 1], [], []>} : vector<64x288xf32>, vector<288x64xf32>, vector<64x64xf32> -> vector<64x64xf32>
    %102 = vector.broadcast %81 : vector<1x64xf32> to vector<64x64xf32>
    %103 = arith.addf %101, %102 : vector<64x64xf32>
    %cst_122 = arith.constant 0.000000e+00 : f32
    %104 = vector.broadcast %cst_122 : f32 to vector<64x64xf32>
    %105 = arith.maximumf %103, %104 : vector<64x64xf32>
    %106 = vector.shape_cast %105 : vector<64x64xf32> to vector<4x2x8x64xf32>
    %107 = vector.extract_strided_slice %106 {offsets = [0, 0, 0, 0], sizes = [4, 1, 8, 64], strides = [1, 1, 1, 1]} : vector<4x2x8x64xf32> to vector<4x1x8x64xf32>
    %108 = vector.shape_cast %107 : vector<4x1x8x64xf32> to vector<4x8x64xf32>
    %109 = vector.extract_strided_slice %106 {offsets = [0, 1, 0, 0], sizes = [4, 1, 8, 64], strides = [1, 1, 1, 1]} : vector<4x2x8x64xf32> to vector<4x1x8x64xf32>
    %110 = vector.shape_cast %109 : vector<4x1x8x64xf32> to vector<4x8x64xf32>
    %111 = arith.maximumf %108, %110 : vector<4x8x64xf32>
    %112 = vector.shape_cast %111 : vector<4x8x64xf32> to vector<4x4x2x64xf32>
    %113 = vector.extract_strided_slice %112 {offsets = [0, 0, 0, 0], sizes = [4, 4, 1, 64], strides = [1, 1, 1, 1]} : vector<4x4x2x64xf32> to vector<4x4x1x64xf32>
    %114 = vector.shape_cast %113 : vector<4x4x1x64xf32> to vector<4x4x64xf32>
    %115 = vector.extract_strided_slice %112 {offsets = [0, 0, 1, 0], sizes = [4, 4, 1, 64], strides = [1, 1, 1, 1]} : vector<4x4x2x64xf32> to vector<4x4x1x64xf32>
    %116 = vector.shape_cast %115 : vector<4x4x1x64xf32> to vector<4x4x64xf32>
    %117 = arith.maximumf %114, %116 : vector<4x4x64xf32>
    %cst_123 = arith.constant 0.000000e+00 : f32
    %118 = vector.broadcast %cst_123 : f32 to vector<6x6x64xf32>
    %c0_124 = arith.constant 0 : index
    %c0_125 = arith.constant 0 : index
    %c0_126 = arith.constant 0 : index
    %119 = vector.load %arg11[%c0_124, %c0_125, %c0_126] : memref<6x6x64xf32, #tpu.memory_space<vmem>>, vector<6x6x64xf32>
    tpu.vector_store %arg11[%c0_124, %c0_125, %c0_126], %118 {strides = array<i32>} : memref<6x6x64xf32, #tpu.memory_space<vmem>>, vector<6x6x64xf32>,
    %c1_127 = arith.constant 1 : index
    %c1_128 = arith.constant 1 : index
    %c0_129 = arith.constant 0 : index
    %120 = vector.load %arg11[%c1_127, %c1_128, %c0_129] : memref<6x6x64xf32, #tpu.memory_space<vmem>>, vector<4x4x64xf32>
    tpu.vector_store %arg11[%c1_127, %c1_128, %c0_129], %117 {strides = array<i32>} : memref<6x6x64xf32, #tpu.memory_space<vmem>>, vector<4x4x64xf32>,
    %c0_130 = arith.constant 0 : index
    %c0_131 = arith.constant 0 : index
    %121 = vector.load %arg6[%c0_130, %c0_131] : memref<576x128xf32, #tpu.memory_space<vmem>>, vector<576x128xf32>
    %c0_132 = arith.constant 0 : index
    %c0_133 = arith.constant 0 : index
    %122 = vector.load %arg7[%c0_132, %c0_133] : memref<1x128xf32, #tpu.memory_space<vmem>>, vector<1x128xf32>
    %c0_134 = arith.constant 0 : index
    %c0_135 = arith.constant 0 : index
    %c0_136 = arith.constant 0 : index
    %123 = vector.load %arg11[%c0_134, %c0_135, %c0_136] : memref<6x6x64xf32, #tpu.memory_space<vmem>>, vector<4x4x64xf32>
    %124 = vector.shape_cast %123 : vector<4x4x64xf32> to vector<16x64xf32>
    %c0_137 = arith.constant 0 : index
    %c1_138 = arith.constant 1 : index
    %c0_139 = arith.constant 0 : index
    %125 = vector.load %arg11[%c0_137, %c1_138, %c0_139] : memref<6x6x64xf32, #tpu.memory_space<vmem>>, vector<4x4x64xf32>
    %126 = vector.shape_cast %125 : vector<4x4x64xf32> to vector<16x64xf32>
    %c0_140 = arith.constant 0 : index
    %c2_141 = arith.constant 2 : index
    %c0_142 = arith.constant 0 : index
    %127 = vector.load %arg11[%c0_140, %c2_141, %c0_142] : memref<6x6x64xf32, #tpu.memory_space<vmem>>, vector<4x4x64xf32>
    %128 = vector.shape_cast %127 : vector<4x4x64xf32> to vector<16x64xf32>
    %c1_143 = arith.constant 1 : index
    %c0_144 = arith.constant 0 : index
    %c0_145 = arith.constant 0 : index
    %129 = vector.load %arg11[%c1_143, %c0_144, %c0_145] : memref<6x6x64xf32, #tpu.memory_space<vmem>>, vector<4x4x64xf32>
    %130 = vector.shape_cast %129 : vector<4x4x64xf32> to vector<16x64xf32>
    %c1_146 = arith.constant 1 : index
    %c1_147 = arith.constant 1 : index
    %c0_148 = arith.constant 0 : index
    %131 = vector.load %arg11[%c1_146, %c1_147, %c0_148] : memref<6x6x64xf32, #tpu.memory_space<vmem>>, vector<4x4x64xf32>
    %132 = vector.shape_cast %131 : vector<4x4x64xf32> to vector<16x64xf32>
    %c1_149 = arith.constant 1 : index
    %c2_150 = arith.constant 2 : index
    %c0_151 = arith.constant 0 : index
    %133 = vector.load %arg11[%c1_149, %c2_150, %c0_151] : memref<6x6x64xf32, #tpu.memory_space<vmem>>, vector<4x4x64xf32>
    %134 = vector.shape_cast %133 : vector<4x4x64xf32> to vector<16x64xf32>
    %c2_152 = arith.constant 2 : index
    %c0_153 = arith.constant 0 : index
    %c0_154 = arith.constant 0 : index
    %135 = vector.load %arg11[%c2_152, %c0_153, %c0_154] : memref<6x6x64xf32, #tpu.memory_space<vmem>>, vector<4x4x64xf32>
    %136 = vector.shape_cast %135 : vector<4x4x64xf32> to vector<16x64xf32>
    %c2_155 = arith.constant 2 : index
    %c1_156 = arith.constant 1 : index
    %c0_157 = arith.constant 0 : index
    %137 = vector.load %arg11[%c2_155, %c1_156, %c0_157] : memref<6x6x64xf32, #tpu.memory_space<vmem>>, vector<4x4x64xf32>
    %138 = vector.shape_cast %137 : vector<4x4x64xf32> to vector<16x64xf32>
    %c2_158 = arith.constant 2 : index
    %c2_159 = arith.constant 2 : index
    %c0_160 = arith.constant 0 : index
    %139 = vector.load %arg11[%c2_158, %c2_159, %c0_160] : memref<6x6x64xf32, #tpu.memory_space<vmem>>, vector<4x4x64xf32>
    %140 = vector.shape_cast %139 : vector<4x4x64xf32> to vector<16x64xf32>
    %141 = tpu.concatenate %124, %126, %128, %130, %132, %134, %136, %138, %140 in 1 : vector<16x64xf32>, vector<16x64xf32>, vector<16x64xf32>, vector<16x64xf32>, vector<16x64xf32>, vector<16x64xf32>, vector<16x64xf32>, vector<16x64xf32>, vector<16x64xf32> -> vector<16x576xf32>
    %cst_161 = arith.constant dense<0.000000e+00> : vector<16x128xf32>
    %142 = tpu.matmul %141, %121, %cst_161 {dimension_numbers = #tpu.dot_dimension_numbers<[1], [0], [0], [1], [0, 0, 1, 1], [], []>} : vector<16x576xf32>, vector<576x128xf32>, vector<16x128xf32> -> vector<16x128xf32>
    %143 = vector.broadcast %122 : vector<1x128xf32> to vector<16x128xf32>
    %144 = arith.addf %142, %143 : vector<16x128xf32>
    %cst_162 = arith.constant 0.000000e+00 : f32
    %145 = vector.broadcast %cst_162 : f32 to vector<16x128xf32>
    %146 = arith.maximumf %144, %145 : vector<16x128xf32>
    %147 = vector.shape_cast %146 : vector<16x128xf32> to vector<1x4x4x128xf32>
    %c0_163 = arith.constant 0 : index
    %c0_164 = arith.constant 0 : index
    %c0_165 = arith.constant 0 : index
    %c0_166 = arith.constant 0 : index
    %148 = vector.load %arg8[%c0_163, %c0_164, %c0_165, %c0_166] : memref<1x4x4x128xf32, #tpu.memory_space<vmem>>, vector<1x4x4x128xf32>
    tpu.vector_store %arg8[%c0_163, %c0_164, %c0_165, %c0_166], %147 {strides = array<i32>} : memref<1x4x4x128xf32, #tpu.memory_space<vmem>>, vector<1x4x4x128xf32>,
    return
  }
  func.func @transform_0(%arg0: i32) -> (i32, i32, i32, i32) {
    %c0_i32 = arith.constant 0 : i32
    %c0_i32_0 = arith.constant 0 : i32
    %c0_i32_1 = arith.constant 0 : i32
    %c0_i32_2 = arith.constant 0 : i32
    return %arg0, %c0_i32, %c0_i32_0, %c0_i32_1 : i32, i32, i32, i32
  }
  func.func @transform_1(%arg0: i32) -> (i32, i32, i32, i32) {
    %c0_i32 = arith.constant 0 : i32
    %c0_i32_0 = arith.constant 0 : i32
    %c0_i32_1 = arith.constant 0 : i32
    %c0_i32_2 = arith.constant 0 : i32
    %c0_i32_3 = arith.constant 0 : i32
    return %c0_i32, %c0_i32_0, %c0_i32_1, %c0_i32_2 : i32, i32, i32, i32
  }
  func.func @transform_2(%arg0: i32) -> (i32, i32) {
    %c0_i32 = arith.constant 0 : i32
    %c0_i32_0 = arith.constant 0 : i32
    %c0_i32_1 = arith.constant 0 : i32
    return %c0_i32, %c0_i32_0 : i32, i32
  }
  func.func @transform_3(%arg0: i32) -> (i32, i32) {
    %c0_i32 = arith.constant 0 : i32
    %c0_i32_0 = arith.constant 0 : i32
    %c0_i32_1 = arith.constant 0 : i32
    return %c0_i32, %c0_i32_0 : i32, i32
  }
  func.func @transform_4(%arg0: i32) -> (i32, i32) {
    %c0_i32 = arith.constant 0 : i32
    %c0_i32_0 = arith.constant 0 : i32
    %c0_i32_1 = arith.constant 0 : i32
    return %c0_i32, %c0_i32_0 : i32, i32
  }
  func.func @transform_5(%arg0: i32) -> (i32, i32) {
    %c0_i32 = arith.constant 0 : i32
    %c0_i32_0 = arith.constant 0 : i32
    %c0_i32_1 = arith.constant 0 : i32
    return %c0_i32, %c0_i32_0 : i32, i32
  }
  func.func @transform_6(%arg0: i32) -> (i32, i32) {
    %c0_i32 = arith.constant 0 : i32
    %c0_i32_0 = arith.constant 0 : i32
    %c0_i32_1 = arith.constant 0 : i32
    return %c0_i32, %c0_i32_0 : i32, i32
  }
  func.func @transform_7(%arg0: i32) -> (i32, i32, i32, i32) {
    %c0_i32 = arith.constant 0 : i32
    %c0_i32_0 = arith.constant 0 : i32
    %c0_i32_1 = arith.constant 0 : i32
    %c0_i32_2 = arith.constant 0 : i32
    return %arg0, %c0_i32, %c0_i32_0, %c0_i32_1 : i32, i32, i32, i32
  }
}

</mosaic_0001>

<llo_original>
// kernel: encoder_forward.1
$region0: #{encoder_forward.1}
  #allocation0 [shape = 'u32[]', space=smem, size = 0x4, offset = 0x4, fixed_abs, tag = 'smem constant byte address 0x4 - core index']
  #allocation1 [shape = 'u32[144,128]{1,0:T(1,128)}', space=vmem, size = 0x12000, scoped, tag = 'internal scratch']
  #allocation2 [shape = 'f32[18,18,3]{2,1,0:T(8,128)}', space=vmem, size = 0x36000, scoped, tag = 'scratch operand']
  #allocation3 [shape = 'f32[10,10,32]{2,1,0:T(8,128)}', space=vmem, size = 0x14000, scoped, tag = 'scratch operand']
  #allocation4 [shape = 'f32[6,6,64]{2,1,0:T(8,128)}', space=vmem, size = 0x6000, scoped, tag = 'scratch operand']
  %s0 = inlined_call_operand.vmem [shape: f32[2,16,16,3], index: 0, kind: input, shape index: {}]
  %s1 = inlined_call_operand.vmem [shape: f32[3,3,3,32], index: 1, kind: input, shape index: {}]
  %s2 = inlined_call_operand.vmem [shape: f32[1,32], index: 2, kind: input, shape index: {}]
  %s3 = inlined_call_operand.hbm [shape: f32[288,64], index: 3, kind: input, shape index: {}]
  %s4 = inlined_call_operand.vmem [shape: f32[1,64], index: 4, kind: input, shape index: {}]
  %s5 = inlined_call_operand.vmem [shape: f32[576,128], index: 5, kind: input, shape index: {}]
  %s6 = inlined_call_operand.vmem [shape: f32[1,128], index: 6, kind: input, shape index: {}]
  %s7 = inlined_call_operand.hbm [shape: f32[2,4,4,128], index: 7, kind: output, shape index: {}]
  %s8 = sld [smem:[#allocation0]]
  $region65: #{encoder_forward.1} parent=0
    _
  %s10 = ssub.s32 1, %s8
  %s11 = scalar_select 0, %s10, %s8
  $region1: #{encoder_forward.1} parent=0
    #allocation5 [shape = 'u8[147456]{0}', space=vmem, size = 0x24000, scoped, tag = 'input window, operand 3, single buffered']
    #allocation6 [shape = 's32[2]{0}', space=sflag, size = 0x8, scoped, tag = 'scoped memory for encoder_forward.1']
    #allocation7 [shape = 's32[2]{0}', space=sflag, size = 0x8, scoped, tag = 'scoped memory for encoder_forward.1']
    #allocation8 [shape = 'u8[16384]{0}', space=vmem, size = 0x4000, scoped, tag = 'output window, operand 0']
    %12 = vsyncpa [#allocation6], 0
    %13 = vsyncpa [#allocation7], 0
    %s14 = scalar_lea.sflag [#allocation7], 1
    %15 = vsyncpa %s14, 0
    loop: start=0, step=1, limit=4
    $region2: #{encoder_forward.1} parent=1 // loop_pre_header
      _
    $region3: #{encoder_forward.1} parent=1 // loop_header
      %s17 = sphi 0, %s21
      %p18 = scmp.ge.s32.totalorder %s17, 4
      %s27 = sphi 0, %s29
      %s30 = sphi 0, %s27
      %s31 = sphi 0, %s30
      %s47 = sphi 0, %s31
      %s51 = sphi 0, %s51
      %s53 = sphi 0, %s51
      %s54 = sphi 0, %s53
      %s68 = sphi 0, %s54
      %s72 = sphi 0, %s72
      %s74 = sphi 0, %s72
      %s75 = sphi 0, %s74
      %s89 = sphi 0, %s75
      %s93 = sphi 0, %s93
      %s95 = sphi 0, %s93
      %s96 = sphi 0, %s95
      %s110 = sphi 0, %s96
      %s114 = sphi 0, %s114
      %s116 = sphi 0, %s114
      %s117 = sphi 0, %s116
      %s131 = sphi 0, %s117
      %s135 = sphi 0, %s135
      %s137 = sphi 0, %s135
      %s138 = sphi 0, %s137
      %s152 = sphi 0, %s138
      %s156 = sphi 0, %s156
      %s158 = sphi 0, %s156
      %s159 = sphi 0, %s158
      %s173 = sphi 0, %s159
      %s179 = sphi 0, %s181
      %s182 = sphi 0, %s179
      %s183 = sphi 0, %s182
      %s199 = sphi 0, %s183
    $region4: #{encoder_forward.1} parent=1 // loop_header_branch
      %20 = sbr.rel (%p18) target = $region8
    $region5: #{encoder_forward.1} parent=1 // loop_body
      %s22 = ssub.s32 %s17, 1
      %s23 = ssub.s32 %s17, 2
      %s24 = sadd.s32 %s17, 1
      %s25 = ssub.s32 %s17, %s24
      %p26 = scmp.eq.s32.totalorder %s25, 0
      %s28 = sadd.s32 %s27, 1
      %s29 = scalar_select %p26, %s27, %s28
      %p32 = pneg %p26
      %p33 = scmp.eq.s32.totalorder %s17, 1
      %p34 = por %p32, %p33
      %p35 = scmp.ne.s32.totalorder %s27, %s30
      %p36 = scmp.eq.s32.totalorder %s17, 0
      %p37 = por %p35, %p36
      %p38 = scmp.ne.s32.totalorder %s27, %s30
      %p39 = scmp.eq.s32.totalorder %s22, 1
      %p40 = por %p38, %p39
      %p41 = scmp.ne.s32.totalorder %s30, %s31
      %p42 = scmp.eq.s32.totalorder %s22, 0
      %p43 = por %p41, %p42
      %p44 = scmp.ne.s32.totalorder %s30, %s31
      %p45 = scmp.eq.s32.totalorder %s23, 1
      %p46 = por %p44, %p45
      %p48 = scmp.ne.s32.totalorder %s31, %s47
      %p49 = scmp.eq.s32.totalorder %s23, 0
      %p50 = por %p48, %p49
      %s52 = sadd.s32 %s51, 1
      %p55 = scmp.eq.s32.totalorder %s17, 1
      %p56 = scmp.ne.s32.totalorder %s51, %s53
      %p57 = scmp.eq.s32.totalorder %s17, 0
      %p58 = por %p56, %p57
      %p59 = scmp.ne.s32.totalorder %s51, %s53
      %p60 = scmp.eq.s32.totalorder %s22, 1
      %p61 = por %p59, %p60
      %p62 = scmp.ne.s32.totalorder %s53, %s54
      %p63 = scmp.eq.s32.totalorder %s22, 0
      %p64 = por %p62, %p63
      %p65 = scmp.ne.s32.totalorder %s53, %s54
      %p66 = scmp.eq.s32.totalorder %s23, 1
      %p67 = por %p65, %p66
      %p69 = scmp.ne.s32.totalorder %s54, %s68
      %p70 = scmp.eq.s32.totalorder %s23, 0
      %p71 = por %p69, %p70
      %s73 = sadd.s32 %s72, 1
      %p76 = scmp.eq.s32.totalorder %s17, 1
      %p77 = scmp.ne.s32.totalorder %s72, %s74
      %p78 = scmp.eq.s32.totalorder %s17, 0
      %p79 = por %p77, %p78
      %p80 = scmp.ne.s32.totalorder %s72, %s74
      %p81 = scmp.eq.s32.totalorder %s22, 1
      %p82 = por %p80, %p81
      %p83 = scmp.ne.s32.totalorder %s74, %s75
      %p84 = scmp.eq.s32.totalorder %s22, 0
      %p85 = por %p83, %p84
      %p86 = scmp.ne.s32.totalorder %s74, %s75
      %p87 = scmp.eq.s32.totalorder %s23, 1
      %p88 = por %p86, %p87
      %p90 = scmp.ne.s32.totalorder %s75, %s89
      %p91 = scmp.eq.s32.totalorder %s23, 0
      %p92 = por %p90, %p91
      %s94 = sadd.s32 %s93, 1
      %p97 = scmp.eq.s32.totalorder %s17, 1
      %p98 = scmp.ne.s32.totalorder %s93, %s95
      %p99 = scmp.eq.s32.totalorder %s17, 0
      %p100 = por %p98, %p99
      %p101 = scmp.ne.s32.totalorder %s93, %s95
      %p102 = scmp.eq.s32.totalorder %s22, 1
      %p103 = por %p101, %p102
      %p104 = scmp.ne.s32.totalorder %s95, %s96
      %p105 = scmp.eq.s32.totalorder %s22, 0
      %p106 = por %p104, %p105
      %p107 = scmp.ne.s32.totalorder %s95, %s96
      %p108 = scmp.eq.s32.totalorder %s23, 1
      %p109 = por %p107, %p108
      %p111 = scmp.ne.s32.totalorder %s96, %s110
      %p112 = scmp.eq.s32.totalorder %s23, 0
      %p113 = por %p111, %p112
      %s115 = sadd.s32 %s114, 1
      %p118 = scmp.eq.s32.totalorder %s17, 1
      %p119 = scmp.ne.s32.totalorder %s114, %s116
      %p120 = scmp.eq.s32.totalorder %s17, 0
      %p121 = por %p119, %p120
      %p122 = scmp.ne.s32.totalorder %s114, %s116
      %p123 = scmp.eq.s32.totalorder %s22, 1
      %p124 = por %p122, %p123
      %p125 = scmp.ne.s32.totalorder %s116, %s117
      %p126 = scmp.eq.s32.totalorder %s22, 0
      %p127 = por %p125, %p126
      %p128 = scmp.ne.s32.totalorder %s116, %s117
      %p129 = scmp.eq.s32.totalorder %s23, 1
      %p130 = por %p128, %p129
      %p132 = scmp.ne.s32.totalorder %s117, %s131
      %p133 = scmp.eq.s32.totalorder %s23, 0
      %p134 = por %p132, %p133
      %s136 = sadd.s32 %s135, 1
      %p139 = scmp.eq.s32.totalorder %s17, 1
      %p140 = scmp.ne.s32.totalorder %s135, %s137
      %p141 = scmp.eq.s32.totalorder %s17, 0
      %p142 = por %p140, %p141
      %p143 = scmp.ne.s32.totalorder %s135, %s137
      %p144 = scmp.eq.s32.totalorder %s22, 1
      %p145 = por %p143, %p144
      %p146 = scmp.ne.s32.totalorder %s137, %s138
      %p147 = scmp.eq.s32.totalorder %s22, 0
      %p148 = por %p146, %p147
      %p149 = scmp.ne.s32.totalorder %s137, %s138
      %p150 = scmp.eq.s32.totalorder %s23, 1
      %p151 = por %p149, %p150
      %p153 = scmp.ne.s32.totalorder %s138, %s152
      %p154 = scmp.eq.s32.totalorder %s23, 0
      %p155 = por %p153, %p154
      %s157 = sadd.s32 %s156, 1
      %p160 = scmp.eq.s32.totalorder %s17, 1
      %p161 = scmp.ne.s32.totalorder %s156, %s158
      %p162 = scmp.eq.s32.totalorder %s17, 0
      %p163 = por %p161, %p162
      %p164 = scmp.ne.s32.totalorder %s156, %s158
      %p165 = scmp.eq.s32.totalorder %s22, 1
      %p166 = por %p164, %p165
      %p167 = scmp.ne.s32.totalorder %s158, %s159
      %p168 = scmp.eq.s32.totalorder %s22, 0
      %p169 = por %p167, %p168
      %p170 = scmp.ne.s32.totalorder %s158, %s159
      %p171 = scmp.eq.s32.totalorder %s23, 1
      %p172 = por %p170, %p171
      %p174 = scmp.ne.s32.totalorder %s159, %s173
      %p175 = scmp.eq.s32.totalorder %s23, 0
      %p176 = por %p174, %p175
      %s177 = ssub.s32 %s17, %s24
      %p178 = scmp.eq.s32.totalorder %s177, 0
      %s180 = sadd.s32 %s179, 1
      %s181 = scalar_select %p178, %s179, %s180
      %p184 = pneg %p178
      %p185 = scmp.eq.s32.totalorder %s17, 1
      %p186 = por %p184, %p185
      %p187 = scmp.ne.s32.totalorder %s179, %s182
      %p188 = scmp.eq.s32.totalorder %s17, 0
      %p189 = por %p187, %p188
      %p190 = scmp.ne.s32.totalorder %s179, %s182
      %p191 = scmp.eq.s32.totalorder %s22, 1
      %p192 = por %p190, %p191
      %p193 = scmp.ne.s32.totalorder %s182, %s183
      %p194 = scmp.eq.s32.totalorder %s22, 0
      %p195 = por %p193, %p194
      %p196 = scmp.ne.s32.totalorder %s182, %s183
      %p197 = scmp.eq.s32.totalorder %s23, 1
      %p198 = por %p196, %p197
      %p200 = scmp.ne.s32.totalorder %s183, %s199
      %p201 = scmp.eq.s32.totalorder %s23, 0
      %p202 = por %p200, %p201
      %p203 = scmp.le.s32.totalorder 1, %s17
      %p204 = scmp.lt.s32.totalorder %s17, 3
      %p205 = pnand %p203, %p204
      %p206 = pneg %p205
      // Predicated region
      $region9: #{encoder_forward.1} parent=5 // pred_check
        _
      $region10: #{encoder_forward.1} parent=5 // pred_check_branch
        %208 = sbr.rel (%p205) target = $region12
      $region11: #{encoder_forward.1} parent=5 // pred_region
        %s209 = ssub.s32 %s17, 1
        // Predicated region
        $region13: #{encoder_forward.1} parent=11 // pred_check
          %p210 = pneg %p64
        $region14: #{encoder_forward.1} parent=11 // pred_check_branch
          %212 = sbr.rel (%p210) target = $region16
        $region15: #{encoder_forward.1} parent=11 // pred_region
          _
        $region16: #{encoder_forward.1} parent=11 // pred_fallthru
          _
        // Predicated region
        $region17: #{encoder_forward.1} parent=11 // pred_check
          %p213 = pneg %p85
        $region18: #{encoder_forward.1} parent=11 // pred_check_branch
          %215 = sbr.rel (%p213) target = $region20
        $region19: #{encoder_forward.1} parent=11 // pred_region
          _
        $region20: #{encoder_forward.1} parent=11 // pred_fallthru
          _
        // Predicated region
        $region21: #{encoder_forward.1} parent=11 // pred_check
          %p216 = pneg %p106
        $region22: #{encoder_forward.1} parent=11 // pred_check_branch
          %218 = sbr.rel (%p216) target = $region24
        $region23: #{encoder_forward.1} parent=11 // pred_region
          %s220 = ssub.s32 4608, 4608
          %221 = vsyncadd [#allocation6], %s220
          %s222 = sshll.u32 [#allocation5], 4
          %s223 = int_to_ptr.vmem [resolvable:$true] %s222
          %228 = dma.hbm_to_vmem [thread:$0]  %s3, 4608, %s223, [#allocation6], 128, 128, 8
        $region24: #{encoder_forward.1} parent=11 // pred_fallthru
          _
        // Predicated region
        $region25: #{encoder_forward.1} parent=11 // pred_check
          %p229 = pneg %p127
        $region26: #{encoder_forward.1} parent=11 // pred_check_branch
          %231 = sbr.rel (%p229) target = $region28
        $region27: #{encoder_forward.1} parent=11 // pred_region
          _
        $region28: #{encoder_forward.1} parent=11 // pred_fallthru
          _
        // Predicated region
        $region29: #{encoder_forward.1} parent=11 // pred_check
          %p232 = pneg %p148
        $region30: #{encoder_forward.1} parent=11 // pred_check_branch
          %234 = sbr.rel (%p232) target = $region32
        $region31: #{encoder_forward.1} parent=11 // pred_region
          _
        $region32: #{encoder_forward.1} parent=11 // pred_fallthru
          _
        // Predicated region
        $region33: #{encoder_forward.1} parent=11 // pred_check
          %p235 = pneg %p169
        $region34: #{encoder_forward.1} parent=11 // pred_check_branch
          %237 = sbr.rel (%p235) target = $region36
        $region35: #{encoder_forward.1} parent=11 // pred_region
          _
        $region36: #{encoder_forward.1} parent=11 // pred_fallthru
          _
      $region12: #{encoder_forward.1} parent=5 // pred_fallthru
        _
      %p238 = scmp.lt.s32.totalorder %s17, 2
      // Predicated region
      $region37: #{encoder_forward.1} parent=5 // pred_check
        %p239 = pneg %p238
      $region38: #{encoder_forward.1} parent=5 // pred_check_branch
        %241 = sbr.rel (%p239) target = $region40
      $region39: #{encoder_forward.1} parent=5 // pred_region
        // Predicated region
        $region41: #{encoder_forward.1} parent=39 // pred_check
          %p242 = pneg %p37
        $region42: #{encoder_forward.1} parent=39 // pred_check_branch
          %244 = sbr.rel (%p242) target = $region44
        $region43: #{encoder_forward.1} parent=39 // pred_region
          %p245 = scmp.lt.s32.totalorder %s17, 1
          %s246 = scalar_select %p245, %s17, 1
          %s247 = smul.addr %s246, 32
          %s248 = smul.addr %s247, 8
          %s249 = scalar_lea.vmem %s0, %s248
        $region44: #{encoder_forward.1} parent=39 // pred_fallthru
          _
      $region40: #{encoder_forward.1} parent=5 // pred_fallthru
        _
      %p250 = scmp.le.s32.totalorder 1, %s17
      %p251 = scmp.lt.s32.totalorder %s17, 3
      %p252 = pnand %p250, %p251
      %p253 = pneg %p252
      // Predicated region
      $region45: #{encoder_forward.1} parent=5 // pred_check
        _
      $region46: #{encoder_forward.1} parent=5 // pred_check_branch
        %255 = sbr.rel (%p252) target = $region48
      $region47: #{encoder_forward.1} parent=5 // pred_region
        %s256 = ssub.s32 %s17, 1
        // Predicated region
        $region49: #{encoder_forward.1} parent=47 // pred_check
          %p257 = pneg %p106
        $region50: #{encoder_forward.1} parent=47 // pred_check_branch
          %259 = sbr.rel (%p257) target = $region52
        $region51: #{encoder_forward.1} parent=47 // pred_region
          %260 = dma.done [#allocation6], 4608
        $region52: #{encoder_forward.1} parent=47 // pred_fallthru
          _
        %p261 = scmp.lt.s32.totalorder %s22, 1
        %s262 = scalar_select %p261, %s22, 1
        %s263 = smul.addr %s262, 32
        %s264 = smul.addr %s263, 8
        %s265 = scalar_lea.vmem %s0, %s264
        %p266 = pneg %p43
        %p267 = pneg %p40
        %p268 = pneg %p64
        %p269 = pneg %p61
        %p270 = pneg %p85
        %p271 = pneg %p82
        %p272 = pneg %p106
        %p273 = pneg %p103
        %p274 = pneg %p127
        %p275 = pneg %p124
        %p276 = pneg %p148
        %p277 = pneg %p145
        %p278 = pneg %p169
        %p279 = pneg %p166
        %p280 = pneg %p195
        %p281 = pneg %p192
        %s282 = sand.u32 %s182, 1
        %s283 = scalar_lea.sflag [#allocation7], %s282
        %s284 = sand.u32 %s182, 1
        %s285 = smul.addr %s284, 16
        %s286 = scalar_lea.vmem [#allocation8], %s285
        %p287 = scmp.lt.s32.totalorder %s22, 1
        %s288 = scalar_select %p287, %s22, 1
        %s289 = smul.addr %s288, 32
        %s290 = smul.addr %s289, 8
        %s291 = scalar_lea.vmem %s0, %s290
        %vm292 = vcmask 23552
        %293 = vst.msk [vmem:[#allocation2] sm:$0xff] %vm292, 0.0
        %294 = vst.msk [vmem:[#allocation2 + $0x8] sm:$0xff] %vm292, 0.0
        %vm295 = vcmask 17408
        %296 = vst.msk [vmem:[#allocation2 + $0x10] sm:$0x3] %vm295, 0.0
        %297 = vst.msk [vmem:[#allocation2 + $0x18] sm:$0xff] %vm292, 0.0
        %298 = vst.msk [vmem:[#allocation2 + $0x20] sm:$0xff] %vm292, 0.0
        %299 = vst.msk [vmem:[#allocation2 + $0x28] sm:$0x3] %vm295, 0.0
        %300 = vst.msk [vmem:[#allocation2 + $0x30] sm:$0xff] %vm292, 0.0
        %301 = vst.msk [vmem:[#allocation2 + $0x38] sm:$0xff] %vm292, 0.0
        %302 = vst.msk [vmem:[#allocation2 + $0x40] sm:$0x3] %vm295, 0.0
        %303 = vst.msk [vmem:[#allocation2 + $0x48] sm:$0xff] %vm292, 0.0
        %304 = vst.msk [vmem:[#allocation2 + $0x50] sm:$0xff] %vm292, 0.0
        %305 = vst.msk [vmem:[#allocation2 + $0x58] sm:$0x3] %vm295, 0.0
        %306 = vst.msk [vmem:[#allocation2 + $0x60] sm:$0xff] %vm292, 0.0
        %307 = vst.msk [vmem:[#allocation2 + $0x68] sm:$0xff] %vm292, 0.0
        %308 = vst.msk [vmem:[#allocation2 + $0x70] sm:$0x3] %vm295, 0.0
        %309 = vst.msk [vmem:[#allocation2 + $0x78] sm:$0xff] %vm292, 0.0
        %310 = vst.msk [vmem:[#allocation2 + $0x80] sm:$0xff] %vm292, 0.0
        %311 = vst.msk [vmem:[#allocation2 + $0x88] sm:$0x3] %vm295, 0.0
        %312 = vst.msk [vmem:[#allocation2 + $0x90] sm:$0xff] %vm292, 0.0
        %313 = vst.msk [vmem:[#allocation2 + $0x98] sm:$0xff] %vm292, 0.0
        %314 = vst.msk [vmem:[#allocation2 + $0xa0] sm:$0x3] %vm295, 0.0
        %315 = vst.msk [vmem:[#allocation2 + $0xa8] sm:$0xff] %vm292, 0.0
        %316 = vst.msk [vmem:[#allocation2 + $0xb0] sm:$0xff] %vm292, 0.0
        %317 = vst.msk [vmem:[#allocation2 + $0xb8] sm:$0x3] %vm295, 0.0
        %318 = vst.msk [vmem:[#allocation2 + $0xc0] sm:$0xff] %vm292, 0.0
        %319 = vst.msk [vmem:[#allocation2 + $0xc8] sm:$0xff] %vm292, 0.0
        %320 = vst.msk [vmem:[#allocation2 + $0xd0] sm:$0x3] %vm295, 0.0
        %321 = vst.msk [vmem:[#allocation2 + $0xd8] sm:$0xff] %vm292, 0.0
        %322 = vst.msk [vmem:[#allocation2 + $0xe0] sm:$0xff] %vm292, 0.0
        %323 = vst.msk [vmem:[#allocation2 + $0xe8] sm:$0x3] %vm295, 0.0
        %324 = vst.msk [vmem:[#allocation2 + $0xf0] sm:$0xff] %vm292, 0.0
        %325 = vst.msk [vmem:[#allocation2 + $0xf8] sm:$0xff] %vm292, 0.0
        %326 = vst.msk [vmem:[#allocation2 + $0x100] sm:$0x3] %vm295, 0.0
        %327 = vst.msk [vmem:[#allocation2 + $0x108] sm:$0xff] %vm292, 0.0
        %328 = vst.msk [vmem:[#allocation2 + $0x110] sm:$0xff] %vm292, 0.0
        %329 = vst.msk [vmem:[#allocation2 + $0x118] sm:$0x3] %vm295, 0.0
        %330 = vst.msk [vmem:[#allocation2 + $0x120] sm:$0xff] %vm292, 0.0
        %331 = vst.msk [vmem:[#allocation2 + $0x128] sm:$0xff] %vm292, 0.0
        %332 = vst.msk [vmem:[#allocation2 + $0x130] sm:$0x3] %vm295, 0.0
        %333 = vst.msk [vmem:[#allocation2 + $0x138] sm:$0xff] %vm292, 0.0
        %334 = vst.msk [vmem:[#allocation2 + $0x140] sm:$0xff] %vm292, 0.0
        %335 = vst.msk [vmem:[#allocation2 + $0x148] sm:$0x3] %vm295, 0.0
        %336 = vst.msk [vmem:[#allocation2 + $0x150] sm:$0xff] %vm292, 0.0
        %337 = vst.msk [vmem:[#allocation2 + $0x158] sm:$0xff] %vm292, 0.0
        %338 = vst.msk [vmem:[#allocation2 + $0x160] sm:$0x3] %vm295, 0.0
        %339 = vst.msk [vmem:[#allocation2 + $0x168] sm:$0xff] %vm292, 0.0
        %340 = vst.msk [vmem:[#allocation2 + $0x170] sm:$0xff] %vm292, 0.0
        %341 = vst.msk [vmem:[#allocation2 + $0x178] sm:$0x3] %vm295, 0.0
        %342 = vst.msk [vmem:[#allocation2 + $0x180] sm:$0xff] %vm292, 0.0
        %343 = vst.msk [vmem:[#allocation2 + $0x188] sm:$0xff] %vm292, 0.0
        %344 = vst.msk [vmem:[#allocation2 + $0x190] sm:$0x3] %vm295, 0.0
        %345 = vst.msk [vmem:[#allocation2 + $0x198] sm:$0xff] %vm292, 0.0
        %346 = vst.msk [vmem:[#allocation2 + $0x1a0] sm:$0xff] %vm292, 0.0
        %347 = vst.msk [vmem:[#allocation2 + $0x1a8] sm:$0x3] %vm295, 0.0
        %v348 = vld [vmem:[%s291] sm:$0xff]
        %v349 = vld [vmem:[%s291 + $0x8] sm:$0xff]
        %v350 = vld [vmem:[%s291 + $0x10] sm:$0xff]
        %v351 = vld [vmem:[%s291 + $0x18] sm:$0xff]
        %v352 = vld [vmem:[%s291 + $0x20] sm:$0xff]
        %v353 = vld [vmem:[%s291 + $0x28] sm:$0xff]
        %v354 = vld [vmem:[%s291 + $0x30] sm:$0xff]
        %v355 = vld [vmem:[%s291 + $0x38] sm:$0xff]
        %v356 = vld [vmem:[%s291 + $0x40] sm:$0xff]
        %v357 = vld [vmem:[%s291 + $0x48] sm:$0xff]
        %v358 = vld [vmem:[%s291 + $0x50] sm:$0xff]
        %v359 = vld [vmem:[%s291 + $0x58] sm:$0xff]
        %v360 = vld [vmem:[%s291 + $0x60] sm:$0xff]
        %v361 = vld [vmem:[%s291 + $0x68] sm:$0xff]
        %v362 = vld [vmem:[%s291 + $0x70] sm:$0xff]
        %v363 = vld [vmem:[%s291 + $0x78] sm:$0xff]
        %v364 = vld [vmem:[%s291 + $0x80] sm:$0xff]
        %v365 = vld [vmem:[%s291 + $0x88] sm:$0xff]
        %v366 = vld [vmem:[%s291 + $0x90] sm:$0xff]
        %v367 = vld [vmem:[%s291 + $0x98] sm:$0xff]
        %v368 = vld [vmem:[%s291 + $0xa0] sm:$0xff]
        %v369 = vld [vmem:[%s291 + $0xa8] sm:$0xff]
        %v370 = vld [vmem:[%s291 + $0xb0] sm:$0xff]
        %v371 = vld [vmem:[%s291 + $0xb8] sm:$0xff]
        %v372 = vld [vmem:[%s291 + $0xc0] sm:$0xff]
        %v373 = vld [vmem:[%s291 + $0xc8] sm:$0xff]
        %v374 = vld [vmem:[%s291 + $0xd0] sm:$0xff]
        %v375 = vld [vmem:[%s291 + $0xd8] sm:$0xff]
        %v376 = vld [vmem:[%s291 + $0xe0] sm:$0xff]
        %v377 = vld [vmem:[%s291 + $0xe8] sm:$0xff]
        %v378 = vld [vmem:[%s291 + $0xf0] sm:$0xff]
        %v379 = vld [vmem:[%s291 + $0xf8] sm:$0xff]
        %s380 = scalar_lea.vmem [#allocation2], 24
        %381 = vst.msk [vmem:[%s380 + $0x1] sm:$0xff] %vm292, %v348
        %382 = vst.msk [vmem:[%s380 + $0x9] sm:$0xff] %vm292, %v349
        %383 = vst.msk [vmem:[%s380 + $0x19] sm:$0xff] %vm292, %v350
        %384 = vst.msk [vmem:[%s380 + $0x21] sm:$0xff] %vm292, %v351
        %385 = vst.msk [vmem:[%s380 + $0x31] sm:$0xff] %vm292, %v352
        %386 = vst.msk [vmem:[%s380 + $0x39] sm:$0xff] %vm292, %v353
        %387 = vst.msk [vmem:[%s380 + $0x49] sm:$0xff] %vm292, %v354
        %388 = vst.msk [vmem:[%s380 + $0x51] sm:$0xff] %vm292, %v355
        %389 = vst.msk [vmem:[%s380 + $0x61] sm:$0xff] %vm292, %v356
        %390 = vst.msk [vmem:[%s380 + $0x69] sm:$0xff] %vm292, %v357
        %391 = vst.msk [vmem:[%s380 + $0x79] sm:$0xff] %vm292, %v358
        %392 = vst.msk [vmem:[%s380 + $0x81] sm:$0xff] %vm292, %v359
        %393 = vst.msk [vmem:[%s380 + $0x91] sm:$0xff] %vm292, %v360
        %394 = vst.msk [vmem:[%s380 + $0x99] sm:$0xff] %vm292, %v361
        %395 = vst.msk [vmem:[%s380 + $0xa9] sm:$0xff] %vm292, %v362
        %396 = vst.msk [vmem:[%s380 + $0xb1] sm:$0xff] %vm292, %v363
        %397 = vst.msk [vmem:[%s380 + $0xc1] sm:$0xff] %vm292, %v364
        %398 = vst.msk [vmem:[%s380 + $0xc9] sm:$0xff] %vm292, %v365
        %399 = vst.msk [vmem:[%s380 + $0xd9] sm:$0xff] %vm292, %v366
        %400 = vst.msk [vmem:[%s380 + $0xe1] sm:$0xff] %vm292, %v367
        %401 = vst.msk [vmem:[%s380 + $0xf1] sm:$0xff] %vm292, %v368
        %402 = vst.msk [vmem:[%s380 + $0xf9] sm:$0xff] %vm292, %v369
        %403 = vst.msk [vmem:[%s380 + $0x109] sm:$0xff] %vm292, %v370
        %404 = vst.msk [vmem:[%s380 + $0x111] sm:$0xff] %vm292, %v371
        %405 = vst.msk [vmem:[%s380 + $0x121] sm:$0xff] %vm292, %v372
        %406 = vst.msk [vmem:[%s380 + $0x129] sm:$0xff] %vm292, %v373
        %407 = vst.msk [vmem:[%s380 + $0x139] sm:$0xff] %vm292, %v374
        %408 = vst.msk [vmem:[%s380 + $0x141] sm:$0xff] %vm292, %v375
        %409 = vst.msk [vmem:[%s380 + $0x151] sm:$0xff] %vm292, %v376
        %410 = vst.msk [vmem:[%s380 + $0x159] sm:$0xff] %vm292, %v377
        %411 = vst.msk [vmem:[%s380 + $0x169] sm:$0xff] %vm292, %v378
        %412 = vst.msk [vmem:[%s380 + $0x171] sm:$0xff] %vm292, %v379
        %v413 = vld [vmem:[#allocation2] sm:$0xff]
        %v414 = vld [vmem:[#allocation2 + $0x8] sm:$0xff]
        %v415 = vld [vmem:[#allocation2 + $0x18] sm:$0xff]
        %v416 = vld [vmem:[#allocation2 + $0x20] sm:$0xff]
        %v417 = vld [vmem:[#allocation2 + $0x30] sm:$0xff]
        %v418 = vld [vmem:[#allocation2 + $0x38] sm:$0xff]
        %v419 = vld [vmem:[#allocation2 + $0x48] sm:$0xff]
        %v420 = vld [vmem:[#allocation2 + $0x50] sm:$0xff]
        %v421 = vld [vmem:[#allocation2 + $0x60] sm:$0xff]
        %v422 = vld [vmem:[#allocation2 + $0x68] sm:$0xff]
        %v423 = vld [vmem:[#allocation2 + $0x78] sm:$0xff]
        %v424 = vld [vmem:[#allocation2 + $0x80] sm:$0xff]
        %v425 = vld [vmem:[#allocation2 + $0x90] sm:$0xff]
        %v426 = vld [vmem:[#allocation2 + $0x98] sm:$0xff]
        %v427 = vld [vmem:[#allocation2 + $0xa8] sm:$0xff]
        %v428 = vld [vmem:[#allocation2 + $0xb0] sm:$0xff]
        %v429 = vld [vmem:[#allocation2 + $0xc0] sm:$0xff]
        %v430 = vld [vmem:[#allocation2 + $0xc8] sm:$0xff]
        %v431 = vld [vmem:[#allocation2 + $0xd8] sm:$0xff]
        %v432 = vld [vmem:[#allocation2 + $0xe0] sm:$0xff]
        %v433 = vld [vmem:[#allocation2 + $0xf0] sm:$0xff]
        %v434 = vld [vmem:[#allocation2 + $0xf8] sm:$0xff]
        %v435 = vld [vmem:[#allocation2 + $0x108] sm:$0xff]
        %v436 = vld [vmem:[#allocation2 + $0x110] sm:$0xff]
        %v437 = vld [vmem:[#allocation2 + $0x120] sm:$0xff]
        %v438 = vld [vmem:[#allocation2 + $0x128] sm:$0xff]
        %v439 = vld [vmem:[#allocation2 + $0x138] sm:$0xff]
        %v440 = vld [vmem:[#allocation2 + $0x140] sm:$0xff]
        %v441 = vld [vmem:[#allocation2 + $0x150] sm:$0xff]
        %v442 = vld [vmem:[#allocation2 + $0x158] sm:$0xff]
        %v443 = vld [vmem:[#allocation2 + $0x168] sm:$0xff]
        %v444 = vld [vmem:[#allocation2 + $0x170] sm:$0xff]
        %v445 = vld [vmem:[%s1] sm:$0x7]
        %v446 = vld [vmem:[#allocation2 + $0x1] sm:$0xff]
        %v447 = vld [vmem:[#allocation2 + $0x9] sm:$0xff]
        %v448 = vld [vmem:[#allocation2 + $0x19] sm:$0xff]
        %v449 = vld [vmem:[#allocation2 + $0x21] sm:$0xff]
        %v450 = vld [vmem:[#allocation2 + $0x31] sm:$0xff]
        %v451 = vld [vmem:[#allocation2 + $0x39] sm:$0xff]
        %v452 = vld [vmem:[#allocation2 + $0x49] sm:$0xff]
        %v453 = vld [vmem:[#allocation2 + $0x51] sm:$0xff]
        %v454 = vld [vmem:[#allocation2 + $0x61] sm:$0xff]
        %v455 = vld [vmem:[#allocation2 + $0x69] sm:$0xff]
        %v456 = vld [vmem:[#allocation2 + $0x79] sm:$0xff]
        %v457 = vld [vmem:[#allocation2 + $0x81] sm:$0xff]
        %v458 = vld [vmem:[#allocation2 + $0x91] sm:$0xff]
        %v459 = vld [vmem:[#allocation2 + $0x99] sm:$0xff]
        %v460 = vld [vmem:[#allocation2 + $0xa9] sm:$0xff]
        %v461 = vld [vmem:[#allocation2 + $0xb1] sm:$0xff]
        %v462 = vld [vmem:[#allocation2 + $0xc1] sm:$0xff]
        %v463 = vld [vmem:[#allocation2 + $0xc9] sm:$0xff]
        %v464 = vld [vmem:[#allocation2 + $0xd9] sm:$0xff]
        %v465 = vld [vmem:[#allocation2 + $0xe1] sm:$0xff]
        %v466 = vld [vmem:[#allocation2 + $0xf1] sm:$0xff]
        %v467 = vld [vmem:[#allocation2 + $0xf9] sm:$0xff]
        %v468 = vld [vmem:[#allocation2 + $0x109] sm:$0xff]
        %v469 = vld [vmem:[#allocation2 + $0x111] sm:$0xff]
        %v470 = vld [vmem:[#allocation2 + $0x121] sm:$0xff]
        %v471 = vld [vmem:[#allocation2 + $0x129] sm:$0xff]
        %v472 = vld [vmem:[#allocation2 + $0x139] sm:$0xff]
        %v473 = vld [vmem:[#allocation2 + $0x141] sm:$0xff]
        %v474 = vld [vmem:[#allocation2 + $0x151] sm:$0xff]
        %v475 = vld [vmem:[#allocation2 + $0x159] sm:$0xff]
        %v476 = vld [vmem:[#allocation2 + $0x169] sm:$0xff]
        %v477 = vld [vmem:[#allocation2 + $0x171] sm:$0xff]
        %s478 = scalar_lea.vmem %s1, 4
        %v479 = vld [vmem:[%s478] sm:$0x7]
        %v481 = vsel %vm292, %v446, 0
        %v484 = vsel %vm292, %v447, 0
        %v487 = vsel %vm292, %v448, 0
        %v490 = vsel %vm292, %v449, 0
        %v493 = vsel %vm292, %v450, 0
        %v496 = vsel %vm292, %v451, 0
        %v499 = vsel %vm292, %v452, 0
        %v502 = vsel %vm292, %v453, 0
        %v505 = vsel %vm292, %v454, 0
        %v508 = vsel %vm292, %v455, 0
        %v511 = vsel %vm292, %v456, 0
        %v514 = vsel %vm292, %v457, 0
        %v517 = vsel %vm292, %v458, 0
        %v520 = vsel %vm292, %v459, 0
        %v523 = vsel %vm292, %v460, 0
        %v526 = vsel %vm292, %v461, 0
        %v529 = vsel %vm292, %v462, 0
        %v532 = vsel %vm292, %v463, 0
        %v535 = vsel %vm292, %v464, 0
        %v538 = vsel %vm292, %v465, 0
        %v541 = vsel %vm292, %v466, 0
        %v544 = vsel %vm292, %v467, 0
        %v547 = vsel %vm292, %v468, 0
        %v550 = vsel %vm292, %v469, 0
        %v553 = vsel %vm292, %v470, 0
        %v556 = vsel %vm292, %v471, 0
        %v559 = vsel %vm292, %v472, 0
        %v562 = vsel %vm292, %v473, 0
        %v565 = vsel %vm292, %v474, 0
        %v568 = vsel %vm292, %v475, 0
        %v571 = vsel %vm292, %v476, 0
        %v574 = vsel %vm292, %v477, 0
        %vm576 = vcmask 1042432
        %v578 = vsel %vm576, %v479, 0
        %580 = vmatprep.subr.mxu0 0.0
        %581 = vmatpush1.msra.mxu0 %v578
        %582 = vmatprep.subr.mxu0 0.0
        %583 = vmatpush1.msra.mxu0 0.0
        %584 = vmatprep.subr.mxu0 0.0
        %585 = vmatpush1.msra.mxu0 0.0
        %586 = vmatprep.subr.mxu0 0.0
        %587 = vmatpush1.msra.mxu0 0.0
        %588 = vmatprep.subr.mxu0 0.0
        %589 = vmatpush1.msra.mxu0 0.0
        %590 = vmatprep.subr.mxu0 0.0
        %591 = vmatpush1.msra.mxu0 0.0
        %592 = vmatprep.subr.mxu0 0.0
        %593 = vmatpush1.msra.mxu0 0.0
        %594 = vmatprep.subr.mxu0 0.0
        %595 = vmatpush1.msra.mxu0 0.0
        %596 = vmatprep.subr.mxu0 0.0
        %597 = vmatpush1.msra.mxu0 0.0
        %598 = vmatprep.subr.mxu0 0.0
        %599 = vmatpush1.msra.mxu0 0.0
        %600 = vmatprep.subr.mxu0 0.0
        %601 = vmatpush1.msra.mxu0 0.0
        %602 = vmatprep.subr.mxu0 0.0
        %603 = vmatpush1.msra.mxu0 0.0
        %604 = vmatprep.subr.mxu0 0.0
        %605 = vmatpush1.msra.mxu0 0.0
        %606 = vmatprep.subr.mxu0 0.0
        %607 = vmatpush1.msra.mxu0 0.0
        %608 = vmatprep.subr.mxu0 0.0
        %609 = vmatpush1.msra.mxu0 0.0
        %610 = vmatprep.subr.mxu0 0.0
        %611 = vmatpush1.msra.mxu0 0.0
        %612 = vmatprep.subr.mxu0 0.0
        %613 = vmatpush1.msra.mxu0 0.0
        %614 = vmatprep.subr.mxu0 0.0
        %615 = vmatpush1.msra.mxu0 0.0
        %616 = vmatprep.subr.mxu0 0.0
        %617 = vmatpush1.msra.mxu0 0.0
        %618 = vmatprep.subr.mxu0 0.0
        %619 = vmatpush1.msra.mxu0 0.0
        %620 = vmatprep.subr.mxu0 0.0
        %621 = vmatpush1.msra.mxu0 0.0
        %622 = vmatprep.subr.mxu0 0.0
        %623 = vmatpush1.msra.mxu0 0.0
        %624 = vmatprep.subr.mxu0 0.0
        %625 = vmatpush1.msra.mxu0 0.0
        %626 = vmatprep.subr.mxu0 0.0
        %627 = vmatpush1.msra.mxu0 0.0
        %628 = vmatprep.subr.mxu0 0.0
        %629 = vmatpush1.msra.mxu0 0.0
        %630 = vmatprep.subr.mxu0 0.0
        %631 = vmatpush1.msra.mxu0 0.0
        %632 = vmatprep.subr.mxu0 0.0
        %633 = vmatpush1.msra.mxu0 0.0
        %634 = vmatprep.subr.mxu0 0.0
        %635 = vmatpush1.msra.mxu0 0.0
        %636 = vmatprep.subr.mxu0 0.0
        %637 = vmatpush1.msra.mxu0 0.0
        %638 = vmatprep.subr.mxu0 0.0
        %639 = vmatpush1.msra.mxu0 0.0
        %640 = vmatprep.subr.mxu0 0.0
        %641 = vmatpush1.msra.mxu0 0.0
        %642 = vmatprep.subr.mxu0 0.0
        %643 = vmatpush1.msra.mxu0 0.0
        %644 = vmatprep.mubr.f32.mxu0 0.0
        %645 = vmatmul.mubr.f32.gmra.mrb[0].mxu0 %v481
        %v646 = vpop.f32.mrb[0].mxu0
        %v647 = vadd.f32 0.0, %v646
        %v648 = vpop.f32.mrb[0].mxu0
        %649 = vmatprep.mubr.f32.mxu0 0.0
        %650 = vmatmul.mubr.f32.gmra.mrb[0].mxu0 %v484
        %v651 = vpop.f32.mrb[0].mxu0
        %v652 = vadd.f32 0.0, %v651
        %v653 = vpop.f32.mrb[0].mxu0
        %654 = vmatprep.mubr.f32.mxu0 0.0
        %655 = vmatmul.mubr.f32.gmra.mrb[0].mxu0 %v487
        %v656 = vpop.f32.mrb[0].mxu0
        %v657 = vadd.f32 0.0, %v656
        %v658 = vpop.f32.mrb[0].mxu0
        %659 = vmatprep.mubr.f32.mxu0 0.0
        %660 = vmatmul.mubr.f32.gmra.mrb[0].mxu0 %v490
        %v661 = vpop.f32.mrb[0].mxu0
        %v662 = vadd.f32 0.0, %v661
        %v663 = vpop.f32.mrb[0].mxu0
        %664 = vmatprep.mubr.f32.mxu0 0.0
        %665 = vmatmul.mubr.f32.gmra.mrb[0].mxu0 %v493
        %v666 = vpop.f32.mrb[0].mxu0
        %v667 = vadd.f32 0.0, %v666
        %v668 = vpop.f32.mrb[0].mxu0
        %669 = vmatprep.mubr.f32.mxu0 0.0
        %670 = vmatmul.mubr.f32.gmra.mrb[0].mxu0 %v496
        %v671 = vpop.f32.mrb[0].mxu0
        %v672 = vadd.f32 0.0, %v671
        %v673 = vpop.f32.mrb[0].mxu0
        %674 = vmatprep.mubr.f32.mxu0 0.0
        %675 = vmatmul.mubr.f32.gmra.mrb[0].mxu0 %v499
        %v676 = vpop.f32.mrb[0].mxu0
        %v677 = vadd.f32 0.0, %v676
        %v678 = vpop.f32.mrb[0].mxu0
        %679 = vmatprep.mubr.f32.mxu0 0.0
        %680 = vmatmul.mubr.f32.gmra.mrb[0].mxu0 %v502
        %v681 = vpop.f32.mrb[0].mxu0
        %v682 = vadd.f32 0.0, %v681
        %v683 = vpop.f32.mrb[0].mxu0
        %684 = vmatprep.mubr.f32.mxu0 0.0
        %685 = vmatmul.mubr.f32.gmra.mrb[0].mxu0 %v505
        %v686 = vpop.f32.mrb[0].mxu0
        %v687 = vadd.f32 0.0, %v686
        %v688 = vpop.f32.mrb[0].mxu0
        %689 = vmatprep.mubr.f32.mxu0 0.0
        %690 = vmatmul.mubr.f32.gmra.mrb[0].mxu0 %v508
        %v691 = vpop.f32.mrb[0].mxu0
        %v692 = vadd.f32 0.0, %v691
        %v693 = vpop.f32.mrb[0].mxu0
        %694 = vmatprep.mubr.f32.mxu0 0.0
        %695 = vmatmul.mubr.f32.gmra.mrb[0].mxu0 %v511
        %v696 = vpop.f32.mrb[0].mxu0
        %v697 = vadd.f32 0.0, %v696
        %v698 = vpop.f32.mrb[0].mxu0
        %699 = vmatprep.mubr.f32.mxu0 0.0
        %700 = vmatmul.mubr.f32.gmra.mrb[0].mxu0 %v514
        %v701 = vpop.f32.mrb[0].mxu0
        %v702 = vadd.f32 0.0, %v701
        %v703 = vpop.f32.mrb[0].mxu0
        %704 = vmatprep.mubr.f32.mxu0 0.0
        %705 = vmatmul.mubr.f32.gmra.mrb[0].mxu0 %v517
        %v706 = vpop.f32.mrb[0].mxu0
        %v707 = vadd.f32 0.0, %v706
        %v708 = vpop.f32.mrb[0].mxu0
        %709 = vmatprep.mubr.f32.mxu0 0.0
        %710 = vmatmul.mubr.f32.gmra.mrb[0].mxu0 %v520
        %v711 = vpop.f32.mrb[0].mxu0
        %v712 = vadd.f32 0.0, %v711
        %v713 = vpop.f32.mrb[0].mxu0
        %714 = vmatprep.mubr.f32.mxu0 0.0
        %715 = vmatmul.mubr.f32.gmra.mrb[0].mxu0 %v523
        %v716 = vpop.f32.mrb[0].mxu0
        %v717 = vadd.f32 0.0, %v716
        %v718 = vpop.f32.mrb[0].mxu0
        %719 = vmatprep.mubr.f32.mxu0 0.0
        %720 = vmatmul.mubr.f32.gmra.mrb[0].mxu0 %v526
        %v721 = vpop.f32.mrb[0].mxu0
        %v722 = vadd.f32 0.0, %v721
        %v723 = vpop.f32.mrb[0].mxu0
        %724 = vmatprep.mubr.f32.mxu0 0.0
        %725 = vmatmul.mubr.f32.gmra.mrb[0].mxu0 %v529
        %v726 = vpop.f32.mrb[0].mxu0
        %v727 = vadd.f32 0.0, %v726
        %v728 = vpop.f32.mrb[0].mxu0
        %729 = vmatprep.mubr.f32.mxu0 0.0
        %730 = vmatmul.mubr.f32.gmra.mrb[0].mxu0 %v532
        %v731 = vpop.f32.mrb[0].mxu0
        %v732 = vadd.f32 0.0, %v731
        %v733 = vpop.f32.mrb[0].mxu0
        %734 = vmatprep.mubr.f32.mxu0 0.0
        %735 = vmatmul.mubr.f32.gmra.mrb[0].mxu0 %v535
        %v736 = vpop.f32.mrb[0].mxu0
        %v737 = vadd.f32 0.0, %v736
        %v738 = vpop.f32.mrb[0].mxu0
        %739 = vmatprep.mubr.f32.mxu0 0.0
        %740 = vmatmul.mubr.f32.gmra.mrb[0].mxu0 %v538
        %v741 = vpop.f32.mrb[0].mxu0
        %v742 = vadd.f32 0.0, %v741
        %v743 = vpop.f32.mrb[0].mxu0
        %744 = vmatprep.mubr.f32.mxu0 0.0
        %745 = vmatmul.mubr.f32.gmra.mrb[0].mxu0 %v541
        %v746 = vpop.f32.mrb[0].mxu0
        %v747 = vadd.f32 0.0, %v746
        %v748 = vpop.f32.mrb[0].mxu0
        %749 = vmatprep.mubr.f32.mxu0 0.0
        %750 = vmatmul.mubr.f32.gmra.mrb[0].mxu0 %v544
        %v751 = vpop.f32.mrb[0].mxu0
        %v752 = vadd.f32 0.0, %v751
        %v753 = vpop.f32.mrb[0].mxu0
        %754 = vmatprep.mubr.f32.mxu0 0.0
        %755 = vmatmul.mubr.f32.gmra.mrb[0].mxu0 %v547
        %v756 = vpop.f32.mrb[0].mxu0
        %v757 = vadd.f32 0.0, %v756
        %v758 = vpop.f32.mrb[0].mxu0
        %759 = vmatprep.mubr.f32.mxu0 0.0
        %760 = vmatmul.mubr.f32.gmra.mrb[0].mxu0 %v550
        %v761 = vpop.f32.mrb[0].mxu0
        %v762 = vadd.f32 0.0, %v761
        %v763 = vpop.f32.mrb[0].mxu0
        %764 = vmatprep.mubr.f32.mxu0 0.0
        %765 = vmatmul.mubr.f32.gmra.mrb[0].mxu0 %v553
        %v766 = vpop.f32.mrb[0].mxu0
        %v767 = vadd.f32 0.0, %v766
        %v768 = vpop.f32.mrb[0].mxu0
        %769 = vmatprep.mubr.f32.mxu0 0.0
        %770 = vmatmul.mubr.f32.gmra.mrb[0].mxu0 %v556
        %v771 = vpop.f32.mrb[0].mxu0
        %v772 = vadd.f32 0.0, %v771
        %v773 = vpop.f32.mrb[0].mxu0
        %774 = vmatprep.mubr.f32.mxu0 0.0
        %775 = vmatmul.mubr.f32.gmra.mrb[0].mxu0 %v559
        %v776 = vpop.f32.mrb[0].mxu0
        %v777 = vadd.f32 0.0, %v776
        %v778 = vpop.f32.mrb[0].mxu0
        %779 = vmatprep.mubr.f32.mxu0 0.0
        %780 = vmatmul.mubr.f32.gmra.mrb[0].mxu0 %v562
        %v781 = vpop.f32.mrb[0].mxu0
        %v782 = vadd.f32 0.0, %v781
        %v783 = vpop.f32.mrb[0].mxu0
        %784 = vmatprep.mubr.f32.mxu0 0.0
        %785 = vmatmul.mubr.f32.gmra.mrb[0].mxu0 %v565
        %v786 = vpop.f32.mrb[0].mxu0
        %v787 = vadd.f32 0.0, %v786
        %v788 = vpop.f32.mrb[0].mxu0
        %789 = vmatprep.mubr.f32.mxu0 0.0
        %790 = vmatmul.mubr.f32.gmra.mrb[0].mxu0 %v568
        %v791 = vpop.f32.mrb[0].mxu0
        %v792 = vadd.f32 0.0, %v791
        %v793 = vpop.f32.mrb[0].mxu0
        %794 = vmatprep.mubr.f32.mxu0 0.0
        %795 = vmatmul.mubr.f32.gmra.mrb[0].mxu0 %v571
        %v796 = vpop.f32.mrb[0].mxu0
        %v797 = vadd.f32 0.0, %v796
        %v798 = vpop.f32.mrb[0].mxu0
        %799 = vmatprep.mubr.f32.mxu0 0.0
        %800 = vmatmul.mubr.f32.gmra.mrb[0].mxu0 %v574
        %v801 = vpop.f32.mrb[0].mxu0
        %v802 = vadd.f32 0.0, %v801
        %v803 = vpop.f32.mrb[0].mxu0
        %804 = vdwg.mxu0
        %v806 = vsel %vm292, %v413, 0
        %v809 = vsel %vm292, %v414, 0
        %v812 = vsel %vm292, %v415, 0
        %v815 = vsel %vm292, %v416, 0
        %v818 = vsel %vm292, %v417, 0
        %v821 = vsel %vm292, %v418, 0
        %v824 = vsel %vm292, %v419, 0
        %v827 = vsel %vm292, %v420, 0
        %v830 = vsel %vm292, %v421, 0
        %v833 = vsel %vm292, %v422, 0
        %v836 = vsel %vm292, %v423, 0
        %v839 = vsel %vm292, %v424, 0
        %v842 = vsel %vm292, %v425, 0
        %v845 = vsel %vm292, %v426, 0
        %v848 = vsel %vm292, %v427, 0
        %v851 = vsel %vm292, %v428, 0
        %v854 = vsel %vm292, %v429, 0
        %v857 = vsel %vm292, %v430, 0
        %v860 = vsel %vm292, %v431, 0
        %v863 = vsel %vm292, %v432, 0
        %v866 = vsel %vm292, %v433, 0
        %v869 = vsel %vm292, %v434, 0
        %v872 = vsel %vm292, %v435, 0
        %v875 = vsel %vm292, %v436, 0
        %v878 = vsel %vm292, %v437, 0
        %v881 = vsel %vm292, %v438, 0
        %v884 = vsel %vm292, %v439, 0
        %v887 = vsel %vm292, %v440, 0
        %v890 = vsel %vm292, %v441, 0
        %v893 = vsel %vm292, %v442, 0
        %v896 = vsel %vm292, %v443, 0
        %v899 = vsel %vm292, %v444, 0
        %v902 = vsel %vm576, %v445, 0
        %904 = vmatprep.subr.mxu0 0.0
        %905 = vmatpush1.msra.mxu0 %v902
        %906 = vmatprep.subr.mxu0 0.0
        %907 = vmatpush1.msra.mxu0 0.0
        %908 = vmatprep.subr.mxu0 0.0
        %909 = vmatpush1.msra.mxu0 0.0
        %910 = vmatprep.subr.mxu0 0.0
        %911 = vmatpush1.msra.mxu0 0.0
        %912 = vmatprep.subr.mxu0 0.0
        %913 = vmatpush1.msra.mxu0 0.0
        %914 = vmatprep.subr.mxu0 0.0
        %915 = vmatpush1.msra.mxu0 0.0
        %916 = vmatprep.subr.mxu0 0.0
        %917 = vmatpush1.msra.mxu0 0.0
        %918 = vmatprep.subr.mxu0 0.0
        %919 = vmatpush1.msra.mxu0 0.0
        %920 = vmatprep.subr.mxu0 0.0
        %921 = vmatpush1.msra.mxu0 0.0
        %922 = vmatprep.subr.mxu0 0.0
        %923 = vmatpush1.msra.mxu0 0.0
        %924 = vmatprep.subr.mxu0 0.0
        %925 = vmatpush1.msra.mxu0 0.0
        %926 = vmatprep.subr.mxu0 0.0
        %927 = vmatpush1.msra.mxu0 0.0
        %928 = vmatprep.subr.mxu0 0.0
        %929 = vmatpush1.msra.mxu0 0.0
        %930 = vmatprep.subr.mxu0 0.0
        %931 = vmatpush1.msra.mxu0 0.0
        %932 = vmatprep.subr.mxu0 0.0
        %933 = vmatpush1.msra.mxu0 0.0
        %934 = vmatprep.subr.mxu0 0.0
        %935 = vmatpush1.msra.mxu0 0.0
        %936 = vmatprep.subr.mxu0 0.0
        %937 = vmatpush1.msra.mxu0 0.0
        %938 = vmatprep.subr.mxu0 0.0
        %939 = vmatpush1.msra.mxu0 0.0
        %940 = vmatprep.subr.mxu0 0.0
        %941 = vmatpush1.msra.mxu0 0.0
        %942 = vmatprep.subr.mxu0 0.0
        %943 = vmatpush1.msra.mxu0 0.0
        %944 = vmatprep.subr.mxu0 0.0
        %945 = vmatpush1.msra.mxu0 0.0
        %946 = vmatprep.subr.mxu0 0.0
        %947 = vmatpush1.msra.mxu0 0.0
        %948 = vmatprep.subr.mxu0 0.0
        %949 = vmatpush1.msra.mxu0 0.0
        %950 = vmatprep.subr.mxu0 0.0
        %951 = vmatpush1.msra.mxu0 0.0
        %952 = vmatprep.subr.mxu0 0.0
        %953 = vmatpush1.msra.mxu0 0.0
        %954 = vmatprep.subr.mxu0 0.0
        %955 = vmatpush1.msra.mxu0 0.0
        %956 = vmatprep.subr.mxu0 0.0
        %957 = vmatpush1.msra.mxu0 0.0
        %958 = vmatprep.subr.mxu0 0.0
        %959 = vmatpush1.msra.mxu0 0.0
        %960 = vmatprep.subr.mxu0 0.0
        %961 = vmatpush1.msra.mxu0 0.0
        %962 = vmatprep.subr.mxu0 0.0
        %963 = vmatpush1.msra.mxu0 0.0
        %964 = vmatprep.subr.mxu0 0.0
        %965 = vmatpush1.msra.mxu0 0.0
        %966 = vmatprep.subr.mxu0 0.0
        %967 = vmatpush1.msra.mxu0 0.0
        %968 = vmatprep.mubr.f32.mxu0 0.0
        %969 = vmatmul.mubr.f32.gmra.mrb[0].mxu0 %v806
        %v970 = vpop.f32.mrb[0].mxu0
        %v971 = vadd.f32 %v647, %v970
        %v972 = vpop.f32.mrb[0].mxu0
        %973 = vmatprep.mubr.f32.mxu0 0.0
        %974 = vmatmul.mubr.f32.gmra.mrb[0].mxu0 %v809
        %v975 = vpop.f32.mrb[0].mxu0
        %v976 = vadd.f32 %v652, %v975
        %v977 = vpop.f32.mrb[0].mxu0
        %978 = vmatprep.mubr.f32.mxu0 0.0
        %979 = vmatmul.mubr.f32.gmra.mrb[0].mxu0 %v812
        %v980 = vpop.f32.mrb[0].mxu0
        %v981 = vadd.f32 %v657, %v980
        %v982 = vpop.f32.mrb[0].mxu0
        %983 = vmatprep.mubr.f32.mxu0 0.0
        %984 = vmatmul.mubr.f32.gmra.mrb[0].mxu0 %v815
        %v985 = vpop.f32.mrb[0].mxu0
        %v986 = vadd.f32 %v662, %v985
        %v987 = vpop.f32.mrb[0].mxu0
        %988 = vmatprep.mubr.f32.mxu0 0.0
        %989 = vmatmul.mubr.f32.gmra.mrb[0].mxu0 %v818
        %v990 = vpop.f32.mrb[0].mxu0
        %v991 = vadd.f32 %v667, %v990
        %v992 = vpop.f32.mrb[0].mxu0
        %993 = vmatprep.mubr.f32.mxu0 0.0
        %994 = vmatmul.mubr.f32.gmra.mrb[0].mxu0 %v821
        %v995 = vpop.f32.mrb[0].mxu0
        %v996 = vadd.f32 %v672, %v995
        %v997 = vpop.f32.mrb[0].mxu0
        %998 = vmatprep.mubr.f32.mxu0 0.0
        %999 = vmatmul.mubr.f32.gmra.mrb[0].mxu0 %v824
        %v1000 = vpop.f32.mrb[0].mxu0
        %v1001 = vadd.f32 %v677, %v1000
        %v1002 = vpop.f32.mrb[0].mxu0
        %1003 = vmatprep.mubr.f32.mxu0 0.0
        %1004 = vmatmul.mubr.f32.gmra.mrb[0].mxu0 %v827
        %v1005 = vpop.f32.mrb[0].mxu0
        %v1006 = vadd.f32 %v682, %v1005
        %v1007 = vpop.f32.mrb[0].mxu0
        %1008 = vmatprep.mubr.f32.mxu0 0.0
        %1009 = vmatmul.mubr.f32.gmra.mrb[0].mxu0 %v830
        %v1010 = vpop.f32.mrb[0].mxu0
        %v1011 = vadd.f32 %v687, %v1010
        %v1012 = vpop.f32.mrb[0].mxu0
        %1013 = vmatprep.mubr.f32.mxu0 0.0
        %1014 = vmatmul.mubr.f32.gmra.mrb[0].mxu0 %v833
        %v1015 = vpop.f32.mrb[0].mxu0
        %v1016 = vadd.f32 %v692, %v1015
        %v1017 = vpop.f32.mrb[0].mxu0
        %1018 = vmatprep.mubr.f32.mxu0 0.0
        %1019 = vmatmul.mubr.f32.gmra.mrb[0].mxu0 %v836
        %v1020 = vpop.f32.mrb[0].mxu0
        %v1021 = vadd.f32 %v697, %v1020
        %v1022 = vpop.f32.mrb[0].mxu0
        %1023 = vmatprep.mubr.f32.mxu0 0.0
        %1024 = vmatmul.mubr.f32.gmra.mrb[0].mxu0 %v839
        %v1025 = vpop.f32.mrb[0].mxu0
        %v1026 = vadd.f32 %v702, %v1025
        %v1027 = vpop.f32.mrb[0].mxu0
        %1028 = vmatprep.mubr.f32.mxu0 0.0
        %1029 = vmatmul.mubr.f32.gmra.mrb[0].mxu0 %v842
        %v1030 = vpop.f32.mrb[0].mxu0
        %v1031 = vadd.f32 %v707, %v1030
        %v1032 = vpop.f32.mrb[0].mxu0
        %1033 = vmatprep.mubr.f32.mxu0 0.0
        %1034 = vmatmul.mubr.f32.gmra.mrb[0].mxu0 %v845
        %v1035 = vpop.f32.mrb[0].mxu0
        %v1036 = vadd.f32 %v712, %v1035
        %v1037 = vpop.f32.mrb[0].mxu0
        %1038 = vmatprep.mubr.f32.mxu0 0.0
        %1039 = vmatmul.mubr.f32.gmra.mrb[0].mxu0 %v848
        %v1040 = vpop.f32.mrb[0].mxu0
        %v1041 = vadd.f32 %v717, %v1040
        %v1042 = vpop.f32.mrb[0].mxu0
        %1043 = vmatprep.mubr.f32.mxu0 0.0
        %1044 = vmatmul.mubr.f32.gmra.mrb[0].mxu0 %v851
        %v1045 = vpop.f32.mrb[0].mxu0
        %v1046 = vadd.f32 %v722, %v1045
        %v1047 = vpop.f32.mrb[0].mxu0
        %1048 = vmatprep.mubr.f32.mxu0 0.0
        %1049 = vmatmul.mubr.f32.gmra.mrb[0].mxu0 %v854
        %v1050 = vpop.f32.mrb[0].mxu0
        %v1051 = vadd.f32 %v727, %v1050
        %v1052 = vpop.f32.mrb[0].mxu0
        %1053 = vmatprep.mubr.f32.mxu0 0.0
        %1054 = vmatmul.mubr.f32.gmra.mrb[0].mxu0 %v857
        %v1055 = vpop.f32.mrb[0].mxu0
        %v1056 = vadd.f32 %v732, %v1055
        %v1057 = vpop.f32.mrb[0].mxu0
        %1058 = vmatprep.mubr.f32.mxu0 0.0
        %1059 = vmatmul.mubr.f32.gmra.mrb[0].mxu0 %v860
        %v1060 = vpop.f32.mrb[0].mxu0
        %v1061 = vadd.f32 %v737, %v1060
        %v1062 = vpop.f32.mrb[0].mxu0
        %1063 = vmatprep.mubr.f32.mxu0 0.0
        %1064 = vmatmul.mubr.f32.gmra.mrb[0].mxu0 %v863
        %v1065 = vpop.f32.mrb[0].mxu0
        %v1066 = vadd.f32 %v742, %v1065
        %v1067 = vpop.f32.mrb[0].mxu0
        %1068 = vmatprep.mubr.f32.mxu0 0.0
        %1069 = vmatmul.mubr.f32.gmra.mrb[0].mxu0 %v866
        %v1070 = vpop.f32.mrb[0].mxu0
        %v1071 = vadd.f32 %v747, %v1070
        %v1072 = vpop.f32.mrb[0].mxu0
        %1073 = vmatprep.mubr.f32.mxu0 0.0
        %1074 = vmatmul.mubr.f32.gmra.mrb[0].mxu0 %v869
        %v1075 = vpop.f32.mrb[0].mxu0
        %v1076 = vadd.f32 %v752, %v1075
        %v1077 = vpop.f32.mrb[0].mxu0
        %1078 = vmatprep.mubr.f32.mxu0 0.0
        %1079 = vmatmul.mubr.f32.gmra.mrb[0].mxu0 %v872
        %v1080 = vpop.f32.mrb[0].mxu0
        %v1081 = vadd.f32 %v757, %v1080
        %v1082 = vpop.f32.mrb[0].mxu0
        %1083 = vmatprep.mubr.f32.mxu0 0.0
        %1084 = vmatmul.mubr.f32.gmra.mrb[0].mxu0 %v875
        %v1085 = vpop.f32.mrb[0].mxu0
        %v1086 = vadd.f32 %v762, %v1085
        %v1087 = vpop.f32.mrb[0].mxu0
        %1088 = vmatprep.mubr.f32.mxu0 0.0
        %1089 = vmatmul.mubr.f32.gmra.mrb[0].mxu0 %v878
        %v1090 = vpop.f32.mrb[0].mxu0
        %v1091 = vadd.f32 %v767, %v1090
        %v1092 = vpop.f32.mrb[0].mxu0
        %1093 = vmatprep.mubr.f32.mxu0 0.0
        %1094 = vmatmul.mubr.f32.gmra.mrb[0].mxu0 %v881
        %v1095 = vpop.f32.mrb[0].mxu0
        %v1096 = vadd.f32 %v772, %v1095
        %v1097 = vpop.f32.mrb[0].mxu0
        %1098 = vmatprep.mubr.f32.mxu0 0.0
        %1099 = vmatmul.mubr.f32.gmra.mrb[0].mxu0 %v884
        %v1100 = vpop.f32.mrb[0].mxu0
        %v1101 = vadd.f32 %v777, %v1100
        %v1102 = vpop.f32.mrb[0].mxu0
        %1103 = vmatprep.mubr.f32.mxu0 0.0
        %1104 = vmatmul.mubr.f32.gmra.mrb[0].mxu0 %v887
        %v1105 = vpop.f32.mrb[0].mxu0
        %v1106 = vadd.f32 %v782, %v1105
        %v1107 = vpop.f32.mrb[0].mxu0
        %1108 = vmatprep.mubr.f32.mxu0 0.0
        %1109 = vmatmul.mubr.f32.gmra.mrb[0].mxu0 %v890
        %v1110 = vpop.f32.mrb[0].mxu0
        %v1111 = vadd.f32 %v787, %v1110
        %v1112 = vpop.f32.mrb[0].mxu0
        %1113 = vmatprep.mubr.f32.mxu0 0.0
        %1114 = vmatmul.mubr.f32.gmra.mrb[0].mxu0 %v893
        %v1115 = vpop.f32.mrb[0].mxu0
        %v1116 = vadd.f32 %v792, %v1115
        %v1117 = vpop.f32.mrb[0].mxu0
        %1118 = vmatprep.mubr.f32.mxu0 0.0
        %1119 = vmatmul.mubr.f32.gmra.mrb[0].mxu0 %v896
        %v1120 = vpop.f32.mrb[0].mxu0
        %v1121 = vadd.f32 %v797, %v1120
        %v1122 = vpop.f32.mrb[0].mxu0
        %1123 = vmatprep.mubr.f32.mxu0 0.0
        %1124 = vmatmul.mubr.f32.gmra.mrb[0].mxu0 %v899
        %v1125 = vpop.f32.mrb[0].mxu0
        %v1126 = vadd.f32 %v802, %v1125
        %v1127 = vpop.f32.mrb[0].mxu0
        %1128 = vdwg.mxu0
        %v1129 = vld [vmem:[#allocation2 + $0x2] sm:$0xff]
        %v1130 = vld [vmem:[#allocation2 + $0xa] sm:$0xff]
        %v1131 = vld [vmem:[#allocation2 + $0x1a] sm:$0xff]
        %v1132 = vld [vmem:[#allocation2 + $0x22] sm:$0xff]
        %v1133 = vld [vmem:[#allocation2 + $0x32] sm:$0xff]
        %v1134 = vld [vmem:[#allocation2 + $0x3a] sm:$0xff]
        %v1135 = vld [vmem:[#allocation2 + $0x4a] sm:$0xff]
        %v1136 = vld [vmem:[#allocation2 + $0x52] sm:$0xff]
        %v1137 = vld [vmem:[#allocation2 + $0x62] sm:$0xff]
        %v1138 = vld [vmem:[#allocation2 + $0x6a] sm:$0xff]
        %v1139 = vld [vmem:[#allocation2 + $0x7a] sm:$0xff]
        %v1140 = vld [vmem:[#allocation2 + $0x82] sm:$0xff]
        %v1141 = vld [vmem:[#allocation2 + $0x92] sm:$0xff]
        %v1142 = vld [vmem:[#allocation2 + $0x9a] sm:$0xff]
        %v1143 = vld [vmem:[#allocation2 + $0xaa] sm:$0xff]
        %v1144 = vld [vmem:[#allocation2 + $0xb2] sm:$0xff]
        %v1145 = vld [vmem:[#allocation2 + $0xc2] sm:$0xff]
        %v1146 = vld [vmem:[#allocation2 + $0xca] sm:$0xff]
        %v1147 = vld [vmem:[#allocation2 + $0xda] sm:$0xff]
        %v1148 = vld [vmem:[#allocation2 + $0xe2] sm:$0xff]
        %v1149 = vld [vmem:[#allocation2 + $0xf2] sm:$0xff]
        %v1150 = vld [vmem:[#allocation2 + $0xfa] sm:$0xff]
        %v1151 = vld [vmem:[#allocation2 + $0x10a] sm:$0xff]
        %v1152 = vld [vmem:[#allocation2 + $0x112] sm:$0xff]
        %v1153 = vld [vmem:[#allocation2 + $0x122] sm:$0xff]
        %v1154 = vld [vmem:[#allocation2 + $0x12a] sm:$0xff]
        %v1155 = vld [vmem:[#allocation2 + $0x13a] sm:$0xff]
        %v1156 = vld [vmem:[#allocation2 + $0x142] sm:$0xff]
        %v1157 = vld [vmem:[#allocation2 + $0x152] sm:$0xff]
        %v1158 = vld [vmem:[#allocation2 + $0x15a] sm:$0xff]
        %v1159 = vld [vmem:[#allocation2 + $0x16a] sm:$0xff]
        %v1160 = vld [vmem:[#allocation2 + $0x172] sm:$0xff]
        %s1161 = scalar_lea.vmem %s1, 8
        %v1162 = vld [vmem:[%s1161] sm:$0x7]
        %v1164 = vsel %vm292, %v1129, 0
        %v1167 = vsel %vm292, %v1130, 0
        %v1170 = vsel %vm292, %v1131, 0
        %v1173 = vsel %vm292, %v1132, 0
        %v1176 = vsel %vm292, %v1133, 0
        %v1179 = vsel %vm292, %v1134, 0
        %v1182 = vsel %vm292, %v1135, 0
        %v1185 = vsel %vm292, %v1136, 0
        %v1188 = vsel %vm292, %v1137, 0
        %v1191 = vsel %vm292, %v1138, 0
        %v1194 = vsel %vm292, %v1139, 0
        %v1197 = vsel %vm292, %v1140, 0
        %v1200 = vsel %vm292, %v1141, 0
        %v1203 = vsel %vm292, %v1142, 0
        %v1206 = vsel %vm292, %v1143, 0
        %v1209 = vsel %vm292, %v1144, 0
        %v1212 = vsel %vm292, %v1145, 0
        %v1215 = vsel %vm292, %v1146, 0
        %v1218 = vsel %vm292, %v1147, 0
        %v1221 = vsel %vm292, %v1148, 0
        %v1224 = vsel %vm292, %v1149, 0
        %v1227 = vsel %vm292, %v1150, 0
        %v1230 = vsel %vm292, %v1151, 0
        %v1233 = vsel %vm292, %v1152, 0
        %v1236 = vsel %vm292, %v1153, 0
        %v1239 = vsel %vm292, %v1154, 0
        %v1242 = vsel %vm292, %v1155, 0
        %v1245 = vsel %vm292, %v1156, 0
        %v1248 = vsel %vm292, %v1157, 0
        %v1251 = vsel %vm292, %v1158, 0
        %v1254 = vsel %vm292, %v1159, 0
        %v1257 = vsel %vm292, %v1160, 0
        %v1260 = vsel %vm576, %v1162, 0
        %1262 = vmatprep.subr.mxu0 0.0
        %1263 = vmatpush1.msra.mxu0 %v1260
        %1264 = vmatprep.subr.mxu0 0.0
        %1265 = vmatpush1.msra.mxu0 0.0
        %1266 = vmatprep.subr.mxu0 0.0
        %1267 = vmatpush1.msra.mxu0 0.0
        %1268 = vmatprep.subr.mxu0 0.0
        %1269 = vmatpush1.msra.mxu0 0.0
        %1270 = vmatprep.subr.mxu0 0.0
        %1271 = vmatpush1.msra.mxu0 0.0
        %1272 = vmatprep.subr.mxu0 0.0
        %1273 = vmatpush1.msra.mxu0 0.0
        %1274 = vmatprep.subr.mxu0 0.0
        %1275 = vmatpush1.msra.mxu0 0.0
        %1276 = vmatprep.subr.mxu0 0.0
        %1277 = vmatpush1.msra.mxu0 0.0
        %1278 = vmatprep.subr.mxu0 0.0
        %1279 = vmatpush1.msra.mxu0 0.0
        %1280 = vmatprep.subr.mxu0 0.0
        %1281 = vmatpush1.msra.mxu0 0.0
        %1282 = vmatprep.subr.mxu0 0.0
        %1283 = vmatpush1.msra.mxu0 0.0
        %1284 = vmatprep.subr.mxu0 0.0
        %1285 = vmatpush1.msra.mxu0 0.0
        %1286 = vmatprep.subr.mxu0 0.0
        %1287 = vmatpush1.msra.mxu0 0.0
        %1288 = vmatprep.subr.mxu0 0.0
        %1289 = vmatpush1.msra.mxu0 0.0
        %1290 = vmatprep.subr.mxu0 0.0
        %1291 = vmatpush1.msra.mxu0 0.0
        %1292 = vmatprep.subr.mxu0 0.0
        %1293 = vmatpush1.msra.mxu0 0.0
        %1294 = vmatprep.subr.mxu0 0.0
        %1295 = vmatpush1.msra.mxu0 0.0
        %1296 = vmatprep.subr.mxu0 0.0
        %1297 = vmatpush1.msra.mxu0 0.0
        %1298 = vmatprep.subr.mxu0 0.0
        %1299 = vmatpush1.msra.mxu0 0.0
        %1300 = vmatprep.subr.mxu0 0.0
        %1301 = vmatpush1.msra.mxu0 0.0
        %1302 = vmatprep.subr.mxu0 0.0
        %1303 = vmatpush1.msra.mxu0 0.0
        %1304 = vmatprep.subr.mxu0 0.0
        %1305 = vmatpush1.msra.mxu0 0.0
        %1306 = vmatprep.subr.mxu0 0.0
        %1307 = vmatpush1.msra.mxu0 0.0
        %1308 = vmatprep.subr.mxu0 0.0
        %1309 = vmatpush1.msra.mxu0 0.0
        %1310 = vmatprep.subr.mxu0 0.0
        %1311 = vmatpush1.msra.mxu0 0.0
        %1312 = vmatprep.subr.mxu0 0.0
        %1313 = vmatpush1.msra.mxu0 0.0
        %1314 = vmatprep.subr.mxu0 0.0
        %1315 = vmatpush1.msra.mxu0 0.0
        %1316 = vmatprep.subr.mxu0 0.0
        %1317 = vmatpush1.msra.mxu0 0.0
        %1318 = vmatprep.subr.mxu0 0.0
        %1319 = vmatpush1.msra.mxu0 0.0
        %1320 = vmatprep.subr.mxu0 0.0
        %1321 = vmatpush1.msra.mxu0 0.0
        %1322 = vmatprep.subr.mxu0 0.0
        %1323 = vmatpush1.msra.mxu0 0.0
        %1324 = vmatprep.subr.mxu0 0.0
        %1325 = vmatpush1.msra.mxu0 0.0
        %1326 = vmatprep.mubr.f32.mxu0 0.0
        %1327 = vmatmul.mubr.f32.gmra.mrb[0].mxu0 %v1164
        %v1328 = vpop.f32.mrb[0].mxu0
        %v1329 = vadd.f32 0.0, %v1328
        %v1330 = vpop.f32.mrb[0].mxu0
        %1331 = vmatprep.mubr.f32.mxu0 0.0
        %1332 = vmatmul.mubr.f32.gmra.mrb[0].mxu0 %v1167
        %v1333 = vpop.f32.mrb[0].mxu0
        %v1334 = vadd.f32 0.0, %v1333
        %v1335 = vpop.f32.mrb[0].mxu0
        %1336 = vmatprep.mubr.f32.mxu0 0.0
        %1337 = vmatmul.mubr.f32.gmra.mrb[0].mxu0 %v1170
        %v1338 = vpop.f32.mrb[0].mxu0
        %v1339 = vadd.f32 0.0, %v1338
        %v1340 = vpop.f32.mrb[0].mxu0
        %1341 = vmatprep.mubr.f32.mxu0 0.0
        %1342 = vmatmul.mubr.f32.gmra.mrb[0].mxu0 %v1173
        %v1343 = vpop.f32.mrb[0].mxu0
        %v1344 = vadd.f32 0.0, %v1343
        %v1345 = vpop.f32.mrb[0].mxu0
        %1346 = vmatprep.mubr.f32.mxu0 0.0
        %1347 = vmatmul.mubr.f32.gmra.mrb[0].mxu0 %v1176
        %v1348 = vpop.f32.mrb[0].mxu0
        %v1349 = vadd.f32 0.0, %v1348
        %v1350 = vpop.f32.mrb[0].mxu0
        %1351 = vmatprep.mubr.f32.mxu0 0.0
        %1352 = vmatmul.mubr.f32.gmra.mrb[0].mxu0 %v1179
        %v1353 = vpop.f32.mrb[0].mxu0
        %v1354 = vadd.f32 0.0, %v1353
        %v1355 = vpop.f32.mrb[0].mxu0
        %1356 = vmatprep.mubr.f32.mxu0 0.0
        %1357 = vmatmul.mubr.f32.gmra.mrb[0].mxu0 %v1182
        %v1358 = vpop.f32.mrb[0].mxu0
        %v1359 = vadd.f32 0.0, %v1358
        %v1360 = vpop.f32.mrb[0].mxu0
        %1361 = vmatprep.mubr.f32.mxu0 0.0
        %1362 = vmatmul.mubr.f32.gmra.mrb[0].mxu0 %v1185
        %v1363 = vpop.f32.mrb[0].mxu0
        %v1364 = vadd.f32 0.0, %v1363
        %v1365 = vpop.f32.mrb[0].mxu0
        %1366 = vmatprep.mubr.f32.mxu0 0.0
        %1367 = vmatmul.mubr.f32.gmra.mrb[0].mxu0 %v1188
        %v1368 = vpop.f32.mrb[0].mxu0
        %v1369 = vadd.f32 0.0, %v1368
        %v1370 = vpop.f32.mrb[0].mxu0
        %1371 = vmatprep.mubr.f32.mxu0 0.0
        %1372 = vmatmul.mubr.f32.gmra.mrb[0].mxu0 %v1191
        %v1373 = vpop.f32.mrb[0].mxu0
        %v1374 = vadd.f32 0.0, %v1373
        %v1375 = vpop.f32.mrb[0].mxu0
        %1376 = vmatprep.mubr.f32.mxu0 0.0
        %1377 = vmatmul.mubr.f32.gmra.mrb[0].mxu0 %v1194
        %v1378 = vpop.f32.mrb[0].mxu0
        %v1379 = vadd.f32 0.0, %v1378
        %v1380 = vpop.f32.mrb[0].mxu0
        %1381 = vmatprep.mubr.f32.mxu0 0.0
        %1382 = vmatmul.mubr.f32.gmra.mrb[0].mxu0 %v1197
        %v1383 = vpop.f32.mrb[0].mxu0
        %v1384 = vadd.f32 0.0, %v1383
        %v1385 = vpop.f32.mrb[0].mxu0
        %1386 = vmatprep.mubr.f32.mxu0 0.0
        %1387 = vmatmul.mubr.f32.gmra.mrb[0].mxu0 %v1200
        %v1388 = vpop.f32.mrb[0].mxu0
        %v1389 = vadd.f32 0.0, %v1388
        %v1390 = vpop.f32.mrb[0].mxu0
        %1391 = vmatprep.mubr.f32.mxu0 0.0
        %1392 = vmatmul.mubr.f32.gmra.mrb[0].mxu0 %v1203
        %v1393 = vpop.f32.mrb[0].mxu0
        %v1394 = vadd.f32 0.0, %v1393
        %v1395 = vpop.f32.mrb[0].mxu0
        %1396 = vmatprep.mubr.f32.mxu0 0.0
        %1397 = vmatmul.mubr.f32.gmra.mrb[0].mxu0 %v1206
        %v1398 = vpop.f32.mrb[0].mxu0
        %v1399 = vadd.f32 0.0, %v1398
        %v1400 = vpop.f32.mrb[0].mxu0
        %1401 = vmatprep.mubr.f32.mxu0 0.0
        %1402 = vmatmul.mubr.f32.gmra.mrb[0].mxu0 %v1209
        %v1403 = vpop.f32.mrb[0].mxu0
        %v1404 = vadd.f32 0.0, %v1403
        %v1405 = vpop.f32.mrb[0].mxu0
        %1406 = vmatprep.mubr.f32.mxu0 0.0
        %1407 = vmatmul.mubr.f32.gmra.mrb[0].mxu0 %v1212
        %v1408 = vpop.f32.mrb[0].mxu0
        %v1409 = vadd.f32 0.0, %v1408
        %v1410 = vpop.f32.mrb[0].mxu0
        %1411 = vmatprep.mubr.f32.mxu0 0.0
        %1412 = vmatmul.mubr.f32.gmra.mrb[0].mxu0 %v1215
        %v1413 = vpop.f32.mrb[0].mxu0
        %v1414 = vadd.f32 0.0, %v1413
        %v1415 = vpop.f32.mrb[0].mxu0
        %1416 = vmatprep.mubr.f32.mxu0 0.0
        %1417 = vmatmul.mubr.f32.gmra.mrb[0].mxu0 %v1218
        %v1418 = vpop.f32.mrb[0].mxu0
        %v1419 = vadd.f32 0.0, %v1418
        %v1420 = vpop.f32.mrb[0].mxu0
        %1421 = vmatprep.mubr.f32.mxu0 0.0
        %1422 = vmatmul.mubr.f32.gmra.mrb[0].mxu0 %v1221
        %v1423 = vpop.f32.mrb[0].mxu0
        %v1424 = vadd.f32 0.0, %v1423
        %v1425 = vpop.f32.mrb[0].mxu0
        %1426 = vmatprep.mubr.f32.mxu0 0.0
        %1427 = vmatmul.mubr.f32.gmra.mrb[0].mxu0 %v1224
        %v1428 = vpop.f32.mrb[0].mxu0
        %v1429 = vadd.f32 0.0, %v1428
        %v1430 = vpop.f32.mrb[0].mxu0
        %1431 = vmatprep.mubr.f32.mxu0 0.0
        %1432 = vmatmul.mubr.f32.gmra.mrb[0].mxu0 %v1227
        %v1433 = vpop.f32.mrb[0].mxu0
        %v1434 = vadd.f32 0.0, %v1433
        %v1435 = vpop.f32.mrb[0].mxu0
        %1436 = vmatprep.mubr.f32.mxu0 0.0
        %1437 = vmatmul.mubr.f32.gmra.mrb[0].mxu0 %v1230
        %v1438 = vpop.f32.mrb[0].mxu0
        %v1439 = vadd.f32 0.0, %v1438
        %v1440 = vpop.f32.mrb[0].mxu0
        %1441 = vmatprep.mubr.f32.mxu0 0.0
        %1442 = vmatmul.mubr.f32.gmra.mrb[0].mxu0 %v1233
        %v1443 = vpop.f32.mrb[0].mxu0
        %v1444 = vadd.f32 0.0, %v1443
        %v1445 = vpop.f32.mrb[0].mxu0
        %1446 = vmatprep.mubr.f32.mxu0 0.0
        %1447 = vmatmul.mubr.f32.gmra.mrb[0].mxu0 %v1236
        %v1448 = vpop.f32.mrb[0].mxu0
        %v1449 = vadd.f32 0.0, %v1448
        %v1450 = vpop.f32.mrb[0].mxu0
        %1451 = vmatprep.mubr.f32.mxu0 0.0
        %1452 = vmatmul.mubr.f32.gmra.mrb[0].mxu0 %v1239
        %v1453 = vpop.f32.mrb[0].mxu0
        %v1454 = vadd.f32 0.0, %v1453
        %v1455 = vpop.f32.mrb[0].mxu0
        %1456 = vmatprep.mubr.f32.mxu0 0.0
        %1457 = vmatmul.mubr.f32.gmra.mrb[0].mxu0 %v1242
        %v1458 = vpop.f32.mrb[0].mxu0
        %v1459 = vadd.f32 0.0, %v1458
        %v1460 = vpop.f32.mrb[0].mxu0
        %1461 = vmatprep.mubr.f32.mxu0 0.0
        %1462 = vmatmul.mubr.f32.gmra.mrb[0].mxu0 %v1245
        %v1463 = vpop.f32.mrb[0].mxu0
        %v1464 = vadd.f32 0.0, %v1463
        %v1465 = vpop.f32.mrb[0].mxu0
        %1466 = vmatprep.mubr.f32.mxu0 0.0
        %1467 = vmatmul.mubr.f32.gmra.mrb[0].mxu0 %v1248
        %v1468 = vpop.f32.mrb[0].mxu0
        %v1469 = vadd.f32 0.0, %v1468
        %v1470 = vpop.f32.mrb[0].mxu0
        %1471 = vmatprep.mubr.f32.mxu0 0.0
        %1472 = vmatmul.mubr.f32.gmra.mrb[0].mxu0 %v1251
        %v1473 = vpop.f32.mrb[0].mxu0
        %v1474 = vadd.f32 0.0, %v1473
        %v1475 = vpop.f32.mrb[0].mxu0
        %1476 = vmatprep.mubr.f32.mxu0 0.0
        %1477 = vmatmul.mubr.f32.gmra.mrb[0].mxu0 %v1254
        %v1478 = vpop.f32.mrb[0].mxu0
        %v1479 = vadd.f32 0.0, %v1478
        %v1480 = vpop.f32.mrb[0].mxu0
        %1481 = vmatprep.mubr.f32.mxu0 0.0
        %1482 = vmatmul.mubr.f32.gmra.mrb[0].mxu0 %v1257
        %v1483 = vpop.f32.mrb[0].mxu0
        %v1484 = vadd.f32 0.0, %v1483
        %v1485 = vpop.f32.mrb[0].mxu0
        %1486 = vdwg.mxu0
        %v1487 = vadd.f32 %v971, %v1329
        %v1488 = vadd.f32 %v976, %v1334
        %v1489 = vadd.f32 %v981, %v1339
        %v1490 = vadd.f32 %v986, %v1344
        %v1491 = vadd.f32 %v991, %v1349
        %v1492 = vadd.f32 %v996, %v1354
        %v1493 = vadd.f32 %v1001, %v1359
        %v1494 = vadd.f32 %v1006, %v1364
        %v1495 = vadd.f32 %v1011, %v1369
        %v1496 = vadd.f32 %v1016, %v1374
        %v1497 = vadd.f32 %v1021, %v1379
        %v1498 = vadd.f32 %v1026, %v1384
        %v1499 = vadd.f32 %v1031, %v1389
        %v1500 = vadd.f32 %v1036, %v1394
        %v1501 = vadd.f32 %v1041, %v1399
        %v1502 = vadd.f32 %v1046, %v1404
        %v1503 = vadd.f32 %v1051, %v1409
        %v1504 = vadd.f32 %v1056, %v1414
        %v1505 = vadd.f32 %v1061, %v1419
        %v1506 = vadd.f32 %v1066, %v1424
        %v1507 = vadd.f32 %v1071, %v1429
        %v1508 = vadd.f32 %v1076, %v1434
        %v1509 = vadd.f32 %v1081, %v1439
        %v1510 = vadd.f32 %v1086, %v1444
        %v1511 = vadd.f32 %v1091, %v1449
        %v1512 = vadd.f32 %v1096, %v1454
        %v1513 = vadd.f32 %v1101, %v1459
        %v1514 = vadd.f32 %v1106, %v1464
        %v1515 = vadd.f32 %v1111, %v1469
        %v1516 = vadd.f32 %v1116, %v1474
        %v1517 = vadd.f32 %v1121, %v1479
        %v1518 = vadd.f32 %v1126, %v1484
        %v1519 = vld [vmem:[%s380] sm:$0xff]
        %v1520 = vld [vmem:[%s380 + $0x8] sm:$0xff]
        %v1521 = vld [vmem:[%s380 + $0x18] sm:$0xff]
        %v1522 = vld [vmem:[%s380 + $0x20] sm:$0xff]
        %v1523 = vld [vmem:[%s380 + $0x30] sm:$0xff]
        %v1524 = vld [vmem:[%s380 + $0x38] sm:$0xff]
        %v1525 = vld [vmem:[%s380 + $0x48] sm:$0xff]
        %v1526 = vld [vmem:[%s380 + $0x50] sm:$0xff]
        %v1527 = vld [vmem:[%s380 + $0x60] sm:$0xff]
        %v1528 = vld [vmem:[%s380 + $0x68] sm:$0xff]
        %v1529 = vld [vmem:[%s380 + $0x78] sm:$0xff]
        %v1530 = vld [vmem:[%s380 + $0x80] sm:$0xff]
        %v1531 = vld [vmem:[%s380 + $0x90] sm:$0xff]
        %v1532 = vld [vmem:[%s380 + $0x98] sm:$0xff]
        %v1533 = vld [vmem:[%s380 + $0xa8] sm:$0xff]
        %v1534 = vld [vmem:[%s380 + $0xb0] sm:$0xff]
        %v1535 = vld [vmem:[%s380 + $0xc0] sm:$0xff]
        %v1536 = vld [vmem:[%s380 + $0xc8] sm:$0xff]
        %v1537 = vld [vmem:[%s380 + $0xd8] sm:$0xff]
        %v1538 = vld [vmem:[%s380 + $0xe0] sm:$0xff]
        %v1539 = vld [vmem:[%s380 + $0xf0] sm:$0xff]
        %v1540 = vld [vmem:[%s380 + $0xf8] sm:$0xff]
        %v1541 = vld [vmem:[%s380 + $0x108] sm:$0xff]
        %v1542 = vld [vmem:[%s380 + $0x110] sm:$0xff]
        %v1543 = vld [vmem:[%s380 + $0x120] sm:$0xff]
        %v1544 = vld [vmem:[%s380 + $0x128] sm:$0xff]
        %v1545 = vld [vmem:[%s380 + $0x138] sm:$0xff]
        %v1546 = vld [vmem:[%s380 + $0x140] sm:$0xff]
        %v1547 = vld [vmem:[%s380 + $0x150] sm:$0xff]
        %v1548 = vld [vmem:[%s380 + $0x158] sm:$0xff]
        %v1549 = vld [vmem:[%s380 + $0x168] sm:$0xff]
        %v1550 = vld [vmem:[%s380 + $0x170] sm:$0xff]
        %s1551 = scalar_lea.vmem %s1, 12
        %v1552 = vld [vmem:[%s1551] sm:$0x7]
        %v1554 = vsel %vm292, %v1519, 0
        %v1557 = vsel %vm292, %v1520, 0
        %v1560 = vsel %vm292, %v1521, 0
        %v1563 = vsel %vm292, %v1522, 0
        %v1566 = vsel %vm292, %v1523, 0
        %v1569 = vsel %vm292, %v1524, 0
        %v1572 = vsel %vm292, %v1525, 0
        %v1575 = vsel %vm292, %v1526, 0
        %v1578 = vsel %vm292, %v1527, 0
        %v1581 = vsel %vm292, %v1528, 0
        %v1584 = vsel %vm292, %v1529, 0
        %v1587 = vsel %vm292, %v1530, 0
        %v1590 = vsel %vm292, %v1531, 0
        %v1593 = vsel %vm292, %v1532, 0
        %v1596 = vsel %vm292, %v1533, 0
        %v1599 = vsel %vm292, %v1534, 0
        %v1602 = vsel %vm292, %v1535, 0
        %v1605 = vsel %vm292, %v1536, 0
        %v1608 = vsel %vm292, %v1537, 0
        %v1611 = vsel %vm292, %v1538, 0
        %v1614 = vsel %vm292, %v1539, 0
        %v1617 = vsel %vm292, %v1540, 0
        %v1620 = vsel %vm292, %v1541, 0
        %v1623 = vsel %vm292, %v1542, 0
        %v1626 = vsel %vm292, %v1543, 0
        %v1629 = vsel %vm292, %v1544, 0
        %v1632 = vsel %vm292, %v1545, 0
        %v1635 = vsel %vm292, %v1546, 0
        %v1638 = vsel %vm292, %v1547, 0
        %v1641 = vsel %vm292, %v1548, 0
        %v1644 = vsel %vm292, %v1549, 0
        %v1647 = vsel %vm292, %v1550, 0
        %v1650 = vsel %vm576, %v1552, 0
        %1652 = vmatprep.subr.mxu0 0.0
        %1653 = vmatpush1.msra.mxu0 %v1650
        %1654 = vmatprep.subr.mxu0 0.0
        %1655 = vmatpush1.msra.mxu0 0.0
        %1656 = vmatprep.subr.mxu0 0.0
        %1657 = vmatpush1.msra.mxu0 0.0
        %1658 = vmatprep.subr.mxu0 0.0
        %1659 = vmatpush1.msra.mxu0 0.0
        %1660 = vmatprep.subr.mxu0 0.0
        %1661 = vmatpush1.msra.mxu0 0.0
        %1662 = vmatprep.subr.mxu0 0.0
        %1663 = vmatpush1.msra.mxu0 0.0
        %1664 = vmatprep.subr.mxu0 0.0
        %1665 = vmatpush1.msra.mxu0 0.0
        %1666 = vmatprep.subr.mxu0 0.0
        %1667 = vmatpush1.msra.mxu0 0.0
        %1668 = vmatprep.subr.mxu0 0.0
        %1669 = vmatpush1.msra.mxu0 0.0
        %1670 = vmatprep.subr.mxu0 0.0
        %1671 = vmatpush1.msra.mxu0 0.0
        %1672 = vmatprep.subr.mxu0 0.0
        %1673 = vmatpush1.msra.mxu0 0.0
        %1674 = vmatprep.subr.mxu0 0.0
        %1675 = vmatpush1.msra.mxu0 0.0
        %1676 = vmatprep.subr.mxu0 0.0
        %1677 = vmatpush1.msra.mxu0 0.0
        %1678 = vmatprep.subr.mxu0 0.0
        %1679 = vmatpush1.msra.mxu0 0.0
        %1680 = vmatprep.subr.mxu0 0.0
        %1681 = vmatpush1.msra.mxu0 0.0
        %1682 = vmatprep.subr.mxu0 0.0
        %1683 = vmatpush1.msra.mxu0 0.0
        %1684 = vmatprep.subr.mxu0 0.0
        %1685 = vmatpush1.msra.mxu0 0.0
        %1686 = vmatprep.subr.mxu0 0.0
        %1687 = vmatpush1.msra.mxu0 0.0
        %1688 = vmatprep.subr.mxu0 0.0
        %1689 = vmatpush1.msra.mxu0 0.0
        %1690 = vmatprep.subr.mxu0 0.0
        %1691 = vmatpush1.msra.mxu0 0.0
        %1692 = vmatprep.subr.mxu0 0.0
        %1693 = vmatpush1.msra.mxu0 0.0
        %1694 = vmatprep.subr.mxu0 0.0
        %1695 = vmatpush1.msra.mxu0 0.0
        %1696 = vmatprep.subr.mxu0 0.0
        %1697 = vmatpush1.msra.mxu0 0.0
        %1698 = vmatprep.subr.mxu0 0.0
        %1699 = vmatpush1.msra.mxu0 0.0
        %1700 = vmatprep.subr.mxu0 0.0
        %1701 = vmatpush1.msra.mxu0 0.0
        %1702 = vmatprep.subr.mxu0 0.0
        %1703 = vmatpush1.msra.mxu0 0.0
        %1704 = vmatprep.subr.mxu0 0.0
        %1705 = vmatpush1.msra.mxu0 0.0
        %1706 = vmatprep.subr.mxu0 0.0
        %1707 = vmatpush1.msra.mxu0 0.0
        %1708 = vmatprep.subr.mxu0 0.0
        %1709 = vmatpush1.msra.mxu0 0.0
        %1710 = vmatprep.subr.mxu0 0.0
        %1711 = vmatpush1.msra.mxu0 0.0
        %1712 = vmatprep.subr.mxu0 0.0
        %1713 = vmatpush1.msra.mxu0 0.0
        %1714 = vmatprep.subr.mxu0 0.0
        %1715 = vmatpush1.msra.mxu0 0.0
        %1716 = vmatprep.mubr.f32.mxu0 0.0
        %1717 = vmatmul.mubr.f32.gmra.mrb[0].mxu0 %v1554
        %v1718 = vpop.f32.mrb[0].mxu0
        %v1719 = vadd.f32 0.0, %v1718
        %v1720 = vpop.f32.mrb[0].mxu0
        %1721 = vmatprep.mubr.f32.mxu0 0.0
        %1722 = vmatmul.mubr.f32.gmra.mrb[0].mxu0 %v1557
        %v1723 = vpop.f32.mrb[0].mxu0
        %v1724 = vadd.f32 0.0, %v1723
        %v1725 = vpop.f32.mrb[0].mxu0
        %1726 = vmatprep.mubr.f32.mxu0 0.0
        %1727 = vmatmul.mubr.f32.gmra.mrb[0].mxu0 %v1560
        %v1728 = vpop.f32.mrb[0].mxu0
        %v1729 = vadd.f32 0.0, %v1728
        %v1730 = vpop.f32.mrb[0].mxu0
        %1731 = vmatprep.mubr.f32.mxu0 0.0
        %1732 = vmatmul.mubr.f32.gmra.mrb[0].mxu0 %v1563
        %v1733 = vpop.f32.mrb[0].mxu0
        %v1734 = vadd.f32 0.0, %v1733
        %v1735 = vpop.f32.mrb[0].mxu0
        %1736 = vmatprep.mubr.f32.mxu0 0.0
        %1737 = vmatmul.mubr.f32.gmra.mrb[0].mxu0 %v1566
        %v1738 = vpop.f32.mrb[0].mxu0
        %v1739 = vadd.f32 0.0, %v1738
        %v1740 = vpop.f32.mrb[0].mxu0
        %1741 = vmatprep.mubr.f32.mxu0 0.0
        %1742 = vmatmul.mubr.f32.gmra.mrb[0].mxu0 %v1569
        %v1743 = vpop.f32.mrb[0].mxu0
        %v1744 = vadd.f32 0.0, %v1743
        %v1745 = vpop.f32.mrb[0].mxu0
        %1746 = vmatprep.mubr.f32.mxu0 0.0
        %1747 = vmatmul.mubr.f32.gmra.mrb[0].mxu0 %v1572
        %v1748 = vpop.f32.mrb[0].mxu0
        %v1749 = vadd.f32 0.0, %v1748
        %v1750 = vpop.f32.mrb[0].mxu0
        %1751 = vmatprep.mubr.f32.mxu0 0.0
        %1752 = vmatmul.mubr.f32.gmra.mrb[0].mxu0 %v1575
        %v1753 = vpop.f32.mrb[0].mxu0
        %v1754 = vadd.f32 0.0, %v1753
        %v1755 = vpop.f32.mrb[0].mxu0
        %1756 = vmatprep.mubr.f32.mxu0 0.0
        %1757 = vmatmul.mubr.f32.gmra.mrb[0].mxu0 %v1578
        %v1758 = vpop.f32.mrb[0].mxu0
        %v1759 = vadd.f32 0.0, %v1758
        %v1760 = vpop.f32.mrb[0].mxu0
        %1761 = vmatprep.mubr.f32.mxu0 0.0
        %1762 = vmatmul.mubr.f32.gmra.mrb[0].mxu0 %v1581
        %v1763 = vpop.f32.mrb[0].mxu0
        %v1764 = vadd.f32 0.0, %v1763
        %v1765 = vpop.f32.mrb[0].mxu0
        %1766 = vmatprep.mubr.f32.mxu0 0.0
        %1767 = vmatmul.mubr.f32.gmra.mrb[0].mxu0 %v1584
        %v1768 = vpop.f32.mrb[0].mxu0
        %v1769 = vadd.f32 0.0, %v1768
        %v1770 = vpop.f32.mrb[0].mxu0
        %1771 = vmatprep.mubr.f32.mxu0 0.0
        %1772 = vmatmul.mubr.f32.gmra.mrb[0].mxu0 %v1587
        %v1773 = vpop.f32.mrb[0].mxu0
        %v1774 = vadd.f32 0.0, %v1773
        %v1775 = vpop.f32.mrb[0].mxu0
        %1776 = vmatprep.mubr.f32.mxu0 0.0
        %1777 = vmatmul.mubr.f32.gmra.mrb[0].mxu0 %v1590
        %v1778 = vpop.f32.mrb[0].mxu0
        %v1779 = vadd.f32 0.0, %v1778
        %v1780 = vpop.f32.mrb[0].mxu0
        %1781 = vmatprep.mubr.f32.mxu0 0.0
        %1782 = vmatmul.mubr.f32.gmra.mrb[0].mxu0 %v1593
        %v1783 = vpop.f32.mrb[0].mxu0
        %v1784 = vadd.f32 0.0, %v1783
        %v1785 = vpop.f32.mrb[0].mxu0
        %1786 = vmatprep.mubr.f32.mxu0 0.0
        %1787 = vmatmul.mubr.f32.gmra.mrb[0].mxu0 %v1596
        %v1788 = vpop.f32.mrb[0].mxu0
        %v1789 = vadd.f32 0.0, %v1788
        %v1790 = vpop.f32.mrb[0].mxu0
        %1791 = vmatprep.mubr.f32.mxu0 0.0
        %1792 = vmatmul.mubr.f32.gmra.mrb[0].mxu0 %v1599
        %v1793 = vpop.f32.mrb[0].mxu0
        %v1794 = vadd.f32 0.0, %v1793
        %v1795 = vpop.f32.mrb[0].mxu0
        %1796 = vmatprep.mubr.f32.mxu0 0.0
        %1797 = vmatmul.mubr.f32.gmra.mrb[0].mxu0 %v1602
        %v1798 = vpop.f32.mrb[0].mxu0
        %v1799 = vadd.f32 0.0, %v1798
        %v1800 = vpop.f32.mrb[0].mxu0
        %1801 = vmatprep.mubr.f32.mxu0 0.0
        %1802 = vmatmul.mubr.f32.gmra.mrb[0].mxu0 %v1605
        %v1803 = vpop.f32.mrb[0].mxu0
        %v1804 = vadd.f32 0.0, %v1803
        %v1805 = vpop.f32.mrb[0].mxu0
        %1806 = vmatprep.mubr.f32.mxu0 0.0
        %1807 = vmatmul.mubr.f32.gmra.mrb[0].mxu0 %v1608
        %v1808 = vpop.f32.mrb[0].mxu0
        %v1809 = vadd.f32 0.0, %v1808
        %v1810 = vpop.f32.mrb[0].mxu0
        %1811 = vmatprep.mubr.f32.mxu0 0.0
        %1812 = vmatmul.mubr.f32.gmra.mrb[0].mxu0 %v1611
        %v1813 = vpop.f32.mrb[0].mxu0
        %v1814 = vadd.f32 0.0, %v1813
        %v1815 = vpop.f32.mrb[0].mxu0
        %1816 = vmatprep.mubr.f32.mxu0 0.0
        %1817 = vmatmul.mubr.f32.gmra.mrb[0].mxu0 %v1614
        %v1818 = vpop.f32.mrb[0].mxu0
        %v1819 = vadd.f32 0.0, %v1818
        %v1820 = vpop.f32.mrb[0].mxu0
        %1821 = vmatprep.mubr.f32.mxu0 0.0
        %1822 = vmatmul.mubr.f32.gmra.mrb[0].mxu0 %v1617
        %v1823 = vpop.f32.mrb[0].mxu0
        %v1824 = vadd.f32 0.0, %v1823
        %v1825 = vpop.f32.mrb[0].mxu0
        %1826 = vmatprep.mubr.f32.mxu0 0.0
        %1827 = vmatmul.mubr.f32.gmra.mrb[0].mxu0 %v1620
        %v1828 = vpop.f32.mrb[0].mxu0
        %v1829 = vadd.f32 0.0, %v1828
        %v1830 = vpop.f32.mrb[0].mxu0
        %1831 = vmatprep.mubr.f32.mxu0 0.0
        %1832 = vmatmul.mubr.f32.gmra.mrb[0].mxu0 %v1623
        %v1833 = vpop.f32.mrb[0].mxu0
        %v1834 = vadd.f32 0.0, %v1833
        %v1835 = vpop.f32.mrb[0].mxu0
        %1836 = vmatprep.mubr.f32.mxu0 0.0
        %1837 = vmatmul.mubr.f32.gmra.mrb[0].mxu0 %v1626
        %v1838 = vpop.f32.mrb[0].mxu0
        %v1839 = vadd.f32 0.0, %v1838
        %v1840 = vpop.f32.mrb[0].mxu0
        %1841 = vmatprep.mubr.f32.mxu0 0.0
        %1842 = vmatmul.mubr.f32.gmra.mrb[0].mxu0 %v1629
        %v1843 = vpop.f32.mrb[0].mxu0
        %v1844 = vadd.f32 0.0, %v1843
        %v1845 = vpop.f32.mrb[0].mxu0
        %1846 = vmatprep.mubr.f32.mxu0 0.0
        %1847 = vmatmul.mubr.f32.gmra.mrb[0].mxu0 %v1632
        %v1848 = vpop.f32.mrb[0].mxu0
        %v1849 = vadd.f32 0.0, %v1848
        %v1850 = vpop.f32.mrb[0].mxu0
        %1851 = vmatprep.mubr.f32.mxu0 0.0
        %1852 = vmatmul.mubr.f32.gmra.mrb[0].mxu0 %v1635
        %v1853 = vpop.f32.mrb[0].mxu0
        %v1854 = vadd.f32 0.0, %v1853
        %v1855 = vpop.f32.mrb[0].mxu0
        %1856 = vmatprep.mubr.f32.mxu0 0.0
        %1857 = vmatmul.mubr.f32.gmra.mrb[0].mxu0 %v1638
        %v1858 = vpop.f32.mrb[0].mxu0
        %v1859 = vadd.f32 0.0, %v1858
        %v1860 = vpop.f32.mrb[0].mxu0
        %1861 = vmatprep.mubr.f32.mxu0 0.0
        %1862 = vmatmul.mubr.f32.gmra.mrb[0].mxu0 %v1641
        %v1863 = vpop.f32.mrb[0].mxu0
        %v1864 = vadd.f32 0.0, %v1863
        %v1865 = vpop.f32.mrb[0].mxu0
        %1866 = vmatprep.mubr.f32.mxu0 0.0
        %1867 = vmatmul.mubr.f32.gmra.mrb[0].mxu0 %v1644
        %v1868 = vpop.f32.mrb[0].mxu0
        %v1869 = vadd.f32 0.0, %v1868
        %v1870 = vpop.f32.mrb[0].mxu0
        %1871 = vmatprep.mubr.f32.mxu0 0.0
        %1872 = vmatmul.mubr.f32.gmra.mrb[0].mxu0 %v1647
        %v1873 = vpop.f32.mrb[0].mxu0
        %v1874 = vadd.f32 0.0, %v1873
        %v1875 = vpop.f32.mrb[0].mxu0
        %1876 = vdwg.mxu0
        %v1877 = vadd.f32 %v1487, %v1719
        %v1878 = vadd.f32 %v1488, %v1724
        %v1879 = vadd.f32 %v1489, %v1729
        %v1880 = vadd.f32 %v1490, %v1734
        %v1881 = vadd.f32 %v1491, %v1739
        %v1882 = vadd.f32 %v1492, %v1744
        %v1883 = vadd.f32 %v1493, %v1749
        %v1884 = vadd.f32 %v1494, %v1754
        %v1885 = vadd.f32 %v1495, %v1759
        %v1886 = vadd.f32 %v1496, %v1764
        %v1887 = vadd.f32 %v1497, %v1769
        %v1888 = vadd.f32 %v1498, %v1774
        %v1889 = vadd.f32 %v1499, %v1779
        %v1890 = vadd.f32 %v1500, %v1784
        %v1891 = vadd.f32 %v1501, %v1789
        %v1892 = vadd.f32 %v1502, %v1794
        %v1893 = vadd.f32 %v1503, %v1799
        %v1894 = vadd.f32 %v1504, %v1804
        %v1895 = vadd.f32 %v1505, %v1809
        %v1896 = vadd.f32 %v1506, %v1814
        %v1897 = vadd.f32 %v1507, %v1819
        %v1898 = vadd.f32 %v1508, %v1824
        %v1899 = vadd.f32 %v1509, %v1829
        %v1900 = vadd.f32 %v1510, %v1834
        %v1901 = vadd.f32 %v1511, %v1839
        %v1902 = vadd.f32 %v1512, %v1844
        %v1903 = vadd.f32 %v1513, %v1849
        %v1904 = vadd.f32 %v1514, %v1854
        %v1905 = vadd.f32 %v1515, %v1859
        %v1906 = vadd.f32 %v1516, %v1864
        %v1907 = vadd.f32 %v1517, %v1869
        %v1908 = vadd.f32 %v1518, %v1874
        %v1909 = vld [vmem:[%s380 + $0x1] sm:$0xff]
        %v1910 = vld [vmem:[%s380 + $0x9] sm:$0xff]
        %v1911 = vld [vmem:[%s380 + $0x19] sm:$0xff]
        %v1912 = vld [vmem:[%s380 + $0x21] sm:$0xff]
        %v1913 = vld [vmem:[%s380 + $0x31] sm:$0xff]
        %v1914 = vld [vmem:[%s380 + $0x39] sm:$0xff]
        %v1915 = vld [vmem:[%s380 + $0x49] sm:$0xff]
        %v1916 = vld [vmem:[%s380 + $0x51] sm:$0xff]
        %v1917 = vld [vmem:[%s380 + $0x61] sm:$0xff]
        %v1918 = vld [vmem:[%s380 + $0x69] sm:$0xff]
        %v1919 = vld [vmem:[%s380 + $0x79] sm:$0xff]
        %v1920 = vld [vmem:[%s380 + $0x81] sm:$0xff]
        %v1921 = vld [vmem:[%s380 + $0x91] sm:$0xff]
        %v1922 = vld [vmem:[%s380 + $0x99] sm:$0xff]
        %v1923 = vld [vmem:[%s380 + $0xa9] sm:$0xff]
        %v1924 = vld [vmem:[%s380 + $0xb1] sm:$0xff]
        %v1925 = vld [vmem:[%s380 + $0xc1] sm:$0xff]
        %v1926 = vld [vmem:[%s380 + $0xc9] sm:$0xff]
        %v1927 = vld [vmem:[%s380 + $0xd9] sm:$0xff]
        %v1928 = vld [vmem:[%s380 + $0xe1] sm:$0xff]
        %v1929 = vld [vmem:[%s380 + $0xf1] sm:$0xff]
        %v1930 = vld [vmem:[%s380 + $0xf9] sm:$0xff]
        %v1931 = vld [vmem:[%s380 + $0x109] sm:$0xff]
        %v1932 = vld [vmem:[%s380 + $0x111] sm:$0xff]
        %v1933 = vld [vmem:[%s380 + $0x121] sm:$0xff]
        %v1934 = vld [vmem:[%s380 + $0x129] sm:$0xff]
        %v1935 = vld [vmem:[%s380 + $0x139] sm:$0xff]
        %v1936 = vld [vmem:[%s380 + $0x141] sm:$0xff]
        %v1937 = vld [vmem:[%s380 + $0x151] sm:$0xff]
        %v1938 = vld [vmem:[%s380 + $0x159] sm:$0xff]
        %v1939 = vld [vmem:[%s380 + $0x169] sm:$0xff]
        %v1940 = vld [vmem:[%s380 + $0x171] sm:$0xff]
        %s1941 = scalar_lea.vmem %s1, 16
        %v1942 = vld [vmem:[%s1941] sm:$0x7]
        %v1944 = vsel %vm292, %v1909, 0
        %v1947 = vsel %vm292, %v1910, 0
        %v1950 = vsel %vm292, %v1911, 0
        %v1953 = vsel %vm292, %v1912, 0
        %v1956 = vsel %vm292, %v1913, 0
        %v1959 = vsel %vm292, %v1914, 0
        %v1962 = vsel %vm292, %v1915, 0
        %v1965 = vsel %vm292, %v1916, 0
        %v1968 = vsel %vm292, %v1917, 0
        %v1971 = vsel %vm292, %v1918, 0
        %v1974 = vsel %vm292, %v1919, 0
        %v1977 = vsel %vm292, %v1920, 0
        %v1980 = vsel %vm292, %v1921, 0
        %v1983 = vsel %vm292, %v1922, 0
        %v1986 = vsel %vm292, %v1923, 0
        %v1989 = vsel %vm292, %v1924, 0
        %v1992 = vsel %vm292, %v1925, 0
        %v1995 = vsel %vm292, %v1926, 0
        %v1998 = vsel %vm292, %v1927, 0
        %v2001 = vsel %vm292, %v1928, 0
        %v2004 = vsel %vm292, %v1929, 0
        %v2007 = vsel %vm292, %v1930, 0
        %v2010 = vsel %vm292, %v1931, 0
        %v2013 = vsel %vm292, %v1932, 0
        %v2016 = vsel %vm292, %v1933, 0
        %v2019 = vsel %vm292, %v1934, 0
        %v2022 = vsel %vm292, %v1935, 0
        %v2025 = vsel %vm292, %v1936, 0
        %v2028 = vsel %vm292, %v1937, 0
        %v2031 = vsel %vm292, %v1938, 0
        %v2034 = vsel %vm292, %v1939, 0
        %v2037 = vsel %vm292, %v1940, 0
        %v2040 = vsel %vm576, %v1942, 0
        %2042 = vmatprep.subr.mxu0 0.0
        %2043 = vmatpush1.msra.mxu0 %v2040
        %2044 = vmatprep.subr.mxu0 0.0
        %2045 = vmatpush1.msra.mxu0 0.0
        %2046 = vmatprep.subr.mxu0 0.0
        %2047 = vmatpush1.msra.mxu0 0.0
        %2048 = vmatprep.subr.mxu0 0.0
        %2049 = vmatpush1.msra.mxu0 0.0
        %2050 = vmatprep.subr.mxu0 0.0
        %2051 = vmatpush1.msra.mxu0 0.0
        %2052 = vmatprep.subr.mxu0 0.0
        %2053 = vmatpush1.msra.mxu0 0.0
        %2054 = vmatprep.subr.mxu0 0.0
        %2055 = vmatpush1.msra.mxu0 0.0
        %2056 = vmatprep.subr.mxu0 0.0
        %2057 = vmatpush1.msra.mxu0 0.0
        %2058 = vmatprep.subr.mxu0 0.0
        %2059 = vmatpush1.msra.mxu0 0.0
        %2060 = vmatprep.subr.mxu0 0.0
        %2061 = vmatpush1.msra.mxu0 0.0
        %2062 = vmatprep.subr.mxu0 0.0
        %2063 = vmatpush1.msra.mxu0 0.0
        %2064 = vmatprep.subr.mxu0 0.0
        %2065 = vmatpush1.msra.mxu0 0.0
        %2066 = vmatprep.subr.mxu0 0.0
        %2067 = vmatpush1.msra.mxu0 0.0
        %2068 = vmatprep.subr.mxu0 0.0
        %2069 = vmatpush1.msra.mxu0 0.0
        %2070 = vmatprep.subr.mxu0 0.0
        %2071 = vmatpush1.msra.mxu0 0.0
        %2072 = vmatprep.subr.mxu0 0.0
        %2073 = vmatpush1.msra.mxu0 0.0
        %2074 = vmatprep.subr.mxu0 0.0
        %2075 = vmatpush1.msra.mxu0 0.0
        %2076 = vmatprep.subr.mxu0 0.0
        %2077 = vmatpush1.msra.mxu0 0.0
        %2078 = vmatprep.subr.mxu0 0.0
        %2079 = vmatpush1.msra.mxu0 0.0
        %2080 = vmatprep.subr.mxu0 0.0
        %2081 = vmatpush1.msra.mxu0 0.0
        %2082 = vmatprep.subr.mxu0 0.0
        %2083 = vmatpush1.msra.mxu0 0.0
        %2084 = vmatprep.subr.mxu0 0.0
        %2085 = vmatpush1.msra.mxu0 0.0
        %2086 = vmatprep.subr.mxu0 0.0
        %2087 = vmatpush1.msra.mxu0 0.0
        %2088 = vmatprep.subr.mxu0 0.0
        %2089 = vmatpush1.msra.mxu0 0.0
        %2090 = vmatprep.subr.mxu0 0.0
        %2091 = vmatpush1.msra.mxu0 0.0
        %2092 = vmatprep.subr.mxu0 0.0
        %2093 = vmatpush1.msra.mxu0 0.0
        %2094 = vmatprep.subr.mxu0 0.0
        %2095 = vmatpush1.msra.mxu0 0.0
        %2096 = vmatprep.subr.mxu0 0.0
        %2097 = vmatpush1.msra.mxu0 0.0
        %2098 = vmatprep.subr.mxu0 0.0
        %2099 = vmatpush1.msra.mxu0 0.0
        %2100 = vmatprep.subr.mxu0 0.0
        %2101 = vmatpush1.msra.mxu0 0.0
        %2102 = vmatprep.subr.mxu0 0.0
        %2103 = vmatpush1.msra.mxu0 0.0
        %2104 = vmatprep.subr.mxu0 0.0
        %2105 = vmatpush1.msra.mxu0 0.0
        %2106 = vmatprep.mubr.f32.mxu0 0.0
        %2107 = vmatmul.mubr.f32.gmra.mrb[0].mxu0 %v1944
        %v2108 = vpop.f32.mrb[0].mxu0
        %v2109 = vadd.f32 0.0, %v2108
        %v2110 = vpop.f32.mrb[0].mxu0
        %2111 = vmatprep.mubr.f32.mxu0 0.0
        %2112 = vmatmul.mubr.f32.gmra.mrb[0].mxu0 %v1947
        %v2113 = vpop.f32.mrb[0].mxu0
        %v2114 = vadd.f32 0.0, %v2113
        %v2115 = vpop.f32.mrb[0].mxu0
        %2116 = vmatprep.mubr.f32.mxu0 0.0
        %2117 = vmatmul.mubr.f32.gmra.mrb[0].mxu0 %v1950
        %v2118 = vpop.f32.mrb[0].mxu0
        %v2119 = vadd.f32 0.0, %v2118
        %v2120 = vpop.f32.mrb[0].mxu0
        %2121 = vmatprep.mubr.f32.mxu0 0.0
        %2122 = vmatmul.mubr.f32.gmra.mrb[0].mxu0 %v1953
        %v2123 = vpop.f32.mrb[0].mxu0
        %v2124 = vadd.f32 0.0, %v2123
        %v2125 = vpop.f32.mrb[0].mxu0
        %2126 = vmatprep.mubr.f32.mxu0 0.0
        %2127 = vmatmul.mubr.f32.gmra.mrb[0].mxu0 %v1956
        %v2128 = vpop.f32.mrb[0].mxu0
        %v2129 = vadd.f32 0.0, %v2128
        %v2130 = vpop.f32.mrb[0].mxu0
        %2131 = vmatprep.mubr.f32.mxu0 0.0
        %2132 = vmatmul.mubr.f32.gmra.mrb[0].mxu0 %v1959
        %v2133 = vpop.f32.mrb[0].mxu0
        %v2134 = vadd.f32 0.0, %v2133
        %v2135 = vpop.f32.mrb[0].mxu0
        %2136 = vmatprep.mubr.f32.mxu0 0.0
        %2137 = vmatmul.mubr.f32.gmra.mrb[0].mxu0 %v1962
        %v2138 = vpop.f32.mrb[0].mxu0
        %v2139 = vadd.f32 0.0, %v2138
        %v2140 = vpop.f32.mrb[0].mxu0
        %2141 = vmatprep.mubr.f32.mxu0 0.0
        %2142 = vmatmul.mubr.f32.gmra.mrb[0].mxu0 %v1965
        %v2143 = vpop.f32.mrb[0].mxu0
        %v2144 = vadd.f32 0.0, %v2143
        %v2145 = vpop.f32.mrb[0].mxu0
        %2146 = vmatprep.mubr.f32.mxu0 0.0
        %2147 = vmatmul.mubr.f32.gmra.mrb[0].mxu0 %v1968
        %v2148 = vpop.f32.mrb[0].mxu0
        %v2149 = vadd.f32 0.0, %v2148
        %v2150 = vpop.f32.mrb[0].mxu0
        %2151 = vmatprep.mubr.f32.mxu0 0.0
        %2152 = vmatmul.mubr.f32.gmra.mrb[0].mxu0 %v1971
        %v2153 = vpop.f32.mrb[0].mxu0
        %v2154 = vadd.f32 0.0, %v2153
        %v2155 = vpop.f32.mrb[0].mxu0
        %2156 = vmatprep.mubr.f32.mxu0 0.0
        %2157 = vmatmul.mubr.f32.gmra.mrb[0].mxu0 %v1974
        %v2158 = vpop.f32.mrb[0].mxu0
        %v2159 = vadd.f32 0.0, %v2158
        %v2160 = vpop.f32.mrb[0].mxu0
        %2161 = vmatprep.mubr.f32.mxu0 0.0
        %2162 = vmatmul.mubr.f32.gmra.mrb[0].mxu0 %v1977
        %v2163 = vpop.f32.mrb[0].mxu0
        %v2164 = vadd.f32 0.0, %v2163
        %v2165 = vpop.f32.mrb[0].mxu0
        %2166 = vmatprep.mubr.f32.mxu0 0.0
        %2167 = vmatmul.mubr.f32.gmra.mrb[0].mxu0 %v1980
        %v2168 = vpop.f32.mrb[0].mxu0
        %v2169 = vadd.f32 0.0, %v2168
        %v2170 = vpop.f32.mrb[0].mxu0
        %2171 = vmatprep.mubr.f32.mxu0 0.0
        %2172 = vmatmul.mubr.f32.gmra.mrb[0].mxu0 %v1983
        %v2173 = vpop.f32.mrb[0].mxu0
        %v2174 = vadd.f32 0.0, %v2173
        %v2175 = vpop.f32.mrb[0].mxu0
        %2176 = vmatprep.mubr.f32.mxu0 0.0
        %2177 = vmatmul.mubr.f32.gmra.mrb[0].mxu0 %v1986
        %v2178 = vpop.f32.mrb[0].mxu0
        %v2179 = vadd.f32 0.0, %v2178
        %v2180 = vpop.f32.mrb[0].mxu0
        %2181 = vmatprep.mubr.f32.mxu0 0.0
        %2182 = vmatmul.mubr.f32.gmra.mrb[0].mxu0 %v1989
        %v2183 = vpop.f32.mrb[0].mxu0
        %v2184 = vadd.f32 0.0, %v2183
        %v2185 = vpop.f32.mrb[0].mxu0
        %2186 = vmatprep.mubr.f32.mxu0 0.0
        %2187 = vmatmul.mubr.f32.gmra.mrb[0].mxu0 %v1992
        %v2188 = vpop.f32.mrb[0].mxu0
        %v2189 = vadd.f32 0.0, %v2188
        %v2190 = vpop.f32.mrb[0].mxu0
        %2191 = vmatprep.mubr.f32.mxu0 0.0
        %2192 = vmatmul.mubr.f32.gmra.mrb[0].mxu0 %v1995
        %v2193 = vpop.f32.mrb[0].mxu0
        %v2194 = vadd.f32 0.0, %v2193
        %v2195 = vpop.f32.mrb[0].mxu0
        %2196 = vmatprep.mubr.f32.mxu0 0.0
        %2197 = vmatmul.mubr.f32.gmra.mrb[0].mxu0 %v1998
        %v2198 = vpop.f32.mrb[0].mxu0
        %v2199 = vadd.f32 0.0, %v2198
        %v2200 = vpop.f32.mrb[0].mxu0
        %2201 = vmatprep.mubr.f32.mxu0 0.0
        %2202 = vmatmul.mubr.f32.gmra.mrb[0].mxu0 %v2001
        %v2203 = vpop.f32.mrb[0].mxu0
        %v2204 = vadd.f32 0.0, %v2203
        %v2205 = vpop.f32.mrb[0].mxu0
        %2206 = vmatprep.mubr.f32.mxu0 0.0
        %2207 = vmatmul.mubr.f32.gmra.mrb[0].mxu0 %v2004
        %v2208 = vpop.f32.mrb[0].mxu0
        %v2209 = vadd.f32 0.0, %v2208
        %v2210 = vpop.f32.mrb[0].mxu0
        %2211 = vmatprep.mubr.f32.mxu0 0.0
        %2212 = vmatmul.mubr.f32.gmra.mrb[0].mxu0 %v2007
        %v2213 = vpop.f32.mrb[0].mxu0
        %v2214 = vadd.f32 0.0, %v2213
        %v2215 = vpop.f32.mrb[0].mxu0
        %2216 = vmatprep.mubr.f32.mxu0 0.0
        %2217 = vmatmul.mubr.f32.gmra.mrb[0].mxu0 %v2010
        %v2218 = vpop.f32.mrb[0].mxu0
        %v2219 = vadd.f32 0.0, %v2218
        %v2220 = vpop.f32.mrb[0].mxu0
        %2221 = vmatprep.mubr.f32.mxu0 0.0
        %2222 = vmatmul.mubr.f32.gmra.mrb[0].mxu0 %v2013
        %v2223 = vpop.f32.mrb[0].mxu0
        %v2224 = vadd.f32 0.0, %v2223
        %v2225 = vpop.f32.mrb[0].mxu0
        %2226 = vmatprep.mubr.f32.mxu0 0.0
        %2227 = vmatmul.mubr.f32.gmra.mrb[0].mxu0 %v2016
        %v2228 = vpop.f32.mrb[0].mxu0
        %v2229 = vadd.f32 0.0, %v2228
        %v2230 = vpop.f32.mrb[0].mxu0
        %2231 = vmatprep.mubr.f32.mxu0 0.0
        %2232 = vmatmul.mubr.f32.gmra.mrb[0].mxu0 %v2019
        %v2233 = vpop.f32.mrb[0].mxu0
        %v2234 = vadd.f32 0.0, %v2233
        %v2235 = vpop.f32.mrb[0].mxu0
        %2236 = vmatprep.mubr.f32.mxu0 0.0
        %2237 = vmatmul.mubr.f32.gmra.mrb[0].mxu0 %v2022
        %v2238 = vpop.f32.mrb[0].mxu0
        %v2239 = vadd.f32 0.0, %v2238
        %v2240 = vpop.f32.mrb[0].mxu0
        %2241 = vmatprep.mubr.f32.mxu0 0.0
        %2242 = vmatmul.mubr.f32.gmra.mrb[0].mxu0 %v2025
        %v2243 = vpop.f32.mrb[0].mxu0
        %v2244 = vadd.f32 0.0, %v2243
        %v2245 = vpop.f32.mrb[0].mxu0
        %2246 = vmatprep.mubr.f32.mxu0 0.0
        %2247 = vmatmul.mubr.f32.gmra.mrb[0].mxu0 %v2028
        %v2248 = vpop.f32.mrb[0].mxu0
        %v2249 = vadd.f32 0.0, %v2248
        %v2250 = vpop.f32.mrb[0].mxu0
        %2251 = vmatprep.mubr.f32.mxu0 0.0
        %2252 = vmatmul.mubr.f32.gmra.mrb[0].mxu0 %v2031
        %v2253 = vpop.f32.mrb[0].mxu0
        %v2254 = vadd.f32 0.0, %v2253
        %v2255 = vpop.f32.mrb[0].mxu0
        %2256 = vmatprep.mubr.f32.mxu0 0.0
        %2257 = vmatmul.mubr.f32.gmra.mrb[0].mxu0 %v2034
        %v2258 = vpop.f32.mrb[0].mxu0
        %v2259 = vadd.f32 0.0, %v2258
        %v2260 = vpop.f32.mrb[0].mxu0
        %2261 = vmatprep.mubr.f32.mxu0 0.0
        %2262 = vmatmul.mubr.f32.gmra.mrb[0].mxu0 %v2037
        %v2263 = vpop.f32.mrb[0].mxu0
        %v2264 = vadd.f32 0.0, %v2263
        %v2265 = vpop.f32.mrb[0].mxu0
        %2266 = vdwg.mxu0
        %v2267 = vadd.f32 %v1877, %v2109
        %v2268 = vadd.f32 %v1878, %v2114
        %v2269 = vadd.f32 %v1879, %v2119
        %v2270 = vadd.f32 %v1880, %v2124
        %v2271 = vadd.f32 %v1881, %v2129
        %v2272 = vadd.f32 %v1882, %v2134
        %v2273 = vadd.f32 %v1883, %v2139
        %v2274 = vadd.f32 %v1884, %v2144
        %v2275 = vadd.f32 %v1885, %v2149
        %v2276 = vadd.f32 %v1886, %v2154
        %v2277 = vadd.f32 %v1887, %v2159
        %v2278 = vadd.f32 %v1888, %v2164
        %v2279 = vadd.f32 %v1889, %v2169
        %v2280 = vadd.f32 %v1890, %v2174
        %v2281 = vadd.f32 %v1891, %v2179
        %v2282 = vadd.f32 %v1892, %v2184
        %v2283 = vadd.f32 %v1893, %v2189
        %v2284 = vadd.f32 %v1894, %v2194
        %v2285 = vadd.f32 %v1895, %v2199
        %v2286 = vadd.f32 %v1896, %v2204
        %v2287 = vadd.f32 %v1897, %v2209
        %v2288 = vadd.f32 %v1898, %v2214
        %v2289 = vadd.f32 %v1899, %v2219
        %v2290 = vadd.f32 %v1900, %v2224
        %v2291 = vadd.f32 %v1901, %v2229
        %v2292 = vadd.f32 %v1902, %v2234
        %v2293 = vadd.f32 %v1903, %v2239
        %v2294 = vadd.f32 %v1904, %v2244
        %v2295 = vadd.f32 %v1905, %v2249
        %v2296 = vadd.f32 %v1906, %v2254
        %v2297 = vadd.f32 %v1907, %v2259
        %v2298 = vadd.f32 %v1908, %v2264
        %v2299 = vld [vmem:[%s380 + $0x2] sm:$0xff]
        %v2300 = vld [vmem:[%s380 + $0xa] sm:$0xff]
        %v2301 = vld [vmem:[%s380 + $0x1a] sm:$0xff]
        %v2302 = vld [vmem:[%s380 + $0x22] sm:$0xff]
        %v2303 = vld [vmem:[%s380 + $0x32] sm:$0xff]
        %v2304 = vld [vmem:[%s380 + $0x3a] sm:$0xff]
        %v2305 = vld [vmem:[%s380 + $0x4a] sm:$0xff]
        %v2306 = vld [vmem:[%s380 + $0x52] sm:$0xff]
        %v2307 = vld [vmem:[%s380 + $0x62] sm:$0xff]
        %v2308 = vld [vmem:[%s380 + $0x6a] sm:$0xff]
        %v2309 = vld [vmem:[%s380 + $0x7a] sm:$0xff]
        %v2310 = vld [vmem:[%s380 + $0x82] sm:$0xff]
        %v2311 = vld [vmem:[%s380 + $0x92] sm:$0xff]
        %v2312 = vld [vmem:[%s380 + $0x9a] sm:$0xff]
        %v2313 = vld [vmem:[%s380 + $0xaa] sm:$0xff]
        %v2314 = vld [vmem:[%s380 + $0xb2] sm:$0xff]
        %v2315 = vld [vmem:[%s380 + $0xc2] sm:$0xff]
        %v2316 = vld [vmem:[%s380 + $0xca] sm:$0xff]
        %v2317 = vld [vmem:[%s380 + $0xda] sm:$0xff]
        %v2318 = vld [vmem:[%s380 + $0xe2] sm:$0xff]
        %v2319 = vld [vmem:[%s380 + $0xf2] sm:$0xff]
        %v2320 = vld [vmem:[%s380 + $0xfa] sm:$0xff]
        %v2321 = vld [vmem:[%s380 + $0x10a] sm:$0xff]
        %v2322 = vld [vmem:[%s380 + $0x112] sm:$0xff]
        %v2323 = vld [vmem:[%s380 + $0x122] sm:$0xff]
        %v2324 = vld [vmem:[%s380 + $0x12a] sm:$0xff]
        %v2325 = vld [vmem:[%s380 + $0x13a] sm:$0xff]
        %v2326 = vld [vmem:[%s380 + $0x142] sm:$0xff]
        %v2327 = vld [vmem:[%s380 + $0x152] sm:$0xff]
        %v2328 = vld [vmem:[%s380 + $0x15a] sm:$0xff]
        %v2329 = vld [vmem:[%s380 + $0x16a] sm:$0xff]
        %v2330 = vld [vmem:[%s380 + $0x172] sm:$0xff]
        %s2331 = scalar_lea.vmem %s1, 20
        %v2332 = vld [vmem:[%s2331] sm:$0x7]
        %v2334 = vsel %vm292, %v2299, 0
        %v2337 = vsel %vm292, %v2300, 0
        %v2340 = vsel %vm292, %v2301, 0
        %v2343 = vsel %vm292, %v2302, 0
        %v2346 = vsel %vm292, %v2303, 0
        %v2349 = vsel %vm292, %v2304, 0
        %v2352 = vsel %vm292, %v2305, 0
        %v2355 = vsel %vm292, %v2306, 0
        %v2358 = vsel %vm292, %v2307, 0
        %v2361 = vsel %vm292, %v2308, 0
        %v2364 = vsel %vm292, %v2309, 0
        %v2367 = vsel %vm292, %v2310, 0
        %v2370 = vsel %vm292, %v2311, 0
        %v2373 = vsel %vm292, %v2312, 0
        %v2376 = vsel %vm292, %v2313, 0
        %v2379 = vsel %vm292, %v2314, 0
        %v2382 = vsel %vm292, %v2315, 0
        %v2385 = vsel %vm292, %v2316, 0
        %v2388 = vsel %vm292, %v2317, 0
        %v2391 = vsel %vm292, %v2318, 0
        %v2394 = vsel %vm292, %v2319, 0
        %v2397 = vsel %vm292, %v2320, 0
        %v2400 = vsel %vm292, %v2321, 0
        %v2403 = vsel %vm292, %v2322, 0
        %v2406 = vsel %vm292, %v2323, 0
        %v2409 = vsel %vm292, %v2324, 0
        %v2412 = vsel %vm292, %v2325, 0
        %v2415 = vsel %vm292, %v2326, 0
        %v2418 = vsel %vm292, %v2327, 0
        %v2421 = vsel %vm292, %v2328, 0
        %v2424 = vsel %vm292, %v2329, 0
        %v2427 = vsel %vm292, %v2330, 0
        %v2430 = vsel %vm576, %v2332, 0
        %2432 = vmatprep.subr.mxu0 0.0
        %2433 = vmatpush1.msra.mxu0 %v2430
        %2434 = vmatprep.subr.mxu0 0.0
        %2435 = vmatpush1.msra.mxu0 0.0
        %2436 = vmatprep.subr.mxu0 0.0
        %2437 = vmatpush1.msra.mxu0 0.0
        %2438 = vmatprep.subr.mxu0 0.0
        %2439 = vmatpush1.msra.mxu0 0.0
        %2440 = vmatprep.subr.mxu0 0.0
        %2441 = vmatpush1.msra.mxu0 0.0
        %2442 = vmatprep.subr.mxu0 0.0
        %2443 = vmatpush1.msra.mxu0 0.0
        %2444 = vmatprep.subr.mxu0 0.0
        %2445 = vmatpush1.msra.mxu0 0.0
        %2446 = vmatprep.subr.mxu0 0.0
        %2447 = vmatpush1.msra.mxu0 0.0
        %2448 = vmatprep.subr.mxu0 0.0
        %2449 = vmatpush1.msra.mxu0 0.0
        %2450 = vmatprep.subr.mxu0 0.0
        %2451 = vmatpush1.msra.mxu0 0.0
        %2452 = vmatprep.subr.mxu0 0.0
        %2453 = vmatpush1.msra.mxu0 0.0
        %2454 = vmatprep.subr.mxu0 0.0
        %2455 = vmatpush1.msra.mxu0 0.0
        %2456 = vmatprep.subr.mxu0 0.0
        %2457 = vmatpush1.msra.mxu0 0.0
        %2458 = vmatprep.subr.mxu0 0.0
        %2459 = vmatpush1.msra.mxu0 0.0
        %2460 = vmatprep.subr.mxu0 0.0
        %2461 = vmatpush1.msra.mxu0 0.0
        %2462 = vmatprep.subr.mxu0 0.0
        %2463 = vmatpush1.msra.mxu0 0.0
        %2464 = vmatprep.subr.mxu0 0.0
        %2465 = vmatpush1.msra.mxu0 0.0
        %2466 = vmatprep.subr.mxu0 0.0
        %2467 = vmatpush1.msra.mxu0 0.0
        %2468 = vmatprep.subr.mxu0 0.0
        %2469 = vmatpush1.msra.mxu0 0.0
        %2470 = vmatprep.subr.mxu0 0.0
        %2471 = vmatpush1.msra.mxu0 0.0
        %2472 = vmatprep.subr.mxu0 0.0
        %2473 = vmatpush1.msra.mxu0 0.0
        %2474 = vmatprep.subr.mxu0 0.0
        %2475 = vmatpush1.msra.mxu0 0.0
        %2476 = vmatprep.subr.mxu0 0.0
        %2477 = vmatpush1.msra.mxu0 0.0
        %2478 = vmatprep.subr.mxu0 0.0
        %2479 = vmatpush1.msra.mxu0 0.0
        %2480 = vmatprep.subr.mxu0 0.0
        %2481 = vmatpush1.msra.mxu0 0.0
        %2482 = vmatprep.subr.mxu0 0.0
        %2483 = vmatpush1.msra.mxu0 0.0
        %2484 = vmatprep.subr.mxu0 0.0
        %2485 = vmatpush1.msra.mxu0 0.0
        %2486 = vmatprep.subr.mxu0 0.0
        %2487 = vmatpush1.msra.mxu0 0.0
        %2488 = vmatprep.subr.mxu0 0.0
        %2489 = vmatpush1.msra.mxu0 0.0
        %2490 = vmatprep.subr.mxu0 0.0
        %2491 = vmatpush1.msra.mxu0 0.0
        %2492 = vmatprep.subr.mxu0 0.0
        %2493 = vmatpush1.msra.mxu0 0.0
        %2494 = vmatprep.subr.mxu0 0.0
        %2495 = vmatpush1.msra.mxu0 0.0
        %2496 = vmatprep.mubr.f32.mxu0 0.0
        %2497 = vmatmul.mubr.f32.gmra.mrb[0].mxu0 %v2334
        %v2498 = vpop.f32.mrb[0].mxu0
        %v2499 = vadd.f32 0.0, %v2498
        %v2500 = vpop.f32.mrb[0].mxu0
        %2501 = vmatprep.mubr.f32.mxu0 0.0
        %2502 = vmatmul.mubr.f32.gmra.mrb[0].mxu0 %v2337
        %v2503 = vpop.f32.mrb[0].mxu0
        %v2504 = vadd.f32 0.0, %v2503
        %v2505 = vpop.f32.mrb[0].mxu0
        %2506 = vmatprep.mubr.f32.mxu0 0.0
        %2507 = vmatmul.mubr.f32.gmra.mrb[0].mxu0 %v2340
        %v2508 = vpop.f32.mrb[0].mxu0
        %v2509 = vadd.f32 0.0, %v2508
        %v2510 = vpop.f32.mrb[0].mxu0
        %2511 = vmatprep.mubr.f32.mxu0 0.0
        %2512 = vmatmul.mubr.f32.gmra.mrb[0].mxu0 %v2343
        %v2513 = vpop.f32.mrb[0].mxu0
        %v2514 = vadd.f32 0.0, %v2513
        %v2515 = vpop.f32.mrb[0].mxu0
        %2516 = vmatprep.mubr.f32.mxu0 0.0
        %2517 = vmatmul.mubr.f32.gmra.mrb[0].mxu0 %v2346
        %v2518 = vpop.f32.mrb[0].mxu0
        %v2519 = vadd.f32 0.0, %v2518
        %v2520 = vpop.f32.mrb[0].mxu0
        %2521 = vmatprep.mubr.f32.mxu0 0.0
        %2522 = vmatmul.mubr.f32.gmra.mrb[0].mxu0 %v2349
        %v2523 = vpop.f32.mrb[0].mxu0
        %v2524 = vadd.f32 0.0, %v2523
        %v2525 = vpop.f32.mrb[0].mxu0
        %2526 = vmatprep.mubr.f32.mxu0 0.0
        %2527 = vmatmul.mubr.f32.gmra.mrb[0].mxu0 %v2352
        %v2528 = vpop.f32.mrb[0].mxu0
        %v2529 = vadd.f32 0.0, %v2528
        %v2530 = vpop.f32.mrb[0].mxu0
        %2531 = vmatprep.mubr.f32.mxu0 0.0
        %2532 = vmatmul.mubr.f32.gmra.mrb[0].mxu0 %v2355
        %v2533 = vpop.f32.mrb[0].mxu0
        %v2534 = vadd.f32 0.0, %v2533
        %v2535 = vpop.f32.mrb[0].mxu0
        %2536 = vmatprep.mubr.f32.mxu0 0.0
        %2537 = vmatmul.mubr.f32.gmra.mrb[0].mxu0 %v2358
        %v2538 = vpop.f32.mrb[0].mxu0
        %v2539 = vadd.f32 0.0, %v2538
        %v2540 = vpop.f32.mrb[0].mxu0
        %2541 = vmatprep.mubr.f32.mxu0 0.0
        %2542 = vmatmul.mubr.f32.gmra.mrb[0].mxu0 %v2361
        %v2543 = vpop.f32.mrb[0].mxu0
        %v2544 = vadd.f32 0.0, %v2543
        %v2545 = vpop.f32.mrb[0].mxu0
        %2546 = vmatprep.mubr.f32.mxu0 0.0
        %2547 = vmatmul.mubr.f32.gmra.mrb[0].mxu0 %v2364
        %v2548 = vpop.f32.mrb[0].mxu0
        %v2549 = vadd.f32 0.0, %v2548
        %v2550 = vpop.f32.mrb[0].mxu0
        %2551 = vmatprep.mubr.f32.mxu0 0.0
        %2552 = vmatmul.mubr.f32.gmra.mrb[0].mxu0 %v2367
        %v2553 = vpop.f32.mrb[0].mxu0
        %v2554 = vadd.f32 0.0, %v2553
        %v2555 = vpop.f32.mrb[0].mxu0
        %2556 = vmatprep.mubr.f32.mxu0 0.0
        %2557 = vmatmul.mubr.f32.gmra.mrb[0].mxu0 %v2370
        %v2558 = vpop.f32.mrb[0].mxu0
        %v2559 = vadd.f32 0.0, %v2558
        %v2560 = vpop.f32.mrb[0].mxu0
        %2561 = vmatprep.mubr.f32.mxu0 0.0
        %2562 = vmatmul.mubr.f32.gmra.mrb[0].mxu0 %v2373
        %v2563 = vpop.f32.mrb[0].mxu0
        %v2564 = vadd.f32 0.0, %v2563
        %v2565 = vpop.f32.mrb[0].mxu0
        %2566 = vmatprep.mubr.f32.mxu0 0.0
        %2567 = vmatmul.mubr.f32.gmra.mrb[0].mxu0 %v2376
        %v2568 = vpop.f32.mrb[0].mxu0
        %v2569 = vadd.f32 0.0, %v2568
        %v2570 = vpop.f32.mrb[0].mxu0
        %2571 = vmatprep.mubr.f32.mxu0 0.0
        %2572 = vmatmul.mubr.f32.gmra.mrb[0].mxu0 %v2379
        %v2573 = vpop.f32.mrb[0].mxu0
        %v2574 = vadd.f32 0.0, %v2573
        %v2575 = vpop.f32.mrb[0].mxu0
        %2576 = vmatprep.mubr.f32.mxu0 0.0
        %2577 = vmatmul.mubr.f32.gmra.mrb[0].mxu0 %v2382
        %v2578 = vpop.f32.mrb[0].mxu0
        %v2579 = vadd.f32 0.0, %v2578
        %v2580 = vpop.f32.mrb[0].mxu0
        %2581 = vmatprep.mubr.f32.mxu0 0.0
        %2582 = vmatmul.mubr.f32.gmra.mrb[0].mxu0 %v2385
        %v2583 = vpop.f32.mrb[0].mxu0
        %v2584 = vadd.f32 0.0, %v2583
        %v2585 = vpop.f32.mrb[0].mxu0
        %2586 = vmatprep.mubr.f32.mxu0 0.0
        %2587 = vmatmul.mubr.f32.gmra.mrb[0].mxu0 %v2388
        %v2588 = vpop.f32.mrb[0].mxu0
        %v2589 = vadd.f32 0.0, %v2588
        %v2590 = vpop.f32.mrb[0].mxu0
        %2591 = vmatprep.mubr.f32.mxu0 0.0
        %2592 = vmatmul.mubr.f32.gmra.mrb[0].mxu0 %v2391
        %v2593 = vpop.f32.mrb[0].mxu0
        %v2594 = vadd.f32 0.0, %v2593
        %v2595 = vpop.f32.mrb[0].mxu0
        %2596 = vmatprep.mubr.f32.mxu0 0.0
        %2597 = vmatmul.mubr.f32.gmra.mrb[0].mxu0 %v2394
        %v2598 = vpop.f32.mrb[0].mxu0
        %v2599 = vadd.f32 0.0, %v2598
        %v2600 = vpop.f32.mrb[0].mxu0
        %2601 = vmatprep.mubr.f32.mxu0 0.0
        %2602 = vmatmul.mubr.f32.gmra.mrb[0].mxu0 %v2397
        %v2603 = vpop.f32.mrb[0].mxu0
        %v2604 = vadd.f32 0.0, %v2603
        %v2605 = vpop.f32.mrb[0].mxu0
        %2606 = vmatprep.mubr.f32.mxu0 0.0
        %2607 = vmatmul.mubr.f32.gmra.mrb[0].mxu0 %v2400
        %v2608 = vpop.f32.mrb[0].mxu0
        %v2609 = vadd.f32 0.0, %v2608
        %v2610 = vpop.f32.mrb[0].mxu0
        %2611 = vmatprep.mubr.f32.mxu0 0.0
        %2612 = vmatmul.mubr.f32.gmra.mrb[0].mxu0 %v2403
        %v2613 = vpop.f32.mrb[0].mxu0
        %v2614 = vadd.f32 0.0, %v2613
        %v2615 = vpop.f32.mrb[0].mxu0
        %2616 = vmatprep.mubr.f32.mxu0 0.0
        %2617 = vmatmul.mubr.f32.gmra.mrb[0].mxu0 %v2406
        %v2618 = vpop.f32.mrb[0].mxu0
        %v2619 = vadd.f32 0.0, %v2618
        %v2620 = vpop.f32.mrb[0].mxu0
        %2621 = vmatprep.mubr.f32.mxu0 0.0
        %2622 = vmatmul.mubr.f32.gmra.mrb[0].mxu0 %v2409
        %v2623 = vpop.f32.mrb[0].mxu0
        %v2624 = vadd.f32 0.0, %v2623
        %v2625 = vpop.f32.mrb[0].mxu0
        %2626 = vmatprep.mubr.f32.mxu0 0.0
        %2627 = vmatmul.mubr.f32.gmra.mrb[0].mxu0 %v2412
        %v2628 = vpop.f32.mrb[0].mxu0
        %v2629 = vadd.f32 0.0, %v2628
        %v2630 = vpop.f32.mrb[0].mxu0
        %2631 = vmatprep.mubr.f32.mxu0 0.0
        %2632 = vmatmul.mubr.f32.gmra.mrb[0].mxu0 %v2415
        %v2633 = vpop.f32.mrb[0].mxu0
        %v2634 = vadd.f32 0.0, %v2633
        %v2635 = vpop.f32.mrb[0].mxu0
        %2636 = vmatprep.mubr.f32.mxu0 0.0
        %2637 = vmatmul.mubr.f32.gmra.mrb[0].mxu0 %v2418
        %v2638 = vpop.f32.mrb[0].mxu0
        %v2639 = vadd.f32 0.0, %v2638
        %v2640 = vpop.f32.mrb[0].mxu0
        %2641 = vmatprep.mubr.f32.mxu0 0.0
        %2642 = vmatmul.mubr.f32.gmra.mrb[0].mxu0 %v2421
        %v2643 = vpop.f32.mrb[0].mxu0
        %v2644 = vadd.f32 0.0, %v2643
        %v2645 = vpop.f32.mrb[0].mxu0
        %2646 = vmatprep.mubr.f32.mxu0 0.0
        %2647 = vmatmul.mubr.f32.gmra.mrb[0].mxu0 %v2424
        %v2648 = vpop.f32.mrb[0].mxu0
        %v2649 = vadd.f32 0.0, %v2648
        %v2650 = vpop.f32.mrb[0].mxu0
        %2651 = vmatprep.mubr.f32.mxu0 0.0
        %2652 = vmatmul.mubr.f32.gmra.mrb[0].mxu0 %v2427
        %v2653 = vpop.f32.mrb[0].mxu0
        %v2654 = vadd.f32 0.0, %v2653
        %v2655 = vpop.f32.mrb[0].mxu0
        %2656 = vdwg.mxu0
        %v2657 = vadd.f32 %v2267, %v2499
        %v2658 = vadd.f32 %v2268, %v2504
        %v2659 = vadd.f32 %v2269, %v2509
        %v2660 = vadd.f32 %v2270, %v2514
        %v2661 = vadd.f32 %v2271, %v2519
        %v2662 = vadd.f32 %v2272, %v2524
        %v2663 = vadd.f32 %v2273, %v2529
        %v2664 = vadd.f32 %v2274, %v2534
        %v2665 = vadd.f32 %v2275, %v2539
        %v2666 = vadd.f32 %v2276, %v2544
        %v2667 = vadd.f32 %v2277, %v2549
        %v2668 = vadd.f32 %v2278, %v2554
        %v2669 = vadd.f32 %v2279, %v2559
        %v2670 = vadd.f32 %v2280, %v2564
        %v2671 = vadd.f32 %v2281, %v2569
        %v2672 = vadd.f32 %v2282, %v2574
        %v2673 = vadd.f32 %v2283, %v2579
        %v2674 = vadd.f32 %v2284, %v2584
        %v2675 = vadd.f32 %v2285, %v2589
        %v2676 = vadd.f32 %v2286, %v2594
        %v2677 = vadd.f32 %v2287, %v2599
        %v2678 = vadd.f32 %v2288, %v2604
        %v2679 = vadd.f32 %v2289, %v2609
        %v2680 = vadd.f32 %v2290, %v2614
        %v2681 = vadd.f32 %v2291, %v2619
        %v2682 = vadd.f32 %v2292, %v2624
        %v2683 = vadd.f32 %v2293, %v2629
        %v2684 = vadd.f32 %v2294, %v2634
        %v2685 = vadd.f32 %v2295, %v2639
        %v2686 = vadd.f32 %v2296, %v2644
        %v2687 = vadd.f32 %v2297, %v2649
        %v2688 = vadd.f32 %v2298, %v2654
        %s2689 = scalar_lea.vmem [#allocation2], 48
        %v2690 = vld [vmem:[%s2689] sm:$0xff]
        %v2691 = vld [vmem:[%s2689 + $0x8] sm:$0xff]
        %v2692 = vld [vmem:[%s2689 + $0x18] sm:$0xff]
        %v2693 = vld [vmem:[%s2689 + $0x20] sm:$0xff]
        %v2694 = vld [vmem:[%s2689 + $0x30] sm:$0xff]
        %v2695 = vld [vmem:[%s2689 + $0x38] sm:$0xff]
        %v2696 = vld [vmem:[%s2689 + $0x48] sm:$0xff]
        %v2697 = vld [vmem:[%s2689 + $0x50] sm:$0xff]
        %v2698 = vld [vmem:[%s2689 + $0x60] sm:$0xff]
        %v2699 = vld [vmem:[%s2689 + $0x68] sm:$0xff]
        %v2700 = vld [vmem:[%s2689 + $0x78] sm:$0xff]
        %v2701 = vld [vmem:[%s2689 + $0x80] sm:$0xff]
        %v2702 = vld [vmem:[%s2689 + $0x90] sm:$0xff]
        %v2703 = vld [vmem:[%s2689 + $0x98] sm:$0xff]
        %v2704 = vld [vmem:[%s2689 + $0xa8] sm:$0xff]
        %v2705 = vld [vmem:[%s2689 + $0xb0] sm:$0xff]
        %v2706 = vld [vmem:[%s2689 + $0xc0] sm:$0xff]
        %v2707 = vld [vmem:[%s2689 + $0xc8] sm:$0xff]
        %v2708 = vld [vmem:[%s2689 + $0xd8] sm:$0xff]
        %v2709 = vld [vmem:[%s2689 + $0xe0] sm:$0xff]
        %v2710 = vld [vmem:[%s2689 + $0xf0] sm:$0xff]
        %v2711 = vld [vmem:[%s2689 + $0xf8] sm:$0xff]
        %v2712 = vld [vmem:[%s2689 + $0x108] sm:$0xff]
        %v2713 = vld [vmem:[%s2689 + $0x110] sm:$0xff]
        %v2714 = vld [vmem:[%s2689 + $0x120] sm:$0xff]
        %v2715 = vld [vmem:[%s2689 + $0x128] sm:$0xff]
        %v2716 = vld [vmem:[%s2689 + $0x138] sm:$0xff]
        %v2717 = vld [vmem:[%s2689 + $0x140] sm:$0xff]
        %v2718 = vld [vmem:[%s2689 + $0x150] sm:$0xff]
        %v2719 = vld [vmem:[%s2689 + $0x158] sm:$0xff]
        %v2720 = vld [vmem:[%s2689 + $0x168] sm:$0xff]
        %v2721 = vld [vmem:[%s2689 + $0x170] sm:$0xff]
        %s2722 = scalar_lea.vmem %s1, 24
        %v2723 = vld [vmem:[%s2722] sm:$0x7]
        %v2725 = vsel %vm292, %v2690, 0
        %v2728 = vsel %vm292, %v2691, 0
        %v2731 = vsel %vm292, %v2692, 0
        %v2734 = vsel %vm292, %v2693, 0
        %v2737 = vsel %vm292, %v2694, 0
        %v2740 = vsel %vm292, %v2695, 0
        %v2743 = vsel %vm292, %v2696, 0
        %v2746 = vsel %vm292, %v2697, 0
        %v2749 = vsel %vm292, %v2698, 0
        %v2752 = vsel %vm292, %v2699, 0
        %v2755 = vsel %vm292, %v2700, 0
        %v2758 = vsel %vm292, %v2701, 0
        %v2761 = vsel %vm292, %v2702, 0
        %v2764 = vsel %vm292, %v2703, 0
        %v2767 = vsel %vm292, %v2704, 0
        %v2770 = vsel %vm292, %v2705, 0
        %v2773 = vsel %vm292, %v2706, 0
        %v2776 = vsel %vm292, %v2707, 0
        %v2779 = vsel %vm292, %v2708, 0
        %v2782 = vsel %vm292, %v2709, 0
        %v2785 = vsel %vm292, %v2710, 0
        %v2788 = vsel %vm292, %v2711, 0
        %v2791 = vsel %vm292, %v2712, 0
        %v2794 = vsel %vm292, %v2713, 0
        %v2797 = vsel %vm292, %v2714, 0
        %v2800 = vsel %vm292, %v2715, 0
        %v2803 = vsel %vm292, %v2716, 0
        %v2806 = vsel %vm292, %v2717, 0
        %v2809 = vsel %vm292, %v2718, 0
        %v2812 = vsel %vm292, %v2719, 0
        %v2815 = vsel %vm292, %v2720, 0
        %v2818 = vsel %vm292, %v2721, 0
        %v2821 = vsel %vm576, %v2723, 0
        %2823 = vmatprep.subr.mxu0 0.0
        %2824 = vmatpush1.msra.mxu0 %v2821
        %2825 = vmatprep.subr.mxu0 0.0
        %2826 = vmatpush1.msra.mxu0 0.0
        %2827 = vmatprep.subr.mxu0 0.0
        %2828 = vmatpush1.msra.mxu0 0.0
        %2829 = vmatprep.subr.mxu0 0.0
        %2830 = vmatpush1.msra.mxu0 0.0
        %2831 = vmatprep.subr.mxu0 0.0
        %2832 = vmatpush1.msra.mxu0 0.0
        %2833 = vmatprep.subr.mxu0 0.0
        %2834 = vmatpush1.msra.mxu0 0.0
        %2835 = vmatprep.subr.mxu0 0.0
        %2836 = vmatpush1.msra.mxu0 0.0
        %2837 = vmatprep.subr.mxu0 0.0
        %2838 = vmatpush1.msra.mxu0 0.0
        %2839 = vmatprep.subr.mxu0 0.0
        %2840 = vmatpush1.msra.mxu0 0.0
        %2841 = vmatprep.subr.mxu0 0.0
        %2842 = vmatpush1.msra.mxu0 0.0
        %2843 = vmatprep.subr.mxu0 0.0
        %2844 = vmatpush1.msra.mxu0 0.0
        %2845 = vmatprep.subr.mxu0 0.0
        %2846 = vmatpush1.msra.mxu0 0.0
        %2847 = vmatprep.subr.mxu0 0.0
        %2848 = vmatpush1.msra.mxu0 0.0
        %2849 = vmatprep.subr.mxu0 0.0
        %2850 = vmatpush1.msra.mxu0 0.0
        %2851 = vmatprep.subr.mxu0 0.0
        %2852 = vmatpush1.msra.mxu0 0.0
        %2853 = vmatprep.subr.mxu0 0.0
        %2854 = vmatpush1.msra.mxu0 0.0
        %2855 = vmatprep.subr.mxu0 0.0
        %2856 = vmatpush1.msra.mxu0 0.0
        %2857 = vmatprep.subr.mxu0 0.0
        %2858 = vmatpush1.msra.mxu0 0.0
        %2859 = vmatprep.subr.mxu0 0.0
        %2860 = vmatpush1.msra.mxu0 0.0
        %2861 = vmatprep.subr.mxu0 0.0
        %2862 = vmatpush1.msra.mxu0 0.0
        %2863 = vmatprep.subr.mxu0 0.0
        %2864 = vmatpush1.msra.mxu0 0.0
        %2865 = vmatprep.subr.mxu0 0.0
        %2866 = vmatpush1.msra.mxu0 0.0
        %2867 = vmatprep.subr.mxu0 0.0
        %2868 = vmatpush1.msra.mxu0 0.0
        %2869 = vmatprep.subr.mxu0 0.0
        %2870 = vmatpush1.msra.mxu0 0.0
        %2871 = vmatprep.subr.mxu0 0.0
        %2872 = vmatpush1.msra.mxu0 0.0
        %2873 = vmatprep.subr.mxu0 0.0
        %2874 = vmatpush1.msra.mxu0 0.0
        %2875 = vmatprep.subr.mxu0 0.0
        %2876 = vmatpush1.msra.mxu0 0.0
        %2877 = vmatprep.subr.mxu0 0.0
        %2878 = vmatpush1.msra.mxu0 0.0
        %2879 = vmatprep.subr.mxu0 0.0
        %2880 = vmatpush1.msra.mxu0 0.0
        %2881 = vmatprep.subr.mxu0 0.0
        %2882 = vmatpush1.msra.mxu0 0.0
        %2883 = vmatprep.subr.mxu0 0.0
        %2884 = vmatpush1.msra.mxu0 0.0
        %2885 = vmatprep.subr.mxu0 0.0
        %2886 = vmatpush1.msra.mxu0 0.0
        %2887 = vmatprep.mubr.f32.mxu0 0.0
        %2888 = vmatmul.mubr.f32.gmra.mrb[0].mxu0 %v2725
        %v2889 = vpop.f32.mrb[0].mxu0
        %v2890 = vadd.f32 0.0, %v2889
        %v2891 = vpop.f32.mrb[0].mxu0
        %2892 = vmatprep.mubr.f32.mxu0 0.0
        %2893 = vmatmul.mubr.f32.gmra.mrb[0].mxu0 %v2728
        %v2894 = vpop.f32.mrb[0].mxu0
        %v2895 = vadd.f32 0.0, %v2894
        %v2896 = vpop.f32.mrb[0].mxu0
        %2897 = vmatprep.mubr.f32.mxu0 0.0
        %2898 = vmatmul.mubr.f32.gmra.mrb[0].mxu0 %v2731
        %v2899 = vpop.f32.mrb[0].mxu0
        %v2900 = vadd.f32 0.0, %v2899
        %v2901 = vpop.f32.mrb[0].mxu0
        %2902 = vmatprep.mubr.f32.mxu0 0.0
        %2903 = vmatmul.mubr.f32.gmra.mrb[0].mxu0 %v2734
        %v2904 = vpop.f32.mrb[0].mxu0
        %v2905 = vadd.f32 0.0, %v2904
        %v2906 = vpop.f32.mrb[0].mxu0
        %2907 = vmatprep.mubr.f32.mxu0 0.0
        %2908 = vmatmul.mubr.f32.gmra.mrb[0].mxu0 %v2737
        %v2909 = vpop.f32.mrb[0].mxu0
        %v2910 = vadd.f32 0.0, %v2909
        %v2911 = vpop.f32.mrb[0].mxu0
        %2912 = vmatprep.mubr.f32.mxu0 0.0
        %2913 = vmatmul.mubr.f32.gmra.mrb[0].mxu0 %v2740
        %v2914 = vpop.f32.mrb[0].mxu0
        %v2915 = vadd.f32 0.0, %v2914
        %v2916 = vpop.f32.mrb[0].mxu0
        %2917 = vmatprep.mubr.f32.mxu0 0.0
        %2918 = vmatmul.mubr.f32.gmra.mrb[0].mxu0 %v2743
        %v2919 = vpop.f32.mrb[0].mxu0
        %v2920 = vadd.f32 0.0, %v2919
        %v2921 = vpop.f32.mrb[0].mxu0
        %2922 = vmatprep.mubr.f32.mxu0 0.0
        %2923 = vmatmul.mubr.f32.gmra.mrb[0].mxu0 %v2746
        %v2924 = vpop.f32.mrb[0].mxu0
        %v2925 = vadd.f32 0.0, %v2924
        %v2926 = vpop.f32.mrb[0].mxu0
        %2927 = vmatprep.mubr.f32.mxu0 0.0
        %2928 = vmatmul.mubr.f32.gmra.mrb[0].mxu0 %v2749
        %v2929 = vpop.f32.mrb[0].mxu0
        %v2930 = vadd.f32 0.0, %v2929
        %v2931 = vpop.f32.mrb[0].mxu0
        %2932 = vmatprep.mubr.f32.mxu0 0.0
        %2933 = vmatmul.mubr.f32.gmra.mrb[0].mxu0 %v2752
        %v2934 = vpop.f32.mrb[0].mxu0
        %v2935 = vadd.f32 0.0, %v2934
        %v2936 = vpop.f32.mrb[0].mxu0
        %2937 = vmatprep.mubr.f32.mxu0 0.0
        %2938 = vmatmul.mubr.f32.gmra.mrb[0].mxu0 %v2755
        %v2939 = vpop.f32.mrb[0].mxu0
        %v2940 = vadd.f32 0.0, %v2939
        %v2941 = vpop.f32.mrb[0].mxu0
        %2942 = vmatprep.mubr.f32.mxu0 0.0
        %2943 = vmatmul.mubr.f32.gmra.mrb[0].mxu0 %v2758
        %v2944 = vpop.f32.mrb[0].mxu0
        %v2945 = vadd.f32 0.0, %v2944
        %v2946 = vpop.f32.mrb[0].mxu0
        %2947 = vmatprep.mubr.f32.mxu0 0.0
        %2948 = vmatmul.mubr.f32.gmra.mrb[0].mxu0 %v2761
        %v2949 = vpop.f32.mrb[0].mxu0
        %v2950 = vadd.f32 0.0, %v2949
        %v2951 = vpop.f32.mrb[0].mxu0
        %2952 = vmatprep.mubr.f32.mxu0 0.0
        %2953 = vmatmul.mubr.f32.gmra.mrb[0].mxu0 %v2764
        %v2954 = vpop.f32.mrb[0].mxu0
        %v2955 = vadd.f32 0.0, %v2954
        %v2956 = vpop.f32.mrb[0].mxu0
        %2957 = vmatprep.mubr.f32.mxu0 0.0
        %2958 = vmatmul.mubr.f32.gmra.mrb[0].mxu0 %v2767
        %v2959 = vpop.f32.mrb[0].mxu0
        %v2960 = vadd.f32 0.0, %v2959
        %v2961 = vpop.f32.mrb[0].mxu0
        %2962 = vmatprep.mubr.f32.mxu0 0.0
        %2963 = vmatmul.mubr.f32.gmra.mrb[0].mxu0 %v2770
        %v2964 = vpop.f32.mrb[0].mxu0
        %v2965 = vadd.f32 0.0, %v2964
        %v2966 = vpop.f32.mrb[0].mxu0
        %2967 = vmatprep.mubr.f32.mxu0 0.0
        %2968 = vmatmul.mubr.f32.gmra.mrb[0].mxu0 %v2773
        %v2969 = vpop.f32.mrb[0].mxu0
        %v2970 = vadd.f32 0.0, %v2969
        %v2971 = vpop.f32.mrb[0].mxu0
        %2972 = vmatprep.mubr.f32.mxu0 0.0
        %2973 = vmatmul.mubr.f32.gmra.mrb[0].mxu0 %v2776
        %v2974 = vpop.f32.mrb[0].mxu0
        %v2975 = vadd.f32 0.0, %v2974
        %v2976 = vpop.f32.mrb[0].mxu0
        %2977 = vmatprep.mubr.f32.mxu0 0.0
        %2978 = vmatmul.mubr.f32.gmra.mrb[0].mxu0 %v2779
        %v2979 = vpop.f32.mrb[0].mxu0
        %v2980 = vadd.f32 0.0, %v2979
        %v2981 = vpop.f32.mrb[0].mxu0
        %2982 = vmatprep.mubr.f32.mxu0 0.0
        %2983 = vmatmul.mubr.f32.gmra.mrb[0].mxu0 %v2782
        %v2984 = vpop.f32.mrb[0].mxu0
        %v2985 = vadd.f32 0.0, %v2984
        %v2986 = vpop.f32.mrb[0].mxu0
        %2987 = vmatprep.mubr.f32.mxu0 0.0
        %2988 = vmatmul.mubr.f32.gmra.mrb[0].mxu0 %v2785
        %v2989 = vpop.f32.mrb[0].mxu0
        %v2990 = vadd.f32 0.0, %v2989
        %v2991 = vpop.f32.mrb[0].mxu0
        %2992 = vmatprep.mubr.f32.mxu0 0.0
        %2993 = vmatmul.mubr.f32.gmra.mrb[0].mxu0 %v2788
        %v2994 = vpop.f32.mrb[0].mxu0
        %v2995 = vadd.f32 0.0, %v2994
        %v2996 = vpop.f32.mrb[0].mxu0
        %2997 = vmatprep.mubr.f32.mxu0 0.0
        %2998 = vmatmul.mubr.f32.gmra.mrb[0].mxu0 %v2791
        %v2999 = vpop.f32.mrb[0].mxu0
        %v3000 = vadd.f32 0.0, %v2999
        %v3001 = vpop.f32.mrb[0].mxu0
        %3002 = vmatprep.mubr.f32.mxu0 0.0
        %3003 = vmatmul.mubr.f32.gmra.mrb[0].mxu0 %v2794
        %v3004 = vpop.f32.mrb[0].mxu0
        %v3005 = vadd.f32 0.0, %v3004
        %v3006 = vpop.f32.mrb[0].mxu0
        %3007 = vmatprep.mubr.f32.mxu0 0.0
        %3008 = vmatmul.mubr.f32.gmra.mrb[0].mxu0 %v2797
        %v3009 = vpop.f32.mrb[0].mxu0
        %v3010 = vadd.f32 0.0, %v3009
        %v3011 = vpop.f32.mrb[0].mxu0
        %3012 = vmatprep.mubr.f32.mxu0 0.0
        %3013 = vmatmul.mubr.f32.gmra.mrb[0].mxu0 %v2800
        %v3014 = vpop.f32.mrb[0].mxu0
        %v3015 = vadd.f32 0.0, %v3014
        %v3016 = vpop.f32.mrb[0].mxu0
        %3017 = vmatprep.mubr.f32.mxu0 0.0
        %3018 = vmatmul.mubr.f32.gmra.mrb[0].mxu0 %v2803
        %v3019 = vpop.f32.mrb[0].mxu0
        %v3020 = vadd.f32 0.0, %v3019
        %v3021 = vpop.f32.mrb[0].mxu0
        %3022 = vmatprep.mubr.f32.mxu0 0.0
        %3023 = vmatmul.mubr.f32.gmra.mrb[0].mxu0 %v2806
        %v3024 = vpop.f32.mrb[0].mxu0
        %v3025 = vadd.f32 0.0, %v3024
        %v3026 = vpop.f32.mrb[0].mxu0
        %3027 = vmatprep.mubr.f32.mxu0 0.0
        %3028 = vmatmul.mubr.f32.gmra.mrb[0].mxu0 %v2809
        %v3029 = vpop.f32.mrb[0].mxu0
        %v3030 = vadd.f32 0.0, %v3029
        %v3031 = vpop.f32.mrb[0].mxu0
        %3032 = vmatprep.mubr.f32.mxu0 0.0
        %3033 = vmatmul.mubr.f32.gmra.mrb[0].mxu0 %v2812
        %v3034 = vpop.f32.mrb[0].mxu0
        %v3035 = vadd.f32 0.0, %v3034
        %v3036 = vpop.f32.mrb[0].mxu0
        %3037 = vmatprep.mubr.f32.mxu0 0.0
        %3038 = vmatmul.mubr.f32.gmra.mrb[0].mxu0 %v2815
        %v3039 = vpop.f32.mrb[0].mxu0
        %v3040 = vadd.f32 0.0, %v3039
        %v3041 = vpop.f32.mrb[0].mxu0
        %3042 = vmatprep.mubr.f32.mxu0 0.0
        %3043 = vmatmul.mubr.f32.gmra.mrb[0].mxu0 %v2818
        %v3044 = vpop.f32.mrb[0].mxu0
        %v3045 = vadd.f32 0.0, %v3044
        %v3046 = vpop.f32.mrb[0].mxu0
        %3047 = vdwg.mxu0
        %v3048 = vadd.f32 %v2657, %v2890
        %v3049 = vadd.f32 %v2658, %v2895
        %v3050 = vadd.f32 %v2659, %v2900
        %v3051 = vadd.f32 %v2660, %v2905
        %v3052 = vadd.f32 %v2661, %v2910
        %v3053 = vadd.f32 %v2662, %v2915
        %v3054 = vadd.f32 %v2663, %v2920
        %v3055 = vadd.f32 %v2664, %v2925
        %v3056 = vadd.f32 %v2665, %v2930
        %v3057 = vadd.f32 %v2666, %v2935
        %v3058 = vadd.f32 %v2667, %v2940
        %v3059 = vadd.f32 %v2668, %v2945
        %v3060 = vadd.f32 %v2669, %v2950
        %v3061 = vadd.f32 %v2670, %v2955
        %v3062 = vadd.f32 %v2671, %v2960
        %v3063 = vadd.f32 %v2672, %v2965
        %v3064 = vadd.f32 %v2673, %v2970
        %v3065 = vadd.f32 %v2674, %v2975
        %v3066 = vadd.f32 %v2675, %v2980
        %v3067 = vadd.f32 %v2676, %v2985
        %v3068 = vadd.f32 %v2677, %v2990
        %v3069 = vadd.f32 %v2678, %v2995
        %v3070 = vadd.f32 %v2679, %v3000
        %v3071 = vadd.f32 %v2680, %v3005
        %v3072 = vadd.f32 %v2681, %v3010
        %v3073 = vadd.f32 %v2682, %v3015
        %v3074 = vadd.f32 %v2683, %v3020
        %v3075 = vadd.f32 %v2684, %v3025
        %v3076 = vadd.f32 %v2685, %v3030
        %v3077 = vadd.f32 %v2686, %v3035
        %v3078 = vadd.f32 %v2687, %v3040
        %v3079 = vadd.f32 %v2688, %v3045
        %v3080 = vld [vmem:[%s2689 + $0x1] sm:$0xff]
        %v3081 = vld [vmem:[%s2689 + $0x9] sm:$0xff]
        %v3082 = vld [vmem:[%s2689 + $0x19] sm:$0xff]
        %v3083 = vld [vmem:[%s2689 + $0x21] sm:$0xff]
        %v3084 = vld [vmem:[%s2689 + $0x31] sm:$0xff]
        %v3085 = vld [vmem:[%s2689 + $0x39] sm:$0xff]
        %v3086 = vld [vmem:[%s2689 + $0x49] sm:$0xff]
        %v3087 = vld [vmem:[%s2689 + $0x51] sm:$0xff]
        %v3088 = vld [vmem:[%s2689 + $0x61] sm:$0xff]
        %v3089 = vld [vmem:[%s2689 + $0x69] sm:$0xff]
        %v3090 = vld [vmem:[%s2689 + $0x79] sm:$0xff]
        %v3091 = vld [vmem:[%s2689 + $0x81] sm:$0xff]
        %v3092 = vld [vmem:[%s2689 + $0x91] sm:$0xff]
        %v3093 = vld [vmem:[%s2689 + $0x99] sm:$0xff]
        %v3094 = vld [vmem:[%s2689 + $0xa9] sm:$0xff]
        %v3095 = vld [vmem:[%s2689 + $0xb1] sm:$0xff]
        %v3096 = vld [vmem:[%s2689 + $0xc1] sm:$0xff]
        %v3097 = vld [vmem:[%s2689 + $0xc9] sm:$0xff]
        %v3098 = vld [vmem:[%s2689 + $0xd9] sm:$0xff]
        %v3099 = vld [vmem:[%s2689 + $0xe1] sm:$0xff]
        %v3100 = vld [vmem:[%s2689 + $0xf1] sm:$0xff]
        %v3101 = vld [vmem:[%s2689 + $0xf9] sm:$0xff]
        %v3102 = vld [vmem:[%s2689 + $0x109] sm:$0xff]
        %v3103 = vld [vmem:[%s2689 + $0x111] sm:$0xff]
        %v3104 = vld [vmem:[%s2689 + $0x121] sm:$0xff]
        %v3105 = vld [vmem:[%s2689 + $0x129] sm:$0xff]
        %v3106 = vld [vmem:[%s2689 + $0x139] sm:$0xff]
        %v3107 = vld [vmem:[%s2689 + $0x141] sm:$0xff]
        %v3108 = vld [vmem:[%s2689 + $0x151] sm:$0xff]
        %v3109 = vld [vmem:[%s2689 + $0x159] sm:$0xff]
        %v3110 = vld [vmem:[%s2689 + $0x169] sm:$0xff]
        %v3111 = vld [vmem:[%s2689 + $0x171] sm:$0xff]
        %s3112 = scalar_lea.vmem %s1, 28
        %v3113 = vld [vmem:[%s3112] sm:$0x7]
        %v3115 = vsel %vm292, %v3080, 0
        %v3118 = vsel %vm292, %v3081, 0
        %v3121 = vsel %vm292, %v3082, 0
        %v3124 = vsel %vm292, %v3083, 0
        %v3127 = vsel %vm292, %v3084, 0
        %v3130 = vsel %vm292, %v3085, 0
        %v3133 = vsel %vm292, %v3086, 0
        %v3136 = vsel %vm292, %v3087, 0
        %v3139 = vsel %vm292, %v3088, 0
        %v3142 = vsel %vm292, %v3089, 0
        %v3145 = vsel %vm292, %v3090, 0
        %v3148 = vsel %vm292, %v3091, 0
        %v3151 = vsel %vm292, %v3092, 0
        %v3154 = vsel %vm292, %v3093, 0
        %v3157 = vsel %vm292, %v3094, 0
        %v3160 = vsel %vm292, %v3095, 0
        %v3163 = vsel %vm292, %v3096, 0
        %v3166 = vsel %vm292, %v3097, 0
        %v3169 = vsel %vm292, %v3098, 0
        %v3172 = vsel %vm292, %v3099, 0
        %v3175 = vsel %vm292, %v3100, 0
        %v3178 = vsel %vm292, %v3101, 0
        %v3181 = vsel %vm292, %v3102, 0
        %v3184 = vsel %vm292, %v3103, 0
        %v3187 = vsel %vm292, %v3104, 0
        %v3190 = vsel %vm292, %v3105, 0
        %v3193 = vsel %vm292, %v3106, 0
        %v3196 = vsel %vm292, %v3107, 0
        %v3199 = vsel %vm292, %v3108, 0
        %v3202 = vsel %vm292, %v3109, 0
        %v3205 = vsel %vm292, %v3110, 0
        %v3208 = vsel %vm292, %v3111, 0
        %v3211 = vsel %vm576, %v3113, 0
        %3213 = vmatprep.subr.mxu0 0.0
        %3214 = vmatpush1.msra.mxu0 %v3211
        %3215 = vmatprep.subr.mxu0 0.0
        %3216 = vmatpush1.msra.mxu0 0.0
        %3217 = vmatprep.subr.mxu0 0.0
        %3218 = vmatpush1.msra.mxu0 0.0
        %3219 = vmatprep.subr.mxu0 0.0
        %3220 = vmatpush1.msra.mxu0 0.0
        %3221 = vmatprep.subr.mxu0 0.0
        %3222 = vmatpush1.msra.mxu0 0.0
        %3223 = vmatprep.subr.mxu0 0.0
        %3224 = vmatpush1.msra.mxu0 0.0
        %3225 = vmatprep.subr.mxu0 0.0
        %3226 = vmatpush1.msra.mxu0 0.0
        %3227 = vmatprep.subr.mxu0 0.0
        %3228 = vmatpush1.msra.mxu0 0.0
        %3229 = vmatprep.subr.mxu0 0.0
        %3230 = vmatpush1.msra.mxu0 0.0
        %3231 = vmatprep.subr.mxu0 0.0
        %3232 = vmatpush1.msra.mxu0 0.0
        %3233 = vmatprep.subr.mxu0 0.0
        %3234 = vmatpush1.msra.mxu0 0.0
        %3235 = vmatprep.subr.mxu0 0.0
        %3236 = vmatpush1.msra.mxu0 0.0
        %3237 = vmatprep.subr.mxu0 0.0
        %3238 = vmatpush1.msra.mxu0 0.0
        %3239 = vmatprep.subr.mxu0 0.0
        %3240 = vmatpush1.msra.mxu0 0.0
        %3241 = vmatprep.subr.mxu0 0.0
        %3242 = vmatpush1.msra.mxu0 0.0
        %3243 = vmatprep.subr.mxu0 0.0
        %3244 = vmatpush1.msra.mxu0 0.0
        %3245 = vmatprep.subr.mxu0 0.0
        %3246 = vmatpush1.msra.mxu0 0.0
        %3247 = vmatprep.subr.mxu0 0.0
        %3248 = vmatpush1.msra.mxu0 0.0
        %3249 = vmatprep.subr.mxu0 0.0
        %3250 = vmatpush1.msra.mxu0 0.0
        %3251 = vmatprep.subr.mxu0 0.0
        %3252 = vmatpush1.msra.mxu0 0.0
        %3253 = vmatprep.subr.mxu0 0.0
        %3254 = vmatpush1.msra.mxu0 0.0
        %3255 = vmatprep.subr.mxu0 0.0
        %3256 = vmatpush1.msra.mxu0 0.0
        %3257 = vmatprep.subr.mxu0 0.0
        %3258 = vmatpush1.msra.mxu0 0.0
        %3259 = vmatprep.subr.mxu0 0.0
        %3260 = vmatpush1.msra.mxu0 0.0
        %3261 = vmatprep.subr.mxu0 0.0
        %3262 = vmatpush1.msra.mxu0 0.0
        %3263 = vmatprep.subr.mxu0 0.0
        %3264 = vmatpush1.msra.mxu0 0.0
        %3265 = vmatprep.subr.mxu0 0.0
        %3266 = vmatpush1.msra.mxu0 0.0
        %3267 = vmatprep.subr.mxu0 0.0
        %3268 = vmatpush1.msra.mxu0 0.0
        %3269 = vmatprep.subr.mxu0 0.0
        %3270 = vmatpush1.msra.mxu0 0.0
        %3271 = vmatprep.subr.mxu0 0.0
        %3272 = vmatpush1.msra.mxu0 0.0
        %3273 = vmatprep.subr.mxu0 0.0
        %3274 = vmatpush1.msra.mxu0 0.0
        %3275 = vmatprep.subr.mxu0 0.0
        %3276 = vmatpush1.msra.mxu0 0.0
        %3277 = vmatprep.mubr.f32.mxu0 0.0
        %3278 = vmatmul.mubr.f32.gmra.mrb[0].mxu0 %v3115
        %v3279 = vpop.f32.mrb[0].mxu0
        %v3280 = vadd.f32 0.0, %v3279
        %v3281 = vpop.f32.mrb[0].mxu0
        %3282 = vmatprep.mubr.f32.mxu0 0.0
        %3283 = vmatmul.mubr.f32.gmra.mrb[0].mxu0 %v3118
        %v3284 = vpop.f32.mrb[0].mxu0
        %v3285 = vadd.f32 0.0, %v3284
        %v3286 = vpop.f32.mrb[0].mxu0
        %3287 = vmatprep.mubr.f32.mxu0 0.0
        %3288 = vmatmul.mubr.f32.gmra.mrb[0].mxu0 %v3121
        %v3289 = vpop.f32.mrb[0].mxu0
        %v3290 = vadd.f32 0.0, %v3289
        %v3291 = vpop.f32.mrb[0].mxu0
        %3292 = vmatprep.mubr.f32.mxu0 0.0
        %3293 = vmatmul.mubr.f32.gmra.mrb[0].mxu0 %v3124
        %v3294 = vpop.f32.mrb[0].mxu0
        %v3295 = vadd.f32 0.0, %v3294
        %v3296 = vpop.f32.mrb[0].mxu0
        %3297 = vmatprep.mubr.f32.mxu0 0.0
        %3298 = vmatmul.mubr.f32.gmra.mrb[0].mxu0 %v3127
        %v3299 = vpop.f32.mrb[0].mxu0
        %v3300 = vadd.f32 0.0, %v3299
        %v3301 = vpop.f32.mrb[0].mxu0
        %3302 = vmatprep.mubr.f32.mxu0 0.0
        %3303 = vmatmul.mubr.f32.gmra.mrb[0].mxu0 %v3130
        %v3304 = vpop.f32.mrb[0].mxu0
        %v3305 = vadd.f32 0.0, %v3304
        %v3306 = vpop.f32.mrb[0].mxu0
        %3307 = vmatprep.mubr.f32.mxu0 0.0
        %3308 = vmatmul.mubr.f32.gmra.mrb[0].mxu0 %v3133
        %v3309 = vpop.f32.mrb[0].mxu0
        %v3310 = vadd.f32 0.0, %v3309
        %v3311 = vpop.f32.mrb[0].mxu0
        %3312 = vmatprep.mubr.f32.mxu0 0.0
        %3313 = vmatmul.mubr.f32.gmra.mrb[0].mxu0 %v3136
        %v3314 = vpop.f32.mrb[0].mxu0
        %v3315 = vadd.f32 0.0, %v3314
        %v3316 = vpop.f32.mrb[0].mxu0
        %3317 = vmatprep.mubr.f32.mxu0 0.0
        %3318 = vmatmul.mubr.f32.gmra.mrb[0].mxu0 %v3139
        %v3319 = vpop.f32.mrb[0].mxu0
        %v3320 = vadd.f32 0.0, %v3319
        %v3321 = vpop.f32.mrb[0].mxu0
        %3322 = vmatprep.mubr.f32.mxu0 0.0
        %3323 = vmatmul.mubr.f32.gmra.mrb[0].mxu0 %v3142
        %v3324 = vpop.f32.mrb[0].mxu0
        %v3325 = vadd.f32 0.0, %v3324
        %v3326 = vpop.f32.mrb[0].mxu0
        %3327 = vmatprep.mubr.f32.mxu0 0.0
        %3328 = vmatmul.mubr.f32.gmra.mrb[0].mxu0 %v3145
        %v3329 = vpop.f32.mrb[0].mxu0
        %v3330 = vadd.f32 0.0, %v3329
        %v3331 = vpop.f32.mrb[0].mxu0
        %3332 = vmatprep.mubr.f32.mxu0 0.0
        %3333 = vmatmul.mubr.f32.gmra.mrb[0].mxu0 %v3148
        %v3334 = vpop.f32.mrb[0].mxu0
        %v3335 = vadd.f32 0.0, %v3334
        %v3336 = vpop.f32.mrb[0].mxu0
        %3337 = vmatprep.mubr.f32.mxu0 0.0
        %3338 = vmatmul.mubr.f32.gmra.mrb[0].mxu0 %v3151
        %v3339 = vpop.f32.mrb[0].mxu0
        %v3340 = vadd.f32 0.0, %v3339
        %v3341 = vpop.f32.mrb[0].mxu0
        %3342 = vmatprep.mubr.f32.mxu0 0.0
        %3343 = vmatmul.mubr.f32.gmra.mrb[0].mxu0 %v3154
        %v3344 = vpop.f32.mrb[0].mxu0
        %v3345 = vadd.f32 0.0, %v3344
        %v3346 = vpop.f32.mrb[0].mxu0
        %3347 = vmatprep.mubr.f32.mxu0 0.0
        %3348 = vmatmul.mubr.f32.gmra.mrb[0].mxu0 %v3157
        %v3349 = vpop.f32.mrb[0].mxu0
        %v3350 = vadd.f32 0.0, %v3349
        %v3351 = vpop.f32.mrb[0].mxu0
        %3352 = vmatprep.mubr.f32.mxu0 0.0
        %3353 = vmatmul.mubr.f32.gmra.mrb[0].mxu0 %v3160
        %v3354 = vpop.f32.mrb[0].mxu0
        %v3355 = vadd.f32 0.0, %v3354
        %v3356 = vpop.f32.mrb[0].mxu0
        %3357 = vmatprep.mubr.f32.mxu0 0.0
        %3358 = vmatmul.mubr.f32.gmra.mrb[0].mxu0 %v3163
        %v3359 = vpop.f32.mrb[0].mxu0
        %v3360 = vadd.f32 0.0, %v3359
        %v3361 = vpop.f32.mrb[0].mxu0
        %3362 = vmatprep.mubr.f32.mxu0 0.0
        %3363 = vmatmul.mubr.f32.gmra.mrb[0].mxu0 %v3166
        %v3364 = vpop.f32.mrb[0].mxu0
        %v3365 = vadd.f32 0.0, %v3364
        %v3366 = vpop.f32.mrb[0].mxu0
        %3367 = vmatprep.mubr.f32.mxu0 0.0
        %3368 = vmatmul.mubr.f32.gmra.mrb[0].mxu0 %v3169
        %v3369 = vpop.f32.mrb[0].mxu0
        %v3370 = vadd.f32 0.0, %v3369
        %v3371 = vpop.f32.mrb[0].mxu0
        %3372 = vmatprep.mubr.f32.mxu0 0.0
        %3373 = vmatmul.mubr.f32.gmra.mrb[0].mxu0 %v3172
        %v3374 = vpop.f32.mrb[0].mxu0
        %v3375 = vadd.f32 0.0, %v3374
        %v3376 = vpop.f32.mrb[0].mxu0
        %3377 = vmatprep.mubr.f32.mxu0 0.0
        %3378 = vmatmul.mubr.f32.gmra.mrb[0].mxu0 %v3175
        %v3379 = vpop.f32.mrb[0].mxu0
        %v3380 = vadd.f32 0.0, %v3379
        %v3381 = vpop.f32.mrb[0].mxu0
        %3382 = vmatprep.mubr.f32.mxu0 0.0
        %3383 = vmatmul.mubr.f32.gmra.mrb[0].mxu0 %v3178
        %v3384 = vpop.f32.mrb[0].mxu0
        %v3385 = vadd.f32 0.0, %v3384
        %v3386 = vpop.f32.mrb[0].mxu0
        %3387 = vmatprep.mubr.f32.mxu0 0.0
        %3388 = vmatmul.mubr.f32.gmra.mrb[0].mxu0 %v3181
        %v3389 = vpop.f32.mrb[0].mxu0
        %v3390 = vadd.f32 0.0, %v3389
        %v3391 = vpop.f32.mrb[0].mxu0
        %3392 = vmatprep.mubr.f32.mxu0 0.0
        %3393 = vmatmul.mubr.f32.gmra.mrb[0].mxu0 %v3184
        %v3394 = vpop.f32.mrb[0].mxu0
        %v3395 = vadd.f32 0.0, %v3394
        %v3396 = vpop.f32.mrb[0].mxu0
        %3397 = vmatprep.mubr.f32.mxu0 0.0
        %3398 = vmatmul.mubr.f32.gmra.mrb[0].mxu0 %v3187
        %v3399 = vpop.f32.mrb[0].mxu0
        %v3400 = vadd.f32 0.0, %v3399
        %v3401 = vpop.f32.mrb[0].mxu0
        %3402 = vmatprep.mubr.f32.mxu0 0.0
        %3403 = vmatmul.mubr.f32.gmra.mrb[0].mxu0 %v3190
        %v3404 = vpop.f32.mrb[0].mxu0
        %v3405 = vadd.f32 0.0, %v3404
        %v3406 = vpop.f32.mrb[0].mxu0
        %3407 = vmatprep.mubr.f32.mxu0 0.0
        %3408 = vmatmul.mubr.f32.gmra.mrb[0].mxu0 %v3193
        %v3409 = vpop.f32.mrb[0].mxu0
        %v3410 = vadd.f32 0.0, %v3409
        %v3411 = vpop.f32.mrb[0].mxu0
        %3412 = vmatprep.mubr.f32.mxu0 0.0
        %3413 = vmatmul.mubr.f32.gmra.mrb[0].mxu0 %v3196
        %v3414 = vpop.f32.mrb[0].mxu0
        %v3415 = vadd.f32 0.0, %v3414
        %v3416 = vpop.f32.mrb[0].mxu0
        %3417 = vmatprep.mubr.f32.mxu0 0.0
        %3418 = vmatmul.mubr.f32.gmra.mrb[0].mxu0 %v3199
        %v3419 = vpop.f32.mrb[0].mxu0
        %v3420 = vadd.f32 0.0, %v3419
        %v3421 = vpop.f32.mrb[0].mxu0
        %3422 = vmatprep.mubr.f32.mxu0 0.0
        %3423 = vmatmul.mubr.f32.gmra.mrb[0].mxu0 %v3202
        %v3424 = vpop.f32.mrb[0].mxu0
        %v3425 = vadd.f32 0.0, %v3424
        %v3426 = vpop.f32.mrb[0].mxu0
        %3427 = vmatprep.mubr.f32.mxu0 0.0
        %3428 = vmatmul.mubr.f32.gmra.mrb[0].mxu0 %v3205
        %v3429 = vpop.f32.mrb[0].mxu0
        %v3430 = vadd.f32 0.0, %v3429
        %v3431 = vpop.f32.mrb[0].mxu0
        %3432 = vmatprep.mubr.f32.mxu0 0.0
        %3433 = vmatmul.mubr.f32.gmra.mrb[0].mxu0 %v3208
        %v3434 = vpop.f32.mrb[0].mxu0
        %v3435 = vadd.f32 0.0, %v3434
        %v3436 = vpop.f32.mrb[0].mxu0
        %3437 = vdwg.mxu0
        %v3438 = vadd.f32 %v3048, %v3280
        %v3439 = vadd.f32 %v3049, %v3285
        %v3440 = vadd.f32 %v3050, %v3290
        %v3441 = vadd.f32 %v3051, %v3295
        %v3442 = vadd.f32 %v3052, %v3300
        %v3443 = vadd.f32 %v3053, %v3305
        %v3444 = vadd.f32 %v3054, %v3310
        %v3445 = vadd.f32 %v3055, %v3315
        %v3446 = vadd.f32 %v3056, %v3320
        %v3447 = vadd.f32 %v3057, %v3325
        %v3448 = vadd.f32 %v3058, %v3330
        %v3449 = vadd.f32 %v3059, %v3335
        %v3450 = vadd.f32 %v3060, %v3340
        %v3451 = vadd.f32 %v3061, %v3345
        %v3452 = vadd.f32 %v3062, %v3350
        %v3453 = vadd.f32 %v3063, %v3355
        %v3454 = vadd.f32 %v3064, %v3360
        %v3455 = vadd.f32 %v3065, %v3365
        %v3456 = vadd.f32 %v3066, %v3370
        %v3457 = vadd.f32 %v3067, %v3375
        %v3458 = vadd.f32 %v3068, %v3380
        %v3459 = vadd.f32 %v3069, %v3385
        %v3460 = vadd.f32 %v3070, %v3390
        %v3461 = vadd.f32 %v3071, %v3395
        %v3462 = vadd.f32 %v3072, %v3400
        %v3463 = vadd.f32 %v3073, %v3405
        %v3464 = vadd.f32 %v3074, %v3410
        %v3465 = vadd.f32 %v3075, %v3415
        %v3466 = vadd.f32 %v3076, %v3420
        %v3467 = vadd.f32 %v3077, %v3425
        %v3468 = vadd.f32 %v3078, %v3430
        %v3469 = vadd.f32 %v3079, %v3435
        %v3470 = vld [vmem:[%s2689 + $0x2] sm:$0xff]
        %v3471 = vld [vmem:[%s2689 + $0xa] sm:$0xff]
        %v3472 = vld [vmem:[%s2689 + $0x1a] sm:$0xff]
        %v3473 = vld [vmem:[%s2689 + $0x22] sm:$0xff]
        %v3474 = vld [vmem:[%s2689 + $0x32] sm:$0xff]
        %v3475 = vld [vmem:[%s2689 + $0x3a] sm:$0xff]
        %v3476 = vld [vmem:[%s2689 + $0x4a] sm:$0xff]
        %v3477 = vld [vmem:[%s2689 + $0x52] sm:$0xff]
        %v3478 = vld [vmem:[%s2689 + $0x62] sm:$0xff]
        %v3479 = vld [vmem:[%s2689 + $0x6a] sm:$0xff]
        %v3480 = vld [vmem:[%s2689 + $0x7a] sm:$0xff]
        %v3481 = vld [vmem:[%s2689 + $0x82] sm:$0xff]
        %v3482 = vld [vmem:[%s2689 + $0x92] sm:$0xff]
        %v3483 = vld [vmem:[%s2689 + $0x9a] sm:$0xff]
        %v3484 = vld [vmem:[%s2689 + $0xaa] sm:$0xff]
        %v3485 = vld [vmem:[%s2689 + $0xb2] sm:$0xff]
        %v3486 = vld [vmem:[%s2689 + $0xc2] sm:$0xff]
        %v3487 = vld [vmem:[%s2689 + $0xca] sm:$0xff]
        %v3488 = vld [vmem:[%s2689 + $0xda] sm:$0xff]
        %v3489 = vld [vmem:[%s2689 + $0xe2] sm:$0xff]
        %v3490 = vld [vmem:[%s2689 + $0xf2] sm:$0xff]
        %v3491 = vld [vmem:[%s2689 + $0xfa] sm:$0xff]
        %v3492 = vld [vmem:[%s2689 + $0x10a] sm:$0xff]
        %v3493 = vld [vmem:[%s2689 + $0x112] sm:$0xff]
        %v3494 = vld [vmem:[%s2689 + $0x122] sm:$0xff]
        %v3495 = vld [vmem:[%s2689 + $0x12a] sm:$0xff]
        %v3496 = vld [vmem:[%s2689 + $0x13a] sm:$0xff]
        %v3497 = vld [vmem:[%s2689 + $0x142] sm:$0xff]
        %v3498 = vld [vmem:[%s2689 + $0x152] sm:$0xff]
        %v3499 = vld [vmem:[%s2689 + $0x15a] sm:$0xff]
        %v3500 = vld [vmem:[%s2689 + $0x16a] sm:$0xff]
        %v3501 = vld [vmem:[%s2689 + $0x172] sm:$0xff]
        %s3502 = scalar_lea.vmem %s1, 32
        %v3503 = vld [vmem:[%s3502] sm:$0x7]
        %v3505 = vsel %vm292, %v3470, 0
        %v3508 = vsel %vm292, %v3471, 0
        %v3511 = vsel %vm292, %v3472, 0
        %v3514 = vsel %vm292, %v3473, 0
        %v3517 = vsel %vm292, %v3474, 0
        %v3520 = vsel %vm292, %v3475, 0
        %v3523 = vsel %vm292, %v3476, 0
        %v3526 = vsel %vm292, %v3477, 0
        %v3529 = vsel %vm292, %v3478, 0
        %v3532 = vsel %vm292, %v3479, 0
        %v3535 = vsel %vm292, %v3480, 0
        %v3538 = vsel %vm292, %v3481, 0
        %v3541 = vsel %vm292, %v3482, 0
        %v3544 = vsel %vm292, %v3483, 0
        %v3547 = vsel %vm292, %v3484, 0
        %v3550 = vsel %vm292, %v3485, 0
        %v3553 = vsel %vm292, %v3486, 0
        %v3556 = vsel %vm292, %v3487, 0
        %v3559 = vsel %vm292, %v3488, 0
        %v3562 = vsel %vm292, %v3489, 0
        %v3565 = vsel %vm292, %v3490, 0
        %v3568 = vsel %vm292, %v3491, 0
        %v3571 = vsel %vm292, %v3492, 0
        %v3574 = vsel %vm292, %v3493, 0
        %v3577 = vsel %vm292, %v3494, 0
        %v3580 = vsel %vm292, %v3495, 0
        %v3583 = vsel %vm292, %v3496, 0
        %v3586 = vsel %vm292, %v3497, 0
        %v3589 = vsel %vm292, %v3498, 0
        %v3592 = vsel %vm292, %v3499, 0
        %v3595 = vsel %vm292, %v3500, 0
        %v3598 = vsel %vm292, %v3501, 0
        %v3601 = vsel %vm576, %v3503, 0
        %3603 = vmatprep.subr.mxu0 0.0
        %3604 = vmatpush1.msra.mxu0 %v3601
        %3605 = vmatprep.subr.mxu0 0.0
        %3606 = vmatpush1.msra.mxu0 0.0
        %3607 = vmatprep.subr.mxu0 0.0
        %3608 = vmatpush1.msra.mxu0 0.0
        %3609 = vmatprep.subr.mxu0 0.0
        %3610 = vmatpush1.msra.mxu0 0.0
        %3611 = vmatprep.subr.mxu0 0.0
        %3612 = vmatpush1.msra.mxu0 0.0
        %3613 = vmatprep.subr.mxu0 0.0
        %3614 = vmatpush1.msra.mxu0 0.0
        %3615 = vmatprep.subr.mxu0 0.0
        %3616 = vmatpush1.msra.mxu0 0.0
        %3617 = vmatprep.subr.mxu0 0.0
        %3618 = vmatpush1.msra.mxu0 0.0
        %3619 = vmatprep.subr.mxu0 0.0
        %3620 = vmatpush1.msra.mxu0 0.0
        %3621 = vmatprep.subr.mxu0 0.0
        %3622 = vmatpush1.msra.mxu0 0.0
        %3623 = vmatprep.subr.mxu0 0.0
        %3624 = vmatpush1.msra.mxu0 0.0
        %3625 = vmatprep.subr.mxu0 0.0
        %3626 = vmatpush1.msra.mxu0 0.0
        %3627 = vmatprep.subr.mxu0 0.0
        %3628 = vmatpush1.msra.mxu0 0.0
        %3629 = vmatprep.subr.mxu0 0.0
        %3630 = vmatpush1.msra.mxu0 0.0
        %3631 = vmatprep.subr.mxu0 0.0
        %3632 = vmatpush1.msra.mxu0 0.0
        %3633 = vmatprep.subr.mxu0 0.0
        %3634 = vmatpush1.msra.mxu0 0.0
        %3635 = vmatprep.subr.mxu0 0.0
        %3636 = vmatpush1.msra.mxu0 0.0
        %3637 = vmatprep.subr.mxu0 0.0
        %3638 = vmatpush1.msra.mxu0 0.0
        %3639 = vmatprep.subr.mxu0 0.0
        %3640 = vmatpush1.msra.mxu0 0.0
        %3641 = vmatprep.subr.mxu0 0.0
        %3642 = vmatpush1.msra.mxu0 0.0
        %3643 = vmatprep.subr.mxu0 0.0
        %3644 = vmatpush1.msra.mxu0 0.0
        %3645 = vmatprep.subr.mxu0 0.0
        %3646 = vmatpush1.msra.mxu0 0.0
        %3647 = vmatprep.subr.mxu0 0.0
        %3648 = vmatpush1.msra.mxu0 0.0
        %3649 = vmatprep.subr.mxu0 0.0
        %3650 = vmatpush1.msra.mxu0 0.0
        %3651 = vmatprep.subr.mxu0 0.0
        %3652 = vmatpush1.msra.mxu0 0.0
        %3653 = vmatprep.subr.mxu0 0.0
        %3654 = vmatpush1.msra.mxu0 0.0
        %3655 = vmatprep.subr.mxu0 0.0
        %3656 = vmatpush1.msra.mxu0 0.0
        %3657 = vmatprep.subr.mxu0 0.0
        %3658 = vmatpush1.msra.mxu0 0.0
        %3659 = vmatprep.subr.mxu0 0.0
        %3660 = vmatpush1.msra.mxu0 0.0
        %3661 = vmatprep.subr.mxu0 0.0
        %3662 = vmatpush1.msra.mxu0 0.0
        %3663 = vmatprep.subr.mxu0 0.0
        %3664 = vmatpush1.msra.mxu0 0.0
        %3665 = vmatprep.subr.mxu0 0.0
        %3666 = vmatpush1.msra.mxu0 0.0
        %3667 = vmatprep.mubr.f32.mxu0 0.0
        %3668 = vmatmul.mubr.f32.gmra.mrb[0].mxu0 %v3505
        %v3669 = vpop.f32.mrb[0].mxu0
        %v3670 = vadd.f32 0.0, %v3669
        %v3671 = vpop.f32.mrb[0].mxu0
        %3672 = vmatprep.mubr.f32.mxu0 0.0
        %3673 = vmatmul.mubr.f32.gmra.mrb[0].mxu0 %v3508
        %v3674 = vpop.f32.mrb[0].mxu0
        %v3675 = vadd.f32 0.0, %v3674
        %v3676 = vpop.f32.mrb[0].mxu0
        %3677 = vmatprep.mubr.f32.mxu0 0.0
        %3678 = vmatmul.mubr.f32.gmra.mrb[0].mxu0 %v3511
        %v3679 = vpop.f32.mrb[0].mxu0
        %v3680 = vadd.f32 0.0, %v3679
        %v3681 = vpop.f32.mrb[0].mxu0
        %3682 = vmatprep.mubr.f32.mxu0 0.0
        %3683 = vmatmul.mubr.f32.gmra.mrb[0].mxu0 %v3514
        %v3684 = vpop.f32.mrb[0].mxu0
        %v3685 = vadd.f32 0.0, %v3684
        %v3686 = vpop.f32.mrb[0].mxu0
        %3687 = vmatprep.mubr.f32.mxu0 0.0
        %3688 = vmatmul.mubr.f32.gmra.mrb[0].mxu0 %v3517
        %v3689 = vpop.f32.mrb[0].mxu0
        %v3690 = vadd.f32 0.0, %v3689
        %v3691 = vpop.f32.mrb[0].mxu0
        %3692 = vmatprep.mubr.f32.mxu0 0.0
        %3693 = vmatmul.mubr.f32.gmra.mrb[0].mxu0 %v3520
        %v3694 = vpop.f32.mrb[0].mxu0
        %v3695 = vadd.f32 0.0, %v3694
        %v3696 = vpop.f32.mrb[0].mxu0
        %3697 = vmatprep.mubr.f32.mxu0 0.0
        %3698 = vmatmul.mubr.f32.gmra.mrb[0].mxu0 %v3523
        %v3699 = vpop.f32.mrb[0].mxu0
        %v3700 = vadd.f32 0.0, %v3699
        %v3701 = vpop.f32.mrb[0].mxu0
        %3702 = vmatprep.mubr.f32.mxu0 0.0
        %3703 = vmatmul.mubr.f32.gmra.mrb[0].mxu0 %v3526
        %v3704 = vpop.f32.mrb[0].mxu0
        %v3705 = vadd.f32 0.0, %v3704
        %v3706 = vpop.f32.mrb[0].mxu0
        %3707 = vmatprep.mubr.f32.mxu0 0.0
        %3708 = vmatmul.mubr.f32.gmra.mrb[0].mxu0 %v3529
        %v3709 = vpop.f32.mrb[0].mxu0
        %v3710 = vadd.f32 0.0, %v3709
        %v3711 = vpop.f32.mrb[0].mxu0
        %3712 = vmatprep.mubr.f32.mxu0 0.0
        %3713 = vmatmul.mubr.f32.gmra.mrb[0].mxu0 %v3532
        %v3714 = vpop.f32.mrb[0].mxu0
        %v3715 = vadd.f32 0.0, %v3714
        %v3716 = vpop.f32.mrb[0].mxu0
        %3717 = vmatprep.mubr.f32.mxu0 0.0
        %3718 = vmatmul.mubr.f32.gmra.mrb[0].mxu0 %v3535
        %v3719 = vpop.f32.mrb[0].mxu0
        %v3720 = vadd.f32 0.0, %v3719
        %v3721 = vpop.f32.mrb[0].mxu0
        %3722 = vmatprep.mubr.f32.mxu0 0.0
        %3723 = vmatmul.mubr.f32.gmra.mrb[0].mxu0 %v3538
        %v3724 = vpop.f32.mrb[0].mxu0
        %v3725 = vadd.f32 0.0, %v3724
        %v3726 = vpop.f32.mrb[0].mxu0
        %3727 = vmatprep.mubr.f32.mxu0 0.0
        %3728 = vmatmul.mubr.f32.gmra.mrb[0].mxu0 %v3541
        %v3729 = vpop.f32.mrb[0].mxu0
        %v3730 = vadd.f32 0.0, %v3729
        %v3731 = vpop.f32.mrb[0].mxu0
        %3732 = vmatprep.mubr.f32.mxu0 0.0
        %3733 = vmatmul.mubr.f32.gmra.mrb[0].mxu0 %v3544
        %v3734 = vpop.f32.mrb[0].mxu0
        %v3735 = vadd.f32 0.0, %v3734
        %v3736 = vpop.f32.mrb[0].mxu0
        %3737 = vmatprep.mubr.f32.mxu0 0.0
        %3738 = vmatmul.mubr.f32.gmra.mrb[0].mxu0 %v3547
        %v3739 = vpop.f32.mrb[0].mxu0
        %v3740 = vadd.f32 0.0, %v3739
        %v3741 = vpop.f32.mrb[0].mxu0
        %3742 = vmatprep.mubr.f32.mxu0 0.0
        %3743 = vmatmul.mubr.f32.gmra.mrb[0].mxu0 %v3550
        %v3744 = vpop.f32.mrb[0].mxu0
        %v3745 = vadd.f32 0.0, %v3744
        %v3746 = vpop.f32.mrb[0].mxu0
        %3747 = vmatprep.mubr.f32.mxu0 0.0
        %3748 = vmatmul.mubr.f32.gmra.mrb[0].mxu0 %v3553
        %v3749 = vpop.f32.mrb[0].mxu0
        %v3750 = vadd.f32 0.0, %v3749
        %v3751 = vpop.f32.mrb[0].mxu0
        %3752 = vmatprep.mubr.f32.mxu0 0.0
        %3753 = vmatmul.mubr.f32.gmra.mrb[0].mxu0 %v3556
        %v3754 = vpop.f32.mrb[0].mxu0
        %v3755 = vadd.f32 0.0, %v3754
        %v3756 = vpop.f32.mrb[0].mxu0
        %3757 = vmatprep.mubr.f32.mxu0 0.0
        %3758 = vmatmul.mubr.f32.gmra.mrb[0].mxu0 %v3559
        %v3759 = vpop.f32.mrb[0].mxu0
        %v3760 = vadd.f32 0.0, %v3759
        %v3761 = vpop.f32.mrb[0].mxu0
        %3762 = vmatprep.mubr.f32.mxu0 0.0
        %3763 = vmatmul.mubr.f32.gmra.mrb[0].mxu0 %v3562
        %v3764 = vpop.f32.mrb[0].mxu0
        %v3765 = vadd.f32 0.0, %v3764
        %v3766 = vpop.f32.mrb[0].mxu0
        %3767 = vmatprep.mubr.f32.mxu0 0.0
        %3768 = vmatmul.mubr.f32.gmra.mrb[0].mxu0 %v3565
        %v3769 = vpop.f32.mrb[0].mxu0
        %v3770 = vadd.f32 0.0, %v3769
        %v3771 = vpop.f32.mrb[0].mxu0
        %3772 = vmatprep.mubr.f32.mxu0 0.0
        %3773 = vmatmul.mubr.f32.gmra.mrb[0].mxu0 %v3568
        %v3774 = vpop.f32.mrb[0].mxu0
        %v3775 = vadd.f32 0.0, %v3774
        %v3776 = vpop.f32.mrb[0].mxu0
        %3777 = vmatprep.mubr.f32.mxu0 0.0
        %3778 = vmatmul.mubr.f32.gmra.mrb[0].mxu0 %v3571
        %v3779 = vpop.f32.mrb[0].mxu0
        %v3780 = vadd.f32 0.0, %v3779
        %v3781 = vpop.f32.mrb[0].mxu0
        %3782 = vmatprep.mubr.f32.mxu0 0.0
        %3783 = vmatmul.mubr.f32.gmra.mrb[0].mxu0 %v3574
        %v3784 = vpop.f32.mrb[0].mxu0
        %v3785 = vadd.f32 0.0, %v3784
        %v3786 = vpop.f32.mrb[0].mxu0
        %3787 = vmatprep.mubr.f32.mxu0 0.0
        %3788 = vmatmul.mubr.f32.gmra.mrb[0].mxu0 %v3577
        %v3789 = vpop.f32.mrb[0].mxu0
        %v3790 = vadd.f32 0.0, %v3789
        %v3791 = vpop.f32.mrb[0].mxu0
        %3792 = vmatprep.mubr.f32.mxu0 0.0
        %3793 = vmatmul.mubr.f32.gmra.mrb[0].mxu0 %v3580
        %v3794 = vpop.f32.mrb[0].mxu0
        %v3795 = vadd.f32 0.0, %v3794
        %v3796 = vpop.f32.mrb[0].mxu0
        %3797 = vmatprep.mubr.f32.mxu0 0.0
        %3798 = vmatmul.mubr.f32.gmra.mrb[0].mxu0 %v3583
        %v3799 = vpop.f32.mrb[0].mxu0
        %v3800 = vadd.f32 0.0, %v3799
        %v3801 = vpop.f32.mrb[0].mxu0
        %3802 = vmatprep.mubr.f32.mxu0 0.0
        %3803 = vmatmul.mubr.f32.gmra.mrb[0].mxu0 %v3586
        %v3804 = vpop.f32.mrb[0].mxu0
        %v3805 = vadd.f32 0.0, %v3804
        %v3806 = vpop.f32.mrb[0].mxu0
        %3807 = vmatprep.mubr.f32.mxu0 0.0
        %3808 = vmatmul.mubr.f32.gmra.mrb[0].mxu0 %v3589
        %v3809 = vpop.f32.mrb[0].mxu0
        %v3810 = vadd.f32 0.0, %v3809
        %v3811 = vpop.f32.mrb[0].mxu0
        %3812 = vmatprep.mubr.f32.mxu0 0.0
        %3813 = vmatmul.mubr.f32.gmra.mrb[0].mxu0 %v3592
        %v3814 = vpop.f32.mrb[0].mxu0
        %v3815 = vadd.f32 0.0, %v3814
        %v3816 = vpop.f32.mrb[0].mxu0
        %3817 = vmatprep.mubr.f32.mxu0 0.0
        %3818 = vmatmul.mubr.f32.gmra.mrb[0].mxu0 %v3595
        %v3819 = vpop.f32.mrb[0].mxu0
        %v3820 = vadd.f32 0.0, %v3819
        %v3821 = vpop.f32.mrb[0].mxu0
        %3822 = vmatprep.mubr.f32.mxu0 0.0
        %3823 = vmatmul.mubr.f32.gmra.mrb[0].mxu0 %v3598
        %v3824 = vpop.f32.mrb[0].mxu0
        %v3825 = vadd.f32 0.0, %v3824
        %v3826 = vpop.f32.mrb[0].mxu0
        %3827 = vdwg.mxu0
        %v3828 = vadd.f32 %v3438, %v3670
        %v3829 = vadd.f32 %v3439, %v3675
        %v3830 = vadd.f32 %v3440, %v3680
        %v3831 = vadd.f32 %v3441, %v3685
        %v3832 = vadd.f32 %v3442, %v3690
        %v3833 = vadd.f32 %v3443, %v3695
        %v3834 = vadd.f32 %v3444, %v3700
        %v3835 = vadd.f32 %v3445, %v3705
        %v3836 = vadd.f32 %v3446, %v3710
        %v3837 = vadd.f32 %v3447, %v3715
        %v3838 = vadd.f32 %v3448, %v3720
        %v3839 = vadd.f32 %v3449, %v3725
        %v3840 = vadd.f32 %v3450, %v3730
        %v3841 = vadd.f32 %v3451, %v3735
        %v3842 = vadd.f32 %v3452, %v3740
        %v3843 = vadd.f32 %v3453, %v3745
        %v3844 = vadd.f32 %v3454, %v3750
        %v3845 = vadd.f32 %v3455, %v3755
        %v3846 = vadd.f32 %v3456, %v3760
        %v3847 = vadd.f32 %v3457, %v3765
        %v3848 = vadd.f32 %v3458, %v3770
        %v3849 = vadd.f32 %v3459, %v3775
        %v3850 = vadd.f32 %v3460, %v3780
        %v3851 = vadd.f32 %v3461, %v3785
        %v3852 = vadd.f32 %v3462, %v3790
        %v3853 = vadd.f32 %v3463, %v3795
        %v3854 = vadd.f32 %v3464, %v3800
        %v3855 = vadd.f32 %v3465, %v3805
        %v3856 = vadd.f32 %v3466, %v3810
        %v3857 = vadd.f32 %v3467, %v3815
        %v3858 = vadd.f32 %v3468, %v3820
        %v3859 = vadd.f32 %v3469, %v3825
        %v3860 = vld [vmem:[%s2] sm:$0x1]
        %v3862 = vlaneseq
        %v3863 = vshrl.u32 %v3862, 7
        %v3864 = vsub.s32 0, %v3863
        %v3865 = vrot.slane %v3860, %v3864
        %v3867 = vadd.f32 %v3828, %v3865
        %v3868 = vadd.f32 %v3829, %v3865
        %v3869 = vadd.f32 %v3830, %v3865
        %v3870 = vadd.f32 %v3831, %v3865
        %v3871 = vadd.f32 %v3832, %v3865
        %v3872 = vadd.f32 %v3833, %v3865
        %v3873 = vadd.f32 %v3834, %v3865
        %v3874 = vadd.f32 %v3835, %v3865
        %v3875 = vadd.f32 %v3836, %v3865
        %v3876 = vadd.f32 %v3837, %v3865
        %v3877 = vadd.f32 %v3838, %v3865
        %v3878 = vadd.f32 %v3839, %v3865
        %v3879 = vadd.f32 %v3840, %v3865
        %v3880 = vadd.f32 %v3841, %v3865
        %v3881 = vadd.f32 %v3842, %v3865
        %v3882 = vadd.f32 %v3843, %v3865
        %v3883 = vadd.f32 %v3844, %v3865
        %v3884 = vadd.f32 %v3845, %v3865
        %v3885 = vadd.f32 %v3846, %v3865
        %v3886 = vadd.f32 %v3847, %v3865
        %v3887 = vadd.f32 %v3848, %v3865
        %v3888 = vadd.f32 %v3849, %v3865
        %v3889 = vadd.f32 %v3850, %v3865
        %v3890 = vadd.f32 %v3851, %v3865
        %v3891 = vadd.f32 %v3852, %v3865
        %v3892 = vadd.f32 %v3853, %v3865
        %v3893 = vadd.f32 %v3854, %v3865
        %v3894 = vadd.f32 %v3855, %v3865
        %v3895 = vadd.f32 %v3856, %v3865
        %v3896 = vadd.f32 %v3857, %v3865
        %v3897 = vadd.f32 %v3858, %v3865
        %v3898 = vadd.f32 %v3859, %v3865
        %v3899 = vmax.f32 %v3867, 0.0
        %v3900 = vmax.f32 %v3868, 0.0
        %v3901 = vmax.f32 %v3869, 0.0
        %v3902 = vmax.f32 %v3870, 0.0
        %v3903 = vmax.f32 %v3871, 0.0
        %v3904 = vmax.f32 %v3872, 0.0
        %v3905 = vmax.f32 %v3873, 0.0
        %v3906 = vmax.f32 %v3874, 0.0
        %v3907 = vmax.f32 %v3875, 0.0
        %v3908 = vmax.f32 %v3876, 0.0
        %v3909 = vmax.f32 %v3877, 0.0
        %v3910 = vmax.f32 %v3878, 0.0
        %v3911 = vmax.f32 %v3879, 0.0
        %v3912 = vmax.f32 %v3880, 0.0
        %v3913 = vmax.f32 %v3881, 0.0
        %v3914 = vmax.f32 %v3882, 0.0
        %v3915 = vmax.f32 %v3883, 0.0
        %v3916 = vmax.f32 %v3884, 0.0
        %v3917 = vmax.f32 %v3885, 0.0
        %v3918 = vmax.f32 %v3886, 0.0
        %v3919 = vmax.f32 %v3887, 0.0
        %v3920 = vmax.f32 %v3888, 0.0
        %v3921 = vmax.f32 %v3889, 0.0
        %v3922 = vmax.f32 %v3890, 0.0
        %v3923 = vmax.f32 %v3891, 0.0
        %v3924 = vmax.f32 %v3892, 0.0
        %v3925 = vmax.f32 %v3893, 0.0
        %v3926 = vmax.f32 %v3894, 0.0
        %v3927 = vmax.f32 %v3895, 0.0
        %v3928 = vmax.f32 %v3896, 0.0
        %v3929 = vmax.f32 %v3897, 0.0
        %v3930 = vmax.f32 %v3898, 0.0
        %v3931 = vmax.f32 %v3899, %v3901
        %v3932 = vmax.f32 %v3900, %v3902
        %v3933 = vmax.f32 %v3903, %v3905
        %v3934 = vmax.f32 %v3904, %v3906
        %v3935 = vmax.f32 %v3907, %v3909
        %v3936 = vmax.f32 %v3908, %v3910
        %v3937 = vmax.f32 %v3911, %v3913
        %v3938 = vmax.f32 %v3912, %v3914
        %v3939 = vmax.f32 %v3915, %v3917
        %v3940 = vmax.f32 %v3916, %v3918
        %v3941 = vmax.f32 %v3919, %v3921
        %v3942 = vmax.f32 %v3920, %v3922
        %v3943 = vmax.f32 %v3923, %v3925
        %v3944 = vmax.f32 %v3924, %v3926
        %v3945 = vmax.f32 %v3927, %v3929
        %v3946 = vmax.f32 %v3928, %v3930
        %v3963 = vcombine.high %v3931, %v3931
        %v3965 = vunpack.c.l.s4 1983009808
        %v3966 = vunpack.c.0.s8 %v3965
        %v3967 = vlaneseq
        %v3968 = vshrl.u32 %v3967, 7
        %v3969 = vsub.s32 %v3966, %v3968
        %v3970 = vrot.slane %v3931, %v3969
        %v3972 = vunpack.c.l.s4 1983009808
        %v3973 = vunpack.c.0.s8 %v3972
        %v3974 = vlaneseq
        %v3975 = vshrl.u32 %v3974, 7
        %v3976 = vsub.s32 %v3973, %v3975
        %v3977 = vrot.slane %v3963, %v3976
        %v3978 = vcombine.high %v3970, %v3970
        %v3979 = vcombine.high %v3977, %v3977
        %v3980 = vcombine.high %v3932, %v3932
        %v3982 = vunpack.c.l.s4 1983009808
        %v3983 = vunpack.c.0.s8 %v3982
        %v3984 = vlaneseq
        %v3985 = vshrl.u32 %v3984, 7
        %v3986 = vsub.s32 %v3983, %v3985
        %v3987 = vrot.slane %v3932, %v3986
        %v3989 = vunpack.c.l.s4 1983009808
        %v3990 = vunpack.c.0.s8 %v3989
        %v3991 = vlaneseq
        %v3992 = vshrl.u32 %v3991, 7
        %v3993 = vsub.s32 %v3990, %v3992
        %v3994 = vrot.slane %v3980, %v3993
        %v3995 = vcombine.high %v3987, %v3987
        %v3996 = vcombine.high %v3994, %v3994
        %v3997 = vcombine.high %v3933, %v3933
        %v3999 = vunpack.c.l.s4 1983009808
        %v4000 = vunpack.c.0.s8 %v3999
        %v4001 = vlaneseq
        %v4002 = vshrl.u32 %v4001, 7
        %v4003 = vsub.s32 %v4000, %v4002
        %v4004 = vrot.slane %v3933, %v4003
        %v4006 = vunpack.c.l.s4 1983009808
        %v4007 = vunpack.c.0.s8 %v4006
        %v4008 = vlaneseq
        %v4009 = vshrl.u32 %v4008, 7
        %v4010 = vsub.s32 %v4007, %v4009
        %v4011 = vrot.slane %v3997, %v4010
        %v4012 = vcombine.high %v4004, %v4004
        %v4013 = vcombine.high %v4011, %v4011
        %v4014 = vcombine.high %v3934, %v3934
        %v4016 = vunpack.c.l.s4 1983009808
        %v4017 = vunpack.c.0.s8 %v4016
        %v4018 = vlaneseq
        %v4019 = vshrl.u32 %v4018, 7
        %v4020 = vsub.s32 %v4017, %v4019
        %v4021 = vrot.slane %v3934, %v4020
        %v4023 = vunpack.c.l.s4 1983009808
        %v4024 = vunpack.c.0.s8 %v4023
        %v4025 = vlaneseq
        %v4026 = vshrl.u32 %v4025, 7
        %v4027 = vsub.s32 %v4024, %v4026
        %v4028 = vrot.slane %v4014, %v4027
        %v4029 = vcombine.high %v4021, %v4021
        %v4030 = vcombine.high %v4028, %v4028
        %v4031 = vcombine.high %v3935, %v3935
        %v4033 = vunpack.c.l.s4 1983009808
        %v4034 = vunpack.c.0.s8 %v4033
        %v4035 = vlaneseq
        %v4036 = vshrl.u32 %v4035, 7
        %v4037 = vsub.s32 %v4034, %v4036
        %v4038 = vrot.slane %v3935, %v4037
        %v4040 = vunpack.c.l.s4 1983009808
        %v4041 = vunpack.c.0.s8 %v4040
        %v4042 = vlaneseq
        %v4043 = vshrl.u32 %v4042, 7
        %v4044 = vsub.s32 %v4041, %v4043
        %v4045 = vrot.slane %v4031, %v4044
        %v4046 = vcombine.high %v4038, %v4038
        %v4047 = vcombine.high %v4045, %v4045
        %v4048 = vcombine.high %v3936, %v3936
        %v4050 = vunpack.c.l.s4 1983009808
        %v4051 = vunpack.c.0.s8 %v4050
        %v4052 = vlaneseq
        %v4053 = vshrl.u32 %v4052, 7
        %v4054 = vsub.s32 %v4051, %v4053
        %v4055 = vrot.slane %v3936, %v4054
        %v4057 = vunpack.c.l.s4 1983009808
        %v4058 = vunpack.c.0.s8 %v4057
        %v4059 = vlaneseq
        %v4060 = vshrl.u32 %v4059, 7
        %v4061 = vsub.s32 %v4058, %v4060
        %v4062 = vrot.slane %v4048, %v4061
        %v4063 = vcombine.high %v4055, %v4055
        %v4064 = vcombine.high %v4062, %v4062
        %v4065 = vcombine.high %v3937, %v3937
        %v4067 = vunpack.c.l.s4 1983009808
        %v4068 = vunpack.c.0.s8 %v4067
        %v4069 = vlaneseq
        %v4070 = vshrl.u32 %v4069, 7
        %v4071 = vsub.s32 %v4068, %v4070
        %v4072 = vrot.slane %v3937, %v4071
        %v4074 = vunpack.c.l.s4 1983009808
        %v4075 = vunpack.c.0.s8 %v4074
        %v4076 = vlaneseq
        %v4077 = vshrl.u32 %v4076, 7
        %v4078 = vsub.s32 %v4075, %v4077
        %v4079 = vrot.slane %v4065, %v4078
        %v4080 = vcombine.high %v4072, %v4072
        %v4081 = vcombine.high %v4079, %v4079
        %v4082 = vcombine.high %v3938, %v3938
        %v4084 = vunpack.c.l.s4 1983009808
        %v4085 = vunpack.c.0.s8 %v4084
        %v4086 = vlaneseq
        %v4087 = vshrl.u32 %v4086, 7
        %v4088 = vsub.s32 %v4085, %v4087
        %v4089 = vrot.slane %v3938, %v4088
        %v4091 = vunpack.c.l.s4 1983009808
        %v4092 = vunpack.c.0.s8 %v4091
        %v4093 = vlaneseq
        %v4094 = vshrl.u32 %v4093, 7
        %v4095 = vsub.s32 %v4092, %v4094
        %v4096 = vrot.slane %v4082, %v4095
        %v4097 = vcombine.high %v4089, %v4089
        %v4098 = vcombine.high %v4096, %v4096
        %v4099 = vcombine.high %v3939, %v3939
        %v4101 = vunpack.c.l.s4 1983009808
        %v4102 = vunpack.c.0.s8 %v4101
        %v4103 = vlaneseq
        %v4104 = vshrl.u32 %v4103, 7
        %v4105 = vsub.s32 %v4102, %v4104
        %v4106 = vrot.slane %v3939, %v4105
        %v4108 = vunpack.c.l.s4 1983009808
        %v4109 = vunpack.c.0.s8 %v4108
        %v4110 = vlaneseq
        %v4111 = vshrl.u32 %v4110, 7
        %v4112 = vsub.s32 %v4109, %v4111
        %v4113 = vrot.slane %v4099, %v4112
        %v4114 = vcombine.high %v4106, %v4106
        %v4115 = vcombine.high %v4113, %v4113
        %v4116 = vcombine.high %v3940, %v3940
        %v4118 = vunpack.c.l.s4 1983009808
        %v4119 = vunpack.c.0.s8 %v4118
        %v4120 = vlaneseq
        %v4121 = vshrl.u32 %v4120, 7
        %v4122 = vsub.s32 %v4119, %v4121
        %v4123 = vrot.slane %v3940, %v4122
        %v4125 = vunpack.c.l.s4 1983009808
        %v4126 = vunpack.c.0.s8 %v4125
        %v4127 = vlaneseq
        %v4128 = vshrl.u32 %v4127, 7
        %v4129 = vsub.s32 %v4126, %v4128
        %v4130 = vrot.slane %v4116, %v4129
        %v4131 = vcombine.high %v4123, %v4123
        %v4132 = vcombine.high %v4130, %v4130
        %v4133 = vcombine.high %v3941, %v3941
        %v4135 = vunpack.c.l.s4 1983009808
        %v4136 = vunpack.c.0.s8 %v4135
        %v4137 = vlaneseq
        %v4138 = vshrl.u32 %v4137, 7
        %v4139 = vsub.s32 %v4136, %v4138
        %v4140 = vrot.slane %v3941, %v4139
        %v4142 = vunpack.c.l.s4 1983009808
        %v4143 = vunpack.c.0.s8 %v4142
        %v4144 = vlaneseq
        %v4145 = vshrl.u32 %v4144, 7
        %v4146 = vsub.s32 %v4143, %v4145
        %v4147 = vrot.slane %v4133, %v4146
        %v4148 = vcombine.high %v4140, %v4140
        %v4149 = vcombine.high %v4147, %v4147
        %v4150 = vcombine.high %v3942, %v3942
        %v4152 = vunpack.c.l.s4 1983009808
        %v4153 = vunpack.c.0.s8 %v4152
        %v4154 = vlaneseq
        %v4155 = vshrl.u32 %v4154, 7
        %v4156 = vsub.s32 %v4153, %v4155
        %v4157 = vrot.slane %v3942, %v4156
        %v4159 = vunpack.c.l.s4 1983009808
        %v4160 = vunpack.c.0.s8 %v4159
        %v4161 = vlaneseq
        %v4162 = vshrl.u32 %v4161, 7
        %v4163 = vsub.s32 %v4160, %v4162
        %v4164 = vrot.slane %v4150, %v4163
        %v4165 = vcombine.high %v4157, %v4157
        %v4166 = vcombine.high %v4164, %v4164
        %v4167 = vcombine.high %v3943, %v3943
        %v4169 = vunpack.c.l.s4 1983009808
        %v4170 = vunpack.c.0.s8 %v4169
        %v4171 = vlaneseq
        %v4172 = vshrl.u32 %v4171, 7
        %v4173 = vsub.s32 %v4170, %v4172
        %v4174 = vrot.slane %v3943, %v4173
        %v4176 = vunpack.c.l.s4 1983009808
        %v4177 = vunpack.c.0.s8 %v4176
        %v4178 = vlaneseq
        %v4179 = vshrl.u32 %v4178, 7
        %v4180 = vsub.s32 %v4177, %v4179
        %v4181 = vrot.slane %v4167, %v4180
        %v4182 = vcombine.high %v4174, %v4174
        %v4183 = vcombine.high %v4181, %v4181
        %v4184 = vcombine.high %v3944, %v3944
        %v4186 = vunpack.c.l.s4 1983009808
        %v4187 = vunpack.c.0.s8 %v4186
        %v4188 = vlaneseq
        %v4189 = vshrl.u32 %v4188, 7
        %v4190 = vsub.s32 %v4187, %v4189
        %v4191 = vrot.slane %v3944, %v4190
        %v4193 = vunpack.c.l.s4 1983009808
        %v4194 = vunpack.c.0.s8 %v4193
        %v4195 = vlaneseq
        %v4196 = vshrl.u32 %v4195, 7
        %v4197 = vsub.s32 %v4194, %v4196
        %v4198 = vrot.slane %v4184, %v4197
        %v4199 = vcombine.high %v4191, %v4191
        %v4200 = vcombine.high %v4198, %v4198
        %v4201 = vcombine.high %v3945, %v3945
        %v4203 = vunpack.c.l.s4 1983009808
        %v4204 = vunpack.c.0.s8 %v4203
        %v4205 = vlaneseq
        %v4206 = vshrl.u32 %v4205, 7
        %v4207 = vsub.s32 %v4204, %v4206
        %v4208 = vrot.slane %v3945, %v4207
        %v4210 = vunpack.c.l.s4 1983009808
        %v4211 = vunpack.c.0.s8 %v4210
        %v4212 = vlaneseq
        %v4213 = vshrl.u32 %v4212, 7
        %v4214 = vsub.s32 %v4211, %v4213
        %v4215 = vrot.slane %v4201, %v4214
        %v4216 = vcombine.high %v4208, %v4208
        %v4217 = vcombine.high %v4215, %v4215
        %v4218 = vcombine.high %v3946, %v3946
        %v4220 = vunpack.c.l.s4 1983009808
        %v4221 = vunpack.c.0.s8 %v4220
        %v4222 = vlaneseq
        %v4223 = vshrl.u32 %v4222, 7
        %v4224 = vsub.s32 %v4221, %v4223
        %v4225 = vrot.slane %v3946, %v4224
        %v4227 = vunpack.c.l.s4 1983009808
        %v4228 = vunpack.c.0.s8 %v4227
        %v4229 = vlaneseq
        %v4230 = vshrl.u32 %v4229, 7
        %v4231 = vsub.s32 %v4228, %v4230
        %v4232 = vrot.slane %v4218, %v4231
        %v4233 = vcombine.high %v4225, %v4225
        %v4234 = vcombine.high %v4232, %v4232
        %v4299 = vrot.slane %v3970, 7
        %v4300 = vrot.slane %v4299, 2
        %v4301 = vrot.slane %v3978, 7
        %v4302 = vrot.slane %v4301, 2
        %v4303 = vrot.slane %v3977, 7
        %v4304 = vrot.slane %v4303, 2
        %v4305 = vrot.slane %v3979, 7
        %v4306 = vrot.slane %v4305, 2
        %v4307 = vrot.slane %v3987, 7
        %v4308 = vrot.slane %v4307, 2
        %v4309 = vrot.slane %v3995, 7
        %v4310 = vrot.slane %v4309, 2
        %v4311 = vrot.slane %v3994, 7
        %v4312 = vrot.slane %v4311, 2
        %v4313 = vrot.slane %v3996, 7
        %v4314 = vrot.slane %v4313, 2
        %v4315 = vrot.slane %v4004, 7
        %v4316 = vrot.slane %v4315, 2
        %v4317 = vrot.slane %v4012, 7
        %v4318 = vrot.slane %v4317, 2
        %v4319 = vrot.slane %v4011, 7
        %v4320 = vrot.slane %v4319, 2
        %v4321 = vrot.slane %v4013, 7
        %v4322 = vrot.slane %v4321, 2
        %v4323 = vrot.slane %v4021, 7
        %v4324 = vrot.slane %v4323, 2
        %v4325 = vrot.slane %v4029, 7
        %v4326 = vrot.slane %v4325, 2
        %v4327 = vrot.slane %v4028, 7
        %v4328 = vrot.slane %v4327, 2
        %v4329 = vrot.slane %v4030, 7
        %v4330 = vrot.slane %v4329, 2
        %v4331 = vrot.slane %v4038, 7
        %v4332 = vrot.slane %v4331, 2
        %v4333 = vrot.slane %v4046, 7
        %v4334 = vrot.slane %v4333, 2
        %v4335 = vrot.slane %v4045, 7
        %v4336 = vrot.slane %v4335, 2
        %v4337 = vrot.slane %v4047, 7
        %v4338 = vrot.slane %v4337, 2
        %v4339 = vrot.slane %v4055, 7
        %v4340 = vrot.slane %v4339, 2
        %v4341 = vrot.slane %v4063, 7
        %v4342 = vrot.slane %v4341, 2
        %v4343 = vrot.slane %v4062, 7
        %v4344 = vrot.slane %v4343, 2
        %v4345 = vrot.slane %v4064, 7
        %v4346 = vrot.slane %v4345, 2
        %v4347 = vrot.slane %v4072, 7
        %v4348 = vrot.slane %v4347, 2
        %v4349 = vrot.slane %v4080, 7
        %v4350 = vrot.slane %v4349, 2
        %v4351 = vrot.slane %v4079, 7
        %v4352 = vrot.slane %v4351, 2
        %v4353 = vrot.slane %v4081, 7
        %v4354 = vrot.slane %v4353, 2
        %v4355 = vrot.slane %v4089, 7
        %v4356 = vrot.slane %v4355, 2
        %v4357 = vrot.slane %v4097, 7
        %v4358 = vrot.slane %v4357, 2
        %v4359 = vrot.slane %v4096, 7
        %v4360 = vrot.slane %v4359, 2
        %v4361 = vrot.slane %v4098, 7
        %v4362 = vrot.slane %v4361, 2
        %v4363 = vrot.slane %v4106, 7
        %v4364 = vrot.slane %v4363, 2
        %v4365 = vrot.slane %v4114, 7
        %v4366 = vrot.slane %v4365, 2
        %v4367 = vrot.slane %v4113, 7
        %v4368 = vrot.slane %v4367, 2
        %v4369 = vrot.slane %v4115, 7
        %v4370 = vrot.slane %v4369, 2
        %v4371 = vrot.slane %v4123, 7
        %v4372 = vrot.slane %v4371, 2
        %v4373 = vrot.slane %v4131, 7
        %v4374 = vrot.slane %v4373, 2
        %v4375 = vrot.slane %v4130, 7
        %v4376 = vrot.slane %v4375, 2
        %v4377 = vrot.slane %v4132, 7
        %v4378 = vrot.slane %v4377, 2
        %v4379 = vrot.slane %v4140, 7
        %v4380 = vrot.slane %v4379, 2
        %v4381 = vrot.slane %v4148, 7
        %v4382 = vrot.slane %v4381, 2
        %v4383 = vrot.slane %v4147, 7
        %v4384 = vrot.slane %v4383, 2
        %v4385 = vrot.slane %v4149, 7
        %v4386 = vrot.slane %v4385, 2
        %v4387 = vrot.slane %v4157, 7
        %v4388 = vrot.slane %v4387, 2
        %v4389 = vrot.slane %v4165, 7
        %v4390 = vrot.slane %v4389, 2
        %v4391 = vrot.slane %v4164, 7
        %v4392 = vrot.slane %v4391, 2
        %v4393 = vrot.slane %v4166, 7
        %v4394 = vrot.slane %v4393, 2
        %v4395 = vrot.slane %v4174, 7
        %v4396 = vrot.slane %v4395, 2
        %v4397 = vrot.slane %v4182, 7
        %v4398 = vrot.slane %v4397, 2
        %v4399 = vrot.slane %v4181, 7
        %v4400 = vrot.slane %v4399, 2
        %v4401 = vrot.slane %v4183, 7
        %v4402 = vrot.slane %v4401, 2
        %v4403 = vrot.slane %v4191, 7
        %v4404 = vrot.slane %v4403, 2
        %v4405 = vrot.slane %v4199, 7
        %v4406 = vrot.slane %v4405, 2
        %v4407 = vrot.slane %v4198, 7
        %v4408 = vrot.slane %v4407, 2
        %v4409 = vrot.slane %v4200, 7
        %v4410 = vrot.slane %v4409, 2
        %v4411 = vrot.slane %v4208, 7
        %v4412 = vrot.slane %v4411, 2
        %v4413 = vrot.slane %v4216, 7
        %v4414 = vrot.slane %v4413, 2
        %v4415 = vrot.slane %v4215, 7
        %v4416 = vrot.slane %v4415, 2
        %v4417 = vrot.slane %v4217, 7
        %v4418 = vrot.slane %v4417, 2
        %v4419 = vrot.slane %v4225, 7
        %v4420 = vrot.slane %v4419, 2
        %v4421 = vrot.slane %v4233, 7
        %v4422 = vrot.slane %v4421, 2
        %v4423 = vrot.slane %v4232, 7
        %v4424 = vrot.slane %v4423, 2
        %v4425 = vrot.slane %v4234, 7
        %v4426 = vrot.slane %v4425, 2
        %v4491 = vmax.f32 %v3970, %v4300
        %v4492 = vmax.f32 %v3978, %v4302
        %v4493 = vmax.f32 %v3977, %v4304
        %v4494 = vmax.f32 %v3979, %v4306
        %v4495 = vmax.f32 %v3987, %v4308
        %v4496 = vmax.f32 %v3995, %v4310
        %v4497 = vmax.f32 %v3994, %v4312
        %v4498 = vmax.f32 %v3996, %v4314
        %v4499 = vmax.f32 %v4004, %v4316
        %v4500 = vmax.f32 %v4012, %v4318
        %v4501 = vmax.f32 %v4011, %v4320
        %v4502 = vmax.f32 %v4013, %v4322
        %v4503 = vmax.f32 %v4021, %v4324
        %v4504 = vmax.f32 %v4029, %v4326
        %v4505 = vmax.f32 %v4028, %v4328
        %v4506 = vmax.f32 %v4030, %v4330
        %v4507 = vmax.f32 %v4038, %v4332
        %v4508 = vmax.f32 %v4046, %v4334
        %v4509 = vmax.f32 %v4045, %v4336
        %v4510 = vmax.f32 %v4047, %v4338
        %v4511 = vmax.f32 %v4055, %v4340
        %v4512 = vmax.f32 %v4063, %v4342
        %v4513 = vmax.f32 %v4062, %v4344
        %v4514 = vmax.f32 %v4064, %v4346
        %v4515 = vmax.f32 %v4072, %v4348
        %v4516 = vmax.f32 %v4080, %v4350
        %v4517 = vmax.f32 %v4079, %v4352
        %v4518 = vmax.f32 %v4081, %v4354
        %v4519 = vmax.f32 %v4089, %v4356
        %v4520 = vmax.f32 %v4097, %v4358
        %v4521 = vmax.f32 %v4096, %v4360
        %v4522 = vmax.f32 %v4098, %v4362
        %v4523 = vmax.f32 %v4106, %v4364
        %v4524 = vmax.f32 %v4114, %v4366
        %v4525 = vmax.f32 %v4113, %v4368
        %v4526 = vmax.f32 %v4115, %v4370
        %v4527 = vmax.f32 %v4123, %v4372
        %v4528 = vmax.f32 %v4131, %v4374
        %v4529 = vmax.f32 %v4130, %v4376
        %v4530 = vmax.f32 %v4132, %v4378
        %v4531 = vmax.f32 %v4140, %v4380
        %v4532 = vmax.f32 %v4148, %v4382
        %v4533 = vmax.f32 %v4147, %v4384
        %v4534 = vmax.f32 %v4149, %v4386
        %v4535 = vmax.f32 %v4157, %v4388
        %v4536 = vmax.f32 %v4165, %v4390
        %v4537 = vmax.f32 %v4164, %v4392
        %v4538 = vmax.f32 %v4166, %v4394
        %v4539 = vmax.f32 %v4174, %v4396
        %v4540 = vmax.f32 %v4182, %v4398
        %v4541 = vmax.f32 %v4181, %v4400
        %v4542 = vmax.f32 %v4183, %v4402
        %v4543 = vmax.f32 %v4191, %v4404
        %v4544 = vmax.f32 %v4199, %v4406
        %v4545 = vmax.f32 %v4198, %v4408
        %v4546 = vmax.f32 %v4200, %v4410
        %v4547 = vmax.f32 %v4208, %v4412
        %v4548 = vmax.f32 %v4216, %v4414
        %v4549 = vmax.f32 %v4215, %v4416
        %v4550 = vmax.f32 %v4217, %v4418
        %v4551 = vmax.f32 %v4225, %v4420
        %v4552 = vmax.f32 %v4233, %v4422
        %v4553 = vmax.f32 %v4232, %v4424
        %v4554 = vmax.f32 %v4234, %v4426
        %vm4555 = vcmask 261120
        %4556 = vst.msk [vmem:[#allocation3] sm:$0xff] %vm4555, 0.0
        %vm4557 = vcmask 254976
        %4558 = vst.msk [vmem:[#allocation3 + $0x8] sm:$0x3] %vm4557, 0.0
        %4559 = vst.msk [vmem:[#allocation3 + $0x10] sm:$0xff] %vm4555, 0.0
        %4560 = vst.msk [vmem:[#allocation3 + $0x18] sm:$0x3] %vm4557, 0.0
        %4561 = vst.msk [vmem:[#allocation3 + $0x20] sm:$0xff] %vm4555, 0.0
        %4562 = vst.msk [vmem:[#allocation3 + $0x28] sm:$0x3] %vm4557, 0.0
        %4563 = vst.msk [vmem:[#allocation3 + $0x30] sm:$0xff] %vm4555, 0.0
        %4564 = vst.msk [vmem:[#allocation3 + $0x38] sm:$0x3] %vm4557, 0.0
        %4565 = vst.msk [vmem:[#allocation3 + $0x40] sm:$0xff] %vm4555, 0.0
        %4566 = vst.msk [vmem:[#allocation3 + $0x48] sm:$0x3] %vm4557, 0.0
        %4567 = vst.msk [vmem:[#allocation3 + $0x50] sm:$0xff] %vm4555, 0.0
        %4568 = vst.msk [vmem:[#allocation3 + $0x58] sm:$0x3] %vm4557, 0.0
        %4569 = vst.msk [vmem:[#allocation3 + $0x60] sm:$0xff] %vm4555, 0.0
        %4570 = vst.msk [vmem:[#allocation3 + $0x68] sm:$0x3] %vm4557, 0.0
        %4571 = vst.msk [vmem:[#allocation3 + $0x70] sm:$0xff] %vm4555, 0.0
        %4572 = vst.msk [vmem:[#allocation3 + $0x78] sm:$0x3] %vm4557, 0.0
        %4573 = vst.msk [vmem:[#allocation3 + $0x80] sm:$0xff] %vm4555, 0.0
        %4574 = vst.msk [vmem:[#allocation3 + $0x88] sm:$0x3] %vm4557, 0.0
        %4575 = vst.msk [vmem:[#allocation3 + $0x90] sm:$0xff] %vm4555, 0.0
        %4576 = vst.msk [vmem:[#allocation3 + $0x98] sm:$0x3] %vm4557, 0.0
        %v4641 = vlaneseq
        %v4642 = vshrl.u32 %v4641, 7
        %v4643 = vsub.s32 0, %v4642
        %v4644 = vrot.slane %v4491, %v4643
        %v4645 = vlaneseq
        %v4646 = vshrl.u32 %v4645, 7
        %v4647 = vsub.s32 0, %v4646
        %v4648 = vrot.slane %v4492, %v4647
        %v4649 = vlaneseq
        %v4650 = vshrl.u32 %v4649, 7
        %v4651 = vsub.s32 0, %v4650
        %v4652 = vrot.slane %v4493, %v4651
        %v4653 = vlaneseq
        %v4654 = vshrl.u32 %v4653, 7
        %v4655 = vsub.s32 0, %v4654
        %v4656 = vrot.slane %v4494, %v4655
        %v4657 = vlaneseq
        %v4658 = vshrl.u32 %v4657, 7
        %v4659 = vsub.s32 0, %v4658
        %v4660 = vrot.slane %v4495, %v4659
        %v4661 = vlaneseq
        %v4662 = vshrl.u32 %v4661, 7
        %v4663 = vsub.s32 0, %v4662
        %v4664 = vrot.slane %v4496, %v4663
        %v4665 = vlaneseq
        %v4666 = vshrl.u32 %v4665, 7
        %v4667 = vsub.s32 0, %v4666
        %v4668 = vrot.slane %v4497, %v4667
        %v4669 = vlaneseq
        %v4670 = vshrl.u32 %v4669, 7
        %v4671 = vsub.s32 0, %v4670
        %v4672 = vrot.slane %v4498, %v4671
        %v4673 = vlaneseq
        %v4674 = vshrl.u32 %v4673, 7
        %v4675 = vsub.s32 0, %v4674
        %v4676 = vrot.slane %v4499, %v4675
        %v4677 = vlaneseq
        %v4678 = vshrl.u32 %v4677, 7
        %v4679 = vsub.s32 0, %v4678
        %v4680 = vrot.slane %v4500, %v4679
        %v4681 = vlaneseq
        %v4682 = vshrl.u32 %v4681, 7
        %v4683 = vsub.s32 0, %v4682
        %v4684 = vrot.slane %v4501, %v4683
        %v4685 = vlaneseq
        %v4686 = vshrl.u32 %v4685, 7
        %v4687 = vsub.s32 0, %v4686
        %v4688 = vrot.slane %v4502, %v4687
        %v4689 = vlaneseq
        %v4690 = vshrl.u32 %v4689, 7
        %v4691 = vsub.s32 0, %v4690
        %v4692 = vrot.slane %v4503, %v4691
        %v4693 = vlaneseq
        %v4694 = vshrl.u32 %v4693, 7
        %v4695 = vsub.s32 0, %v4694
        %v4696 = vrot.slane %v4504, %v4695
        %v4697 = vlaneseq
        %v4698 = vshrl.u32 %v4697, 7
        %v4699 = vsub.s32 0, %v4698
        %v4700 = vrot.slane %v4505, %v4699
        %v4701 = vlaneseq
        %v4702 = vshrl.u32 %v4701, 7
        %v4703 = vsub.s32 0, %v4702
        %v4704 = vrot.slane %v4506, %v4703
        %v4705 = vlaneseq
        %v4706 = vshrl.u32 %v4705, 7
        %v4707 = vsub.s32 0, %v4706
        %v4708 = vrot.slane %v4507, %v4707
        %v4709 = vlaneseq
        %v4710 = vshrl.u32 %v4709, 7
        %v4711 = vsub.s32 0, %v4710
        %v4712 = vrot.slane %v4508, %v4711
        %v4713 = vlaneseq
        %v4714 = vshrl.u32 %v4713, 7
        %v4715 = vsub.s32 0, %v4714
        %v4716 = vrot.slane %v4509, %v4715
        %v4717 = vlaneseq
        %v4718 = vshrl.u32 %v4717, 7
        %v4719 = vsub.s32 0, %v4718
        %v4720 = vrot.slane %v4510, %v4719
        %v4721 = vlaneseq
        %v4722 = vshrl.u32 %v4721, 7
        %v4723 = vsub.s32 0, %v4722
        %v4724 = vrot.slane %v4511, %v4723
        %v4725 = vlaneseq
        %v4726 = vshrl.u32 %v4725, 7
        %v4727 = vsub.s32 0, %v4726
        %v4728 = vrot.slane %v4512, %v4727
        %v4729 = vlaneseq
        %v4730 = vshrl.u32 %v4729, 7
        %v4731 = vsub.s32 0, %v4730
        %v4732 = vrot.slane %v4513, %v4731
        %v4733 = vlaneseq
        %v4734 = vshrl.u32 %v4733, 7
        %v4735 = vsub.s32 0, %v4734
        %v4736 = vrot.slane %v4514, %v4735
        %v4737 = vlaneseq
        %v4738 = vshrl.u32 %v4737, 7
        %v4739 = vsub.s32 0, %v4738
        %v4740 = vrot.slane %v4515, %v4739
        %v4741 = vlaneseq
        %v4742 = vshrl.u32 %v4741, 7
        %v4743 = vsub.s32 0, %v4742
        %v4744 = vrot.slane %v4516, %v4743
        %v4745 = vlaneseq
        %v4746 = vshrl.u32 %v4745, 7
        %v4747 = vsub.s32 0, %v4746
        %v4748 = vrot.slane %v4517, %v4747
        %v4749 = vlaneseq
        %v4750 = vshrl.u32 %v4749, 7
        %v4751 = vsub.s32 0, %v4750
        %v4752 = vrot.slane %v4518, %v4751
        %v4753 = vlaneseq
        %v4754 = vshrl.u32 %v4753, 7
        %v4755 = vsub.s32 0, %v4754
        %v4756 = vrot.slane %v4519, %v4755
        %v4757 = vlaneseq
        %v4758 = vshrl.u32 %v4757, 7
        %v4759 = vsub.s32 0, %v4758
        %v4760 = vrot.slane %v4520, %v4759
        %v4761 = vlaneseq
        %v4762 = vshrl.u32 %v4761, 7
        %v4763 = vsub.s32 0, %v4762
        %v4764 = vrot.slane %v4521, %v4763
        %v4765 = vlaneseq
        %v4766 = vshrl.u32 %v4765, 7
        %v4767 = vsub.s32 0, %v4766
        %v4768 = vrot.slane %v4522, %v4767
        %v4769 = vlaneseq
        %v4770 = vshrl.u32 %v4769, 7
        %v4771 = vsub.s32 0, %v4770
        %v4772 = vrot.slane %v4523, %v4771
        %v4773 = vlaneseq
        %v4774 = vshrl.u32 %v4773, 7
        %v4775 = vsub.s32 0, %v4774
        %v4776 = vrot.slane %v4524, %v4775
        %v4777 = vlaneseq
        %v4778 = vshrl.u32 %v4777, 7
        %v4779 = vsub.s32 0, %v4778
        %v4780 = vrot.slane %v4525, %v4779
        %v4781 = vlaneseq
        %v4782 = vshrl.u32 %v4781, 7
        %v4783 = vsub.s32 0, %v4782
        %v4784 = vrot.slane %v4526, %v4783
        %v4785 = vlaneseq
        %v4786 = vshrl.u32 %v4785, 7
        %v4787 = vsub.s32 0, %v4786
        %v4788 = vrot.slane %v4527, %v4787
        %v4789 = vlaneseq
        %v4790 = vshrl.u32 %v4789, 7
        %v4791 = vsub.s32 0, %v4790
        %v4792 = vrot.slane %v4528, %v4791
        %v4793 = vlaneseq
        %v4794 = vshrl.u32 %v4793, 7
        %v4795 = vsub.s32 0, %v4794
        %v4796 = vrot.slane %v4529, %v4795
        %v4797 = vlaneseq
        %v4798 = vshrl.u32 %v4797, 7
        %v4799 = vsub.s32 0, %v4798
        %v4800 = vrot.slane %v4530, %v4799
        %v4801 = vlaneseq
        %v4802 = vshrl.u32 %v4801, 7
        %v4803 = vsub.s32 0, %v4802
        %v4804 = vrot.slane %v4531, %v4803
        %v4805 = vlaneseq
        %v4806 = vshrl.u32 %v4805, 7
        %v4807 = vsub.s32 0, %v4806
        %v4808 = vrot.slane %v4532, %v4807
        %v4809 = vlaneseq
        %v4810 = vshrl.u32 %v4809, 7
        %v4811 = vsub.s32 0, %v4810
        %v4812 = vrot.slane %v4533, %v4811
        %v4813 = vlaneseq
        %v4814 = vshrl.u32 %v4813, 7
        %v4815 = vsub.s32 0, %v4814
        %v4816 = vrot.slane %v4534, %v4815
        %v4817 = vlaneseq
        %v4818 = vshrl.u32 %v4817, 7
        %v4819 = vsub.s32 0, %v4818
        %v4820 = vrot.slane %v4535, %v4819
        %v4821 = vlaneseq
        %v4822 = vshrl.u32 %v4821, 7
        %v4823 = vsub.s32 0, %v4822
        %v4824 = vrot.slane %v4536, %v4823
        %v4825 = vlaneseq
        %v4826 = vshrl.u32 %v4825, 7
        %v4827 = vsub.s32 0, %v4826
        %v4828 = vrot.slane %v4537, %v4827
        %v4829 = vlaneseq
        %v4830 = vshrl.u32 %v4829, 7
        %v4831 = vsub.s32 0, %v4830
        %v4832 = vrot.slane %v4538, %v4831
        %v4833 = vlaneseq
        %v4834 = vshrl.u32 %v4833, 7
        %v4835 = vsub.s32 0, %v4834
        %v4836 = vrot.slane %v4539, %v4835
        %v4837 = vlaneseq
        %v4838 = vshrl.u32 %v4837, 7
        %v4839 = vsub.s32 0, %v4838
        %v4840 = vrot.slane %v4540, %v4839
        %v4841 = vlaneseq
        %v4842 = vshrl.u32 %v4841, 7
        %v4843 = vsub.s32 0, %v4842
        %v4844 = vrot.slane %v4541, %v4843
        %v4845 = vlaneseq
        %v4846 = vshrl.u32 %v4845, 7
        %v4847 = vsub.s32 0, %v4846
        %v4848 = vrot.slane %v4542, %v4847
        %v4849 = vlaneseq
        %v4850 = vshrl.u32 %v4849, 7
        %v4851 = vsub.s32 0, %v4850
        %v4852 = vrot.slane %v4543, %v4851
        %v4853 = vlaneseq
        %v4854 = vshrl.u32 %v4853, 7
        %v4855 = vsub.s32 0, %v4854
        %v4856 = vrot.slane %v4544, %v4855
        %v4857 = vlaneseq
        %v4858 = vshrl.u32 %v4857, 7
        %v4859 = vsub.s32 0, %v4858
        %v4860 = vrot.slane %v4545, %v4859
        %v4861 = vlaneseq
        %v4862 = vshrl.u32 %v4861, 7
        %v4863 = vsub.s32 0, %v4862
        %v4864 = vrot.slane %v4546, %v4863
        %v4865 = vlaneseq
        %v4866 = vshrl.u32 %v4865, 7
        %v4867 = vsub.s32 0, %v4866
        %v4868 = vrot.slane %v4547, %v4867
        %v4869 = vlaneseq
        %v4870 = vshrl.u32 %v4869, 7
        %v4871 = vsub.s32 0, %v4870
        %v4872 = vrot.slane %v4548, %v4871
        %v4873 = vlaneseq
        %v4874 = vshrl.u32 %v4873, 7
        %v4875 = vsub.s32 0, %v4874
        %v4876 = vrot.slane %v4549, %v4875
        %v4877 = vlaneseq
        %v4878 = vshrl.u32 %v4877, 7
        %v4879 = vsub.s32 0, %v4878
        %v4880 = vrot.slane %v4550, %v4879
        %v4881 = vlaneseq
        %v4882 = vshrl.u32 %v4881, 7
        %v4883 = vsub.s32 0, %v4882
        %v4884 = vrot.slane %v4551, %v4883
        %v4885 = vlaneseq
        %v4886 = vshrl.u32 %v4885, 7
        %v4887 = vsub.s32 0, %v4886
        %v4888 = vrot.slane %v4552, %v4887
        %v4889 = vlaneseq
        %v4890 = vshrl.u32 %v4889, 7
        %v4891 = vsub.s32 0, %v4890
        %v4892 = vrot.slane %v4553, %v4891
        %v4893 = vlaneseq
        %v4894 = vshrl.u32 %v4893, 7
        %v4895 = vsub.s32 0, %v4894
        %v4896 = vrot.slane %v4554, %v4895
        %vm4897 = vcmask 1041409
        %v4898 = vsel %vm4897, %v4648, %v4644
        %vm4899 = vcmask 1042434
        %v4900 = vsel %vm4899, %v4652, %v4898
        %vm4901 = vcmask 1043459
        %v4902 = vsel %vm4901, %v4656, %v4900
        %vm4903 = vcmask 1044484
        %v4904 = vsel %vm4903, %v4660, %v4902
        %vm4905 = vcmask 1045509
        %v4906 = vsel %vm4905, %v4664, %v4904
        %vm4907 = vcmask 1046534
        %v4908 = vsel %vm4907, %v4668, %v4906
        %vm4909 = vcmask 1047559
        %v4910 = vsel %vm4909, %v4672, %v4908
        %v4911 = vsel %vm4897, %v4680, %v4676
        %v4912 = vsel %vm4899, %v4684, %v4911
        %v4913 = vsel %vm4901, %v4688, %v4912
        %v4914 = vsel %vm4903, %v4692, %v4913
        %v4915 = vsel %vm4905, %v4696, %v4914
        %v4916 = vsel %vm4907, %v4700, %v4915
        %v4917 = vsel %vm4909, %v4704, %v4916
        %v4918 = vsel %vm4897, %v4712, %v4708
        %v4919 = vsel %vm4899, %v4716, %v4918
        %v4920 = vsel %vm4901, %v4720, %v4919
        %v4921 = vsel %vm4903, %v4724, %v4920
        %v4922 = vsel %vm4905, %v4728, %v4921
        %v4923 = vsel %vm4907, %v4732, %v4922
        %v4924 = vsel %vm4909, %v4736, %v4923
        %v4925 = vsel %vm4897, %v4744, %v4740
        %v4926 = vsel %vm4899, %v4748, %v4925
        %v4927 = vsel %vm4901, %v4752, %v4926
        %v4928 = vsel %vm4903, %v4756, %v4927
        %v4929 = vsel %vm4905, %v4760, %v4928
        %v4930 = vsel %vm4907, %v4764, %v4929
        %v4931 = vsel %vm4909, %v4768, %v4930
        %v4932 = vsel %vm4897, %v4776, %v4772
        %v4933 = vsel %vm4899, %v4780, %v4932
        %v4934 = vsel %vm4901, %v4784, %v4933
        %v4935 = vsel %vm4903, %v4788, %v4934
        %v4936 = vsel %vm4905, %v4792, %v4935
        %v4937 = vsel %vm4907, %v4796, %v4936
        %v4938 = vsel %vm4909, %v4800, %v4937
        %v4939 = vsel %vm4897, %v4808, %v4804
        %v4940 = vsel %vm4899, %v4812, %v4939
        %v4941 = vsel %vm4901, %v4816, %v4940
        %v4942 = vsel %vm4903, %v4820, %v4941
        %v4943 = vsel %vm4905, %v4824, %v4942
        %v4944 = vsel %vm4907, %v4828, %v4943
        %v4945 = vsel %vm4909, %v4832, %v4944
        %v4946 = vsel %vm4897, %v4840, %v4836
        %v4947 = vsel %vm4899, %v4844, %v4946
        %v4948 = vsel %vm4901, %v4848, %v4947
        %v4949 = vsel %vm4903, %v4852, %v4948
        %v4950 = vsel %vm4905, %v4856, %v4949
        %v4951 = vsel %vm4907, %v4860, %v4950
        %v4952 = vsel %vm4909, %v4864, %v4951
        %v4953 = vsel %vm4897, %v4872, %v4868
        %v4954 = vsel %vm4899, %v4876, %v4953
        %v4955 = vsel %vm4901, %v4880, %v4954
        %v4956 = vsel %vm4903, %v4884, %v4955
        %v4957 = vsel %vm4905, %v4888, %v4956
        %v4958 = vsel %vm4907, %v4892, %v4957
        %v4959 = vsel %vm4909, %v4896, %v4958
        %s4968 = scalar_lea.vmem [#allocation3], 16
        %4969 = vst.msk [vmem:[%s4968 + $0x1] sm:$0xff] %vm4555, %v4910
        %4970 = vst.msk [vmem:[%s4968 + $0x11] sm:$0xff] %vm4555, %v4917
        %4971 = vst.msk [vmem:[%s4968 + $0x21] sm:$0xff] %vm4555, %v4924
        %4972 = vst.msk [vmem:[%s4968 + $0x31] sm:$0xff] %vm4555, %v4931
        %4973 = vst.msk [vmem:[%s4968 + $0x41] sm:$0xff] %vm4555, %v4938
        %4974 = vst.msk [vmem:[%s4968 + $0x51] sm:$0xff] %vm4555, %v4945
        %4975 = vst.msk [vmem:[%s4968 + $0x61] sm:$0xff] %vm4555, %v4952
        %4976 = vst.msk [vmem:[%s4968 + $0x71] sm:$0xff] %vm4555, %v4959
        %v4977 = vld [vmem:[#allocation5] sm:$0xff]
        %v4978 = vld [vmem:[#allocation5 + $0x8] sm:$0xff]
        %v4979 = vld [vmem:[#allocation5 + $0x10] sm:$0xff]
        %v4980 = vld [vmem:[#allocation5 + $0x18] sm:$0xff]
        %v4981 = vld [vmem:[#allocation5 + $0x20] sm:$0xff]
        %v4982 = vld [vmem:[#allocation5 + $0x28] sm:$0xff]
        %v4983 = vld [vmem:[#allocation5 + $0x30] sm:$0xff]
        %v4984 = vld [vmem:[#allocation5 + $0x38] sm:$0xff]
        %v4985 = vld [vmem:[#allocation5 + $0x40] sm:$0xff]
        %v4986 = vld [vmem:[#allocation5 + $0x48] sm:$0xff]
        %v4987 = vld [vmem:[#allocation5 + $0x50] sm:$0xff]
        %v4988 = vld [vmem:[#allocation5 + $0x58] sm:$0xff]
        %v4989 = vld [vmem:[#allocation5 + $0x60] sm:$0xff]
        %v4990 = vld [vmem:[#allocation5 + $0x68] sm:$0xff]
        %v4991 = vld [vmem:[#allocation5 + $0x70] sm:$0xff]
        %v4992 = vld [vmem:[#allocation5 + $0x78] sm:$0xff]
        %v4993 = vld [vmem:[#allocation5 + $0x80] sm:$0xff]
        %v4994 = vld [vmem:[#allocation5 + $0x88] sm:$0xff]
        %v4995 = vld [vmem:[#allocation5 + $0x90] sm:$0xff]
        %v4996 = vld [vmem:[#allocation5 + $0x98] sm:$0xff]
        %v4997 = vld [vmem:[#allocation5 + $0xa0] sm:$0xff]
        %v4998 = vld [vmem:[#allocation5 + $0xa8] sm:$0xff]
        %v4999 = vld [vmem:[#allocation5 + $0xb0] sm:$0xff]
        %v5000 = vld [vmem:[#allocation5 + $0xb8] sm:$0xff]
        %v5001 = vld [vmem:[#allocation5 + $0xc0] sm:$0xff]
        %v5002 = vld [vmem:[#allocation5 + $0xc8] sm:$0xff]
        %v5003 = vld [vmem:[#allocation5 + $0xd0] sm:$0xff]
        %v5004 = vld [vmem:[#allocation5 + $0xd8] sm:$0xff]
        %v5005 = vld [vmem:[#allocation5 + $0xe0] sm:$0xff]
        %v5006 = vld [vmem:[#allocation5 + $0xe8] sm:$0xff]
        %v5007 = vld [vmem:[#allocation5 + $0xf0] sm:$0xff]
        %v5008 = vld [vmem:[#allocation5 + $0xf8] sm:$0xff]
        %v5009 = vld [vmem:[#allocation5 + $0x100] sm:$0xff]
        %v5010 = vld [vmem:[#allocation5 + $0x108] sm:$0xff]
        %v5011 = vld [vmem:[#allocation5 + $0x110] sm:$0xff]
        %v5012 = vld [vmem:[#allocation5 + $0x118] sm:$0xff]
        %v5013 = vld [vmem:[%s4] sm:$0x1]
        %v5014 = vld [vmem:[#allocation3] sm:$0xff]
        %v5015 = vld [vmem:[#allocation3 + $0x10] sm:$0xff]
        %v5016 = vld [vmem:[#allocation3 + $0x20] sm:$0xff]
        %v5017 = vld [vmem:[#allocation3 + $0x30] sm:$0xff]
        %v5018 = vld [vmem:[#allocation3 + $0x40] sm:$0xff]
        %v5019 = vld [vmem:[#allocation3 + $0x50] sm:$0xff]
        %v5020 = vld [vmem:[#allocation3 + $0x60] sm:$0xff]
        %v5021 = vld [vmem:[#allocation3 + $0x70] sm:$0xff]
        %v5022 = vld [vmem:[#allocation3 + $0x1] sm:$0xff]
        %v5023 = vld [vmem:[#allocation3 + $0x11] sm:$0xff]
        %v5024 = vld [vmem:[#allocation3 + $0x21] sm:$0xff]
        %v5025 = vld [vmem:[#allocation3 + $0x31] sm:$0xff]
        %v5026 = vld [vmem:[#allocation3 + $0x41] sm:$0xff]
        %v5027 = vld [vmem:[#allocation3 + $0x51] sm:$0xff]
        %v5028 = vld [vmem:[#allocation3 + $0x61] sm:$0xff]
        %v5029 = vld [vmem:[#allocation3 + $0x71] sm:$0xff]
        %v5030 = vld [vmem:[#allocation3 + $0x2] sm:$0xff]
        %v5031 = vld [vmem:[#allocation3 + $0x12] sm:$0xff]
        %v5032 = vld [vmem:[#allocation3 + $0x22] sm:$0xff]
        %v5033 = vld [vmem:[#allocation3 + $0x32] sm:$0xff]
        %v5034 = vld [vmem:[#allocation3 + $0x42] sm:$0xff]
        %v5035 = vld [vmem:[#allocation3 + $0x52] sm:$0xff]
        %v5036 = vld [vmem:[#allocation3 + $0x62] sm:$0xff]
        %v5037 = vld [vmem:[#allocation3 + $0x72] sm:$0xff]
        %v5038 = vld [vmem:[%s4968] sm:$0xff]
        %v5039 = vld [vmem:[%s4968 + $0x10] sm:$0xff]
        %v5040 = vld [vmem:[%s4968 + $0x20] sm:$0xff]
        %v5041 = vld [vmem:[%s4968 + $0x30] sm:$0xff]
        %v5042 = vld [vmem:[%s4968 + $0x40] sm:$0xff]
        %v5043 = vld [vmem:[%s4968 + $0x50] sm:$0xff]
        %v5044 = vld [vmem:[%s4968 + $0x60] sm:$0xff]
        %v5045 = vld [vmem:[%s4968 + $0x70] sm:$0xff]
        %v5046 = vld [vmem:[%s4968 + $0x1] sm:$0xff]
        %v5047 = vld [vmem:[%s4968 + $0x11] sm:$0xff]
        %v5048 = vld [vmem:[%s4968 + $0x21] sm:$0xff]
        %v5049 = vld [vmem:[%s4968 + $0x31] sm:$0xff]
        %v5050 = vld [vmem:[%s4968 + $0x41] sm:$0xff]
        %v5051 = vld [vmem:[%s4968 + $0x51] sm:$0xff]
        %v5052 = vld [vmem:[%s4968 + $0x61] sm:$0xff]
        %v5053 = vld [vmem:[%s4968 + $0x71] sm:$0xff]
        %v5054 = vld [vmem:[%s4968 + $0x2] sm:$0xff]
        %v5055 = vld [vmem:[%s4968 + $0x12] sm:$0xff]
        %v5056 = vld [vmem:[%s4968 + $0x22] sm:$0xff]
        %v5057 = vld [vmem:[%s4968 + $0x32] sm:$0xff]
        %v5058 = vld [vmem:[%s4968 + $0x42] sm:$0xff]
        %v5059 = vld [vmem:[%s4968 + $0x52] sm:$0xff]
        %v5060 = vld [vmem:[%s4968 + $0x62] sm:$0xff]
        %v5061 = vld [vmem:[%s4968 + $0x72] sm:$0xff]
        %s5062 = scalar_lea.vmem [#allocation3], 32
        %v5063 = vld [vmem:[%s5062] sm:$0xff]
        %v5064 = vld [vmem:[%s5062 + $0x10] sm:$0xff]
        %v5065 = vld [vmem:[%s5062 + $0x20] sm:$0xff]
        %v5066 = vld [vmem:[%s5062 + $0x30] sm:$0xff]
        %v5067 = vld [vmem:[%s5062 + $0x40] sm:$0xff]
        %v5068 = vld [vmem:[%s5062 + $0x50] sm:$0xff]
        %v5069 = vld [vmem:[%s5062 + $0x60] sm:$0xff]
        %v5070 = vld [vmem:[%s5062 + $0x70] sm:$0xff]
        %v5071 = vld [vmem:[%s5062 + $0x1] sm:$0xff]
        %v5072 = vld [vmem:[%s5062 + $0x11] sm:$0xff]
        %v5073 = vld [vmem:[%s5062 + $0x21] sm:$0xff]
        %v5074 = vld [vmem:[%s5062 + $0x31] sm:$0xff]
        %v5075 = vld [vmem:[%s5062 + $0x41] sm:$0xff]
        %v5076 = vld [vmem:[%s5062 + $0x51] sm:$0xff]
        %v5077 = vld [vmem:[%s5062 + $0x61] sm:$0xff]
        %v5078 = vld [vmem:[%s5062 + $0x71] sm:$0xff]
        %v5079 = vld [vmem:[%s5062 + $0x2] sm:$0xff]
        %v5080 = vld [vmem:[%s5062 + $0x12] sm:$0xff]
        %v5081 = vld [vmem:[%s5062 + $0x22] sm:$0xff]
        %v5082 = vld [vmem:[%s5062 + $0x32] sm:$0xff]
        %v5083 = vld [vmem:[%s5062 + $0x42] sm:$0xff]
        %v5084 = vld [vmem:[%s5062 + $0x52] sm:$0xff]
        %v5085 = vld [vmem:[%s5062 + $0x62] sm:$0xff]
        %v5086 = vld [vmem:[%s5062 + $0x72] sm:$0xff]
        %5095 = vrot.lane.b32.xlu0 %v5022, 32
        %v5096 = vpop.permute.xlu0 %5095
        %5097 = vrot.lane.b32.xlu0 %v5023, 32
        %v5098 = vpop.permute.xlu0 %5097
        %5099 = vrot.lane.b32.xlu0 %v5024, 32
        %v5100 = vpop.permute.xlu0 %5099
        %5101 = vrot.lane.b32.xlu0 %v5025, 32
        %v5102 = vpop.permute.xlu0 %5101
        %5103 = vrot.lane.b32.xlu0 %v5026, 32
        %v5104 = vpop.permute.xlu0 %5103
        %5105 = vrot.lane.b32.xlu0 %v5027, 32
        %v5106 = vpop.permute.xlu0 %5105
        %5107 = vrot.lane.b32.xlu0 %v5028, 32
        %v5108 = vpop.permute.xlu0 %5107
        %5109 = vrot.lane.b32.xlu0 %v5029, 32
        %v5110 = vpop.permute.xlu0 %5109
        %5127 = vrot.lane.b32.xlu0 %v5030, 64
        %v5128 = vpop.permute.xlu0 %5127
        %5129 = vrot.lane.b32.xlu0 %v5031, 64
        %v5130 = vpop.permute.xlu0 %5129
        %5131 = vrot.lane.b32.xlu0 %v5032, 64
        %v5132 = vpop.permute.xlu0 %5131
        %5133 = vrot.lane.b32.xlu0 %v5033, 64
        %v5134 = vpop.permute.xlu0 %5133
        %5135 = vrot.lane.b32.xlu0 %v5034, 64
        %v5136 = vpop.permute.xlu0 %5135
        %5137 = vrot.lane.b32.xlu0 %v5035, 64
        %v5138 = vpop.permute.xlu0 %5137
        %5139 = vrot.lane.b32.xlu0 %v5036, 64
        %v5140 = vpop.permute.xlu0 %5139
        %5141 = vrot.lane.b32.xlu0 %v5037, 64
        %v5142 = vpop.permute.xlu0 %5141
        %5159 = vrot.lane.b32.xlu0 %v5038, 96
        %v5160 = vpop.permute.xlu0 %5159
        %5161 = vrot.lane.b32.xlu0 %v5039, 96
        %v5162 = vpop.permute.xlu0 %5161
        %5163 = vrot.lane.b32.xlu0 %v5040, 96
        %v5164 = vpop.permute.xlu0 %5163
        %5165 = vrot.lane.b32.xlu0 %v5041, 96
        %v5166 = vpop.permute.xlu0 %5165
        %5167 = vrot.lane.b32.xlu0 %v5042, 96
        %v5168 = vpop.permute.xlu0 %5167
        %5169 = vrot.lane.b32.xlu0 %v5043, 96
        %v5170 = vpop.permute.xlu0 %5169
        %5171 = vrot.lane.b32.xlu0 %v5044, 96
        %v5172 = vpop.permute.xlu0 %5171
        %5173 = vrot.lane.b32.xlu0 %v5045, 96
        %v5174 = vpop.permute.xlu0 %5173
        %5191 = vrot.lane.b32.xlu0 %v5054, 32
        %v5192 = vpop.permute.xlu0 %5191
        %5193 = vrot.lane.b32.xlu0 %v5055, 32
        %v5194 = vpop.permute.xlu0 %5193
        %5195 = vrot.lane.b32.xlu0 %v5056, 32
        %v5196 = vpop.permute.xlu0 %5195
        %5197 = vrot.lane.b32.xlu0 %v5057, 32
        %v5198 = vpop.permute.xlu0 %5197
        %5199 = vrot.lane.b32.xlu0 %v5058, 32
        %v5200 = vpop.permute.xlu0 %5199
        %5201 = vrot.lane.b32.xlu0 %v5059, 32
        %v5202 = vpop.permute.xlu0 %5201
        %5203 = vrot.lane.b32.xlu0 %v5060, 32
        %v5204 = vpop.permute.xlu0 %5203
        %5205 = vrot.lane.b32.xlu0 %v5061, 32
        %v5206 = vpop.permute.xlu0 %5205
        %5223 = vrot.lane.b32.xlu0 %v5063, 64
        %v5224 = vpop.permute.xlu0 %5223
        %5225 = vrot.lane.b32.xlu0 %v5064, 64
        %v5226 = vpop.permute.xlu0 %5225
        %5227 = vrot.lane.b32.xlu0 %v5065, 64
        %v5228 = vpop.permute.xlu0 %5227
        %5229 = vrot.lane.b32.xlu0 %v5066, 64
        %v5230 = vpop.permute.xlu0 %5229
        %5231 = vrot.lane.b32.xlu0 %v5067, 64
        %v5232 = vpop.permute.xlu0 %5231
        %5233 = vrot.lane.b32.xlu0 %v5068, 64
        %v5234 = vpop.permute.xlu0 %5233
        %5235 = vrot.lane.b32.xlu0 %v5069, 64
        %v5236 = vpop.permute.xlu0 %5235
        %5237 = vrot.lane.b32.xlu0 %v5070, 64
        %v5238 = vpop.permute.xlu0 %5237
        %5255 = vrot.lane.b32.xlu0 %v5071, 96
        %v5256 = vpop.permute.xlu0 %5255
        %5257 = vrot.lane.b32.xlu0 %v5072, 96
        %v5258 = vpop.permute.xlu0 %5257
        %5259 = vrot.lane.b32.xlu0 %v5073, 96
        %v5260 = vpop.permute.xlu0 %5259
        %5261 = vrot.lane.b32.xlu0 %v5074, 96
        %v5262 = vpop.permute.xlu0 %5261
        %5263 = vrot.lane.b32.xlu0 %v5075, 96
        %v5264 = vpop.permute.xlu0 %5263
        %5265 = vrot.lane.b32.xlu0 %v5076, 96
        %v5266 = vpop.permute.xlu0 %5265
        %5267 = vrot.lane.b32.xlu0 %v5077, 96
        %v5268 = vpop.permute.xlu0 %5267
        %5269 = vrot.lane.b32.xlu0 %v5078, 96
        %v5270 = vpop.permute.xlu0 %5269
        %v5279 = vsel %vm4555, %v5014, %v5096
        %v5280 = vsel %vm4555, %v5015, %v5098
        %v5281 = vsel %vm4555, %v5016, %v5100
        %v5282 = vsel %vm4555, %v5017, %v5102
        %v5283 = vsel %vm4555, %v5018, %v5104
        %v5284 = vsel %vm4555, %v5019, %v5106
        %v5285 = vsel %vm4555, %v5020, %v5108
        %v5286 = vsel %vm4555, %v5021, %v5110
        %vm5287 = vcmask 523264
        %v5288 = vsel %vm5287, %v5279, %v5128
        %v5289 = vsel %vm5287, %v5280, %v5130
        %v5290 = vsel %vm5287, %v5281, %v5132
        %v5291 = vsel %vm5287, %v5282, %v5134
        %v5292 = vsel %vm5287, %v5283, %v5136
        %v5293 = vsel %vm5287, %v5284, %v5138
        %v5294 = vsel %vm5287, %v5285, %v5140
        %v5295 = vsel %vm5287, %v5286, %v5142
        %vm5296 = vcmask 785408
        %v5297 = vsel %vm5296, %v5288, %v5160
        %v5298 = vsel %vm5296, %v5289, %v5162
        %v5299 = vsel %vm5296, %v5290, %v5164
        %v5300 = vsel %vm5296, %v5291, %v5166
        %v5301 = vsel %vm5296, %v5292, %v5168
        %v5302 = vsel %vm5296, %v5293, %v5170
        %v5303 = vsel %vm5296, %v5294, %v5172
        %v5304 = vsel %vm5296, %v5295, %v5174
        %v5305 = vsel %vm4555, %v5046, %v5192
        %v5306 = vsel %vm4555, %v5047, %v5194
        %v5307 = vsel %vm4555, %v5048, %v5196
        %v5308 = vsel %vm4555, %v5049, %v5198
        %v5309 = vsel %vm4555, %v5050, %v5200
        %v5310 = vsel %vm4555, %v5051, %v5202
        %v5311 = vsel %vm4555, %v5052, %v5204
        %v5312 = vsel %vm4555, %v5053, %v5206
        %v5313 = vsel %vm5287, %v5305, %v5224
        %v5314 = vsel %vm5287, %v5306, %v5226
        %v5315 = vsel %vm5287, %v5307, %v5228
        %v5316 = vsel %vm5287, %v5308, %v5230
        %v5317 = vsel %vm5287, %v5309, %v5232
        %v5318 = vsel %vm5287, %v5310, %v5234
        %v5319 = vsel %vm5287, %v5311, %v5236
        %v5320 = vsel %vm5287, %v5312, %v5238
        %v5321 = vsel %vm5296, %v5313, %v5256
        %v5322 = vsel %vm5296, %v5314, %v5258
        %v5323 = vsel %vm5296, %v5315, %v5260
        %v5324 = vsel %vm5296, %v5316, %v5262
        %v5325 = vsel %vm5296, %v5317, %v5264
        %v5326 = vsel %vm5296, %v5318, %v5266
        %v5327 = vsel %vm5296, %v5319, %v5268
        %v5328 = vsel %vm5296, %v5320, %v5270
        %v5330 = vlaneseq
        %v5331 = vshrl.u32 %v5330, 7
        %v5332 = vsub.s32 0, %v5331
        %v5333 = vrot.slane %v5013, %v5332
        %v5336 = vsel %vm4555, %v5079, 0
        %v5339 = vsel %vm4555, %v5080, 0
        %v5342 = vsel %vm4555, %v5081, 0
        %v5345 = vsel %vm4555, %v5082, 0
        %v5348 = vsel %vm4555, %v5083, 0
        %v5351 = vsel %vm4555, %v5084, 0
        %v5354 = vsel %vm4555, %v5085, 0
        %v5357 = vsel %vm4555, %v5086, 0
        %5359 = vmatprep.subr.mxu0 0.0
        %5360 = vmatpush1.msra.mxu0 %v4977
        %5361 = vmatprep.subr.mxu0 0.0
        %5362 = vmatpush1.msra.mxu0 %v4978
        %5363 = vmatprep.subr.mxu0 0.0
        %5364 = vmatpush1.msra.mxu0 %v4979
        %5365 = vmatprep.subr.mxu0 0.0
        %5366 = vmatpush1.msra.mxu0 %v4980
        %5367 = vmatprep.subr.mxu0 0.0
        %5368 = vmatpush1.msra.mxu0 %v4981
        %5369 = vmatprep.subr.mxu0 0.0
        %5370 = vmatpush1.msra.mxu0 %v4982
        %5371 = vmatprep.subr.mxu0 0.0
        %5372 = vmatpush1.msra.mxu0 %v4983
        %5373 = vmatprep.subr.mxu0 0.0
        %5374 = vmatpush1.msra.mxu0 %v4984
        %5375 = vmatprep.subr.mxu0 0.0
        %5376 = vmatpush1.msra.mxu0 %v4985
        %5377 = vmatprep.subr.mxu0 0.0
        %5378 = vmatpush1.msra.mxu0 %v4986
        %5379 = vmatprep.subr.mxu0 0.0
        %5380 = vmatpush1.msra.mxu0 %v4987
        %5381 = vmatprep.subr.mxu0 0.0
        %5382 = vmatpush1.msra.mxu0 %v4988
        %5383 = vmatprep.subr.mxu0 0.0
        %5384 = vmatpush1.msra.mxu0 %v4989
        %5385 = vmatprep.subr.mxu0 0.0
        %5386 = vmatpush1.msra.mxu0 %v4990
        %5387 = vmatprep.subr.mxu0 0.0
        %5388 = vmatpush1.msra.mxu0 %v4991
        %5389 = vmatprep.subr.mxu0 0.0
        %5390 = vmatpush1.msra.mxu0 %v4992
        %5391 = vmatprep.subr.mxu0 0.0
        %5392 = vmatpush1.msra.mxu0 %v4993
        %5393 = vmatprep.subr.mxu0 0.0
        %5394 = vmatpush1.msra.mxu0 %v4994
        %5395 = vmatprep.subr.mxu0 0.0
        %5396 = vmatpush1.msra.mxu0 %v4995
        %5397 = vmatprep.subr.mxu0 0.0
        %5398 = vmatpush1.msra.mxu0 %v4996
        %5399 = vmatprep.subr.mxu0 0.0
        %5400 = vmatpush1.msra.mxu0 %v4997
        %5401 = vmatprep.subr.mxu0 0.0
        %5402 = vmatpush1.msra.mxu0 %v4998
        %5403 = vmatprep.subr.mxu0 0.0
        %5404 = vmatpush1.msra.mxu0 %v4999
        %5405 = vmatprep.subr.mxu0 0.0
        %5406 = vmatpush1.msra.mxu0 %v5000
        %5407 = vmatprep.subr.mxu0 0.0
        %5408 = vmatpush1.msra.mxu0 %v5001
        %5409 = vmatprep.subr.mxu0 0.0
        %5410 = vmatpush1.msra.mxu0 %v5002
        %5411 = vmatprep.subr.mxu0 0.0
        %5412 = vmatpush1.msra.mxu0 %v5003
        %5413 = vmatprep.subr.mxu0 0.0
        %5414 = vmatpush1.msra.mxu0 %v5004
        %5415 = vmatprep.subr.mxu0 0.0
        %5416 = vmatpush1.msra.mxu0 %v5005
        %5417 = vmatprep.subr.mxu0 0.0
        %5418 = vmatpush1.msra.mxu0 %v5006
        %5419 = vmatprep.subr.mxu0 0.0
        %5420 = vmatpush1.msra.mxu0 %v5007
        %5421 = vmatprep.subr.mxu0 0.0
        %5422 = vmatpush1.msra.mxu0 %v5008
        %5423 = vmatprep.mubr.f32.mxu0 %v5321
        %5424 = vmatmul.mubr.f32.gmra.mrb[0].mxu0 %v5297
        %v5425 = vpop.f32.mrb[0].mxu0
        %v5426 = vadd.f32 %v5333, %v5425
        %v5427 = vpop.f32.mrb[0].mxu0
        %5428 = vmatprep.mubr.f32.mxu0 %v5322
        %5429 = vmatmul.mubr.f32.gmra.mrb[0].mxu0 %v5298
        %v5430 = vpop.f32.mrb[0].mxu0
        %v5431 = vadd.f32 %v5333, %v5430
        %v5432 = vpop.f32.mrb[0].mxu0
        %5433 = vmatprep.mubr.f32.mxu0 %v5323
        %5434 = vmatmul.mubr.f32.gmra.mrb[0].mxu0 %v5299
        %v5435 = vpop.f32.mrb[0].mxu0
        %v5436 = vadd.f32 %v5333, %v5435
        %v5437 = vpop.f32.mrb[0].mxu0
        %5438 = vmatprep.mubr.f32.mxu0 %v5324
        %5439 = vmatmul.mubr.f32.gmra.mrb[0].mxu0 %v5300
        %v5440 = vpop.f32.mrb[0].mxu0
        %v5441 = vadd.f32 %v5333, %v5440
        %v5442 = vpop.f32.mrb[0].mxu0
        %5443 = vmatprep.mubr.f32.mxu0 %v5325
        %5444 = vmatmul.mubr.f32.gmra.mrb[0].mxu0 %v5301
        %v5445 = vpop.f32.mrb[0].mxu0
        %v5446 = vadd.f32 %v5333, %v5445
        %v5447 = vpop.f32.mrb[0].mxu0
        %5448 = vmatprep.mubr.f32.mxu0 %v5326
        %5449 = vmatmul.mubr.f32.gmra.mrb[0].mxu0 %v5302
        %v5450 = vpop.f32.mrb[0].mxu0
        %v5451 = vadd.f32 %v5333, %v5450
        %v5452 = vpop.f32.mrb[0].mxu0
        %5453 = vmatprep.mubr.f32.mxu0 %v5327
        %5454 = vmatmul.mubr.f32.gmra.mrb[0].mxu0 %v5303
        %v5455 = vpop.f32.mrb[0].mxu0
        %v5456 = vadd.f32 %v5333, %v5455
        %v5457 = vpop.f32.mrb[0].mxu0
        %5458 = vmatprep.mubr.f32.mxu0 %v5328
        %5459 = vmatmul.mubr.f32.gmra.mrb[0].mxu0 %v5304
        %v5460 = vpop.f32.mrb[0].mxu0
        %v5461 = vadd.f32 %v5333, %v5460
        %v5462 = vpop.f32.mrb[0].mxu0
        %5463 = vdwg.mxu0
        %5464 = vmatprep.subr.mxu0 0.0
        %5465 = vmatpush1.msra.mxu0 %v5009
        %5466 = vmatprep.subr.mxu0 0.0
        %5467 = vmatpush1.msra.mxu0 %v5010
        %5468 = vmatprep.subr.mxu0 0.0
        %5469 = vmatpush1.msra.mxu0 %v5011
        %5470 = vmatprep.subr.mxu0 0.0
        %5471 = vmatpush1.msra.mxu0 %v5012
        %5472 = vmatprep.subr.mxu0 0.0
        %5473 = vmatpush1.msra.mxu0 0.0
        %5474 = vmatprep.subr.mxu0 0.0
        %5475 = vmatpush1.msra.mxu0 0.0
        %5476 = vmatprep.subr.mxu0 0.0
        %5477 = vmatpush1.msra.mxu0 0.0
        %5478 = vmatprep.subr.mxu0 0.0
        %5479 = vmatpush1.msra.mxu0 0.0
        %5480 = vmatprep.subr.mxu0 0.0
        %5481 = vmatpush1.msra.mxu0 0.0
        %5482 = vmatprep.subr.mxu0 0.0
        %5483 = vmatpush1.msra.mxu0 0.0
        %5484 = vmatprep.subr.mxu0 0.0
        %5485 = vmatpush1.msra.mxu0 0.0
        %5486 = vmatprep.subr.mxu0 0.0
        %5487 = vmatpush1.msra.mxu0 0.0
        %5488 = vmatprep.subr.mxu0 0.0
        %5489 = vmatpush1.msra.mxu0 0.0
        %5490 = vmatprep.subr.mxu0 0.0
        %5491 = vmatpush1.msra.mxu0 0.0
        %5492 = vmatprep.subr.mxu0 0.0
        %5493 = vmatpush1.msra.mxu0 0.0
        %5494 = vmatprep.subr.mxu0 0.0
        %5495 = vmatpush1.msra.mxu0 0.0
        %5496 = vmatprep.subr.mxu0 0.0
        %5497 = vmatpush1.msra.mxu0 0.0
        %5498 = vmatprep.subr.mxu0 0.0
        %5499 = vmatpush1.msra.mxu0 0.0
        %5500 = vmatprep.subr.mxu0 0.0
        %5501 = vmatpush1.msra.mxu0 0.0
        %5502 = vmatprep.subr.mxu0 0.0
        %5503 = vmatpush1.msra.mxu0 0.0
        %5504 = vmatprep.subr.mxu0 0.0
        %5505 = vmatpush1.msra.mxu0 0.0
        %5506 = vmatprep.subr.mxu0 0.0
        %5507 = vmatpush1.msra.mxu0 0.0
        %5508 = vmatprep.subr.mxu0 0.0
        %5509 = vmatpush1.msra.mxu0 0.0
        %5510 = vmatprep.subr.mxu0 0.0
        %5511 = vmatpush1.msra.mxu0 0.0
        %5512 = vmatprep.subr.mxu0 0.0
        %5513 = vmatpush1.msra.mxu0 0.0
        %5514 = vmatprep.subr.mxu0 0.0
        %5515 = vmatpush1.msra.mxu0 0.0
        %5516 = vmatprep.subr.mxu0 0.0
        %5517 = vmatpush1.msra.mxu0 0.0
        %5518 = vmatprep.subr.mxu0 0.0
        %5519 = vmatpush1.msra.mxu0 0.0
        %5520 = vmatprep.subr.mxu0 0.0
        %5521 = vmatpush1.msra.mxu0 0.0
        %5522 = vmatprep.subr.mxu0 0.0
        %5523 = vmatpush1.msra.mxu0 0.0
        %5524 = vmatprep.subr.mxu0 0.0
        %5525 = vmatpush1.msra.mxu0 0.0
        %5526 = vmatprep.subr.mxu0 0.0
        %5527 = vmatpush1.msra.mxu0 0.0
        %5528 = vmatprep.mubr.f32.mxu0 0.0
        %5529 = vmatmul.mubr.f32.gmra.mrb[0].mxu0 %v5336
        %v5530 = vpop.f32.mrb[0].mxu0
        %v5531 = vadd.f32 %v5426, %v5530
        %v5532 = vpop.f32.mrb[0].mxu0
        %5533 = vmatprep.mubr.f32.mxu0 0.0
        %5534 = vmatmul.mubr.f32.gmra.mrb[0].mxu0 %v5339
        %v5535 = vpop.f32.mrb[0].mxu0
        %v5536 = vadd.f32 %v5431, %v5535
        %v5537 = vpop.f32.mrb[0].mxu0
        %5538 = vmatprep.mubr.f32.mxu0 0.0
        %5539 = vmatmul.mubr.f32.gmra.mrb[0].mxu0 %v5342
        %v5540 = vpop.f32.mrb[0].mxu0
        %v5541 = vadd.f32 %v5436, %v5540
        %v5542 = vpop.f32.mrb[0].mxu0
        %5543 = vmatprep.mubr.f32.mxu0 0.0
        %5544 = vmatmul.mubr.f32.gmra.mrb[0].mxu0 %v5345
        %v5545 = vpop.f32.mrb[0].mxu0
        %v5546 = vadd.f32 %v5441, %v5545
        %v5547 = vpop.f32.mrb[0].mxu0
        %5548 = vmatprep.mubr.f32.mxu0 0.0
        %5549 = vmatmul.mubr.f32.gmra.mrb[0].mxu0 %v5348
        %v5550 = vpop.f32.mrb[0].mxu0
        %v5551 = vadd.f32 %v5446, %v5550
        %v5552 = vpop.f32.mrb[0].mxu0
        %5553 = vmatprep.mubr.f32.mxu0 0.0
        %5554 = vmatmul.mubr.f32.gmra.mrb[0].mxu0 %v5351
        %v5555 = vpop.f32.mrb[0].mxu0
        %v5556 = vadd.f32 %v5451, %v5555
        %v5557 = vpop.f32.mrb[0].mxu0
        %5558 = vmatprep.mubr.f32.mxu0 0.0
        %5559 = vmatmul.mubr.f32.gmra.mrb[0].mxu0 %v5354
        %v5560 = vpop.f32.mrb[0].mxu0
        %v5561 = vadd.f32 %v5456, %v5560
        %v5562 = vpop.f32.mrb[0].mxu0
        %5563 = vmatprep.mubr.f32.mxu0 0.0
        %5564 = vmatmul.mubr.f32.gmra.mrb[0].mxu0 %v5357
        %v5565 = vpop.f32.mrb[0].mxu0
        %v5566 = vadd.f32 %v5461, %v5565
        %v5567 = vpop.f32.mrb[0].mxu0
        %5568 = vdwg.mxu0
        %v5569 = vmax.f32 %v5531, 0.0
        %v5570 = vmax.f32 %v5536, 0.0
        %v5571 = vmax.f32 %v5541, 0.0
        %v5572 = vmax.f32 %v5546, 0.0
        %v5573 = vmax.f32 %v5551, 0.0
        %v5574 = vmax.f32 %v5556, 0.0
        %v5575 = vmax.f32 %v5561, 0.0
        %v5576 = vmax.f32 %v5566, 0.0
        %v5577 = vmax.f32 %v5569, %v5570
        %v5578 = vmax.f32 %v5571, %v5572
        %v5579 = vmax.f32 %v5573, %v5574
        %v5580 = vmax.f32 %v5575, %v5576
        %v5585 = vcombine.high %v5577, %v5577
        %v5587 = vunpack.c.l.s4 1983009808
        %v5588 = vunpack.c.0.s8 %v5587
        %v5589 = vlaneseq
        %v5590 = vshrl.u32 %v5589, 7
        %v5591 = vsub.s32 %v5588, %v5590
        %v5592 = vrot.slane %v5577, %v5591
        %v5594 = vunpack.c.l.s4 1983009808
        %v5595 = vunpack.c.0.s8 %v5594
        %v5596 = vlaneseq
        %v5597 = vshrl.u32 %v5596, 7
        %v5598 = vsub.s32 %v5595, %v5597
        %v5599 = vrot.slane %v5585, %v5598
        %v5600 = vcombine.high %v5592, %v5592
        %v5601 = vcombine.high %v5599, %v5599
        %v5602 = vcombine.high %v5578, %v5578
        %v5604 = vunpack.c.l.s4 1983009808
        %v5605 = vunpack.c.0.s8 %v5604
        %v5606 = vlaneseq
        %v5607 = vshrl.u32 %v5606, 7
        %v5608 = vsub.s32 %v5605, %v5607
        %v5609 = vrot.slane %v5578, %v5608
        %v5611 = vunpack.c.l.s4 1983009808
        %v5612 = vunpack.c.0.s8 %v5611
        %v5613 = vlaneseq
        %v5614 = vshrl.u32 %v5613, 7
        %v5615 = vsub.s32 %v5612, %v5614
        %v5616 = vrot.slane %v5602, %v5615
        %v5617 = vcombine.high %v5609, %v5609
        %v5618 = vcombine.high %v5616, %v5616
        %v5619 = vcombine.high %v5579, %v5579
        %v5621 = vunpack.c.l.s4 1983009808
        %v5622 = vunpack.c.0.s8 %v5621
        %v5623 = vlaneseq
        %v5624 = vshrl.u32 %v5623, 7
        %v5625 = vsub.s32 %v5622, %v5624
        %v5626 = vrot.slane %v5579, %v5625
        %v5628 = vunpack.c.l.s4 1983009808
        %v5629 = vunpack.c.0.s8 %v5628
        %v5630 = vlaneseq
        %v5631 = vshrl.u32 %v5630, 7
        %v5632 = vsub.s32 %v5629, %v5631
        %v5633 = vrot.slane %v5619, %v5632
        %v5634 = vcombine.high %v5626, %v5626
        %v5635 = vcombine.high %v5633, %v5633
        %v5636 = vcombine.high %v5580, %v5580
        %v5638 = vunpack.c.l.s4 1983009808
        %v5639 = vunpack.c.0.s8 %v5638
        %v5640 = vlaneseq
        %v5641 = vshrl.u32 %v5640, 7
        %v5642 = vsub.s32 %v5639, %v5641
        %v5643 = vrot.slane %v5580, %v5642
        %v5645 = vunpack.c.l.s4 1983009808
        %v5646 = vunpack.c.0.s8 %v5645
        %v5647 = vlaneseq
        %v5648 = vshrl.u32 %v5647, 7
        %v5649 = vsub.s32 %v5646, %v5648
        %v5650 = vrot.slane %v5636, %v5649
        %v5651 = vcombine.high %v5643, %v5643
        %v5652 = vcombine.high %v5650, %v5650
        %v5669 = vrot.slane %v5592, 7
        %v5670 = vrot.slane %v5669, 2
        %v5671 = vrot.slane %v5600, 7
        %v5672 = vrot.slane %v5671, 2
        %v5673 = vrot.slane %v5599, 7
        %v5674 = vrot.slane %v5673, 2
        %v5675 = vrot.slane %v5601, 7
        %v5676 = vrot.slane %v5675, 2
        %v5677 = vrot.slane %v5609, 7
        %v5678 = vrot.slane %v5677, 2
        %v5679 = vrot.slane %v5617, 7
        %v5680 = vrot.slane %v5679, 2
        %v5681 = vrot.slane %v5616, 7
        %v5682 = vrot.slane %v5681, 2
        %v5683 = vrot.slane %v5618, 7
        %v5684 = vrot.slane %v5683, 2
        %v5685 = vrot.slane %v5626, 7
        %v5686 = vrot.slane %v5685, 2
        %v5687 = vrot.slane %v5634, 7
        %v5688 = vrot.slane %v5687, 2
        %v5689 = vrot.slane %v5633, 7
        %v5690 = vrot.slane %v5689, 2
        %v5691 = vrot.slane %v5635, 7
        %v5692 = vrot.slane %v5691, 2
        %v5693 = vrot.slane %v5643, 7
        %v5694 = vrot.slane %v5693, 2
        %v5695 = vrot.slane %v5651, 7
        %v5696 = vrot.slane %v5695, 2
        %v5697 = vrot.slane %v5650, 7
        %v5698 = vrot.slane %v5697, 2
        %v5699 = vrot.slane %v5652, 7
        %v5700 = vrot.slane %v5699, 2
        %v5717 = vmax.f32 %v5592, %v5670
        %v5718 = vmax.f32 %v5600, %v5672
        %v5719 = vmax.f32 %v5599, %v5674
        %v5720 = vmax.f32 %v5601, %v5676
        %v5721 = vmax.f32 %v5609, %v5678
        %v5722 = vmax.f32 %v5617, %v5680
        %v5723 = vmax.f32 %v5616, %v5682
        %v5724 = vmax.f32 %v5618, %v5684
        %v5725 = vmax.f32 %v5626, %v5686
        %v5726 = vmax.f32 %v5634, %v5688
        %v5727 = vmax.f32 %v5633, %v5690
        %v5728 = vmax.f32 %v5635, %v5692
        %v5729 = vmax.f32 %v5643, %v5694
        %v5730 = vmax.f32 %v5651, %v5696
        %v5731 = vmax.f32 %v5650, %v5698
        %v5732 = vmax.f32 %v5652, %v5700
        %vm5733 = vcmask 521216
        %5734 = vst.msk [vmem:[#allocation4] sm:$0x3f] %vm5733, 0.0
        %5735 = vst.msk [vmem:[#allocation4 + $0x8] sm:$0x3f] %vm5733, 0.0
        %5736 = vst.msk [vmem:[#allocation4 + $0x10] sm:$0x3f] %vm5733, 0.0
        %5737 = vst.msk [vmem:[#allocation4 + $0x18] sm:$0x3f] %vm5733, 0.0
        %5738 = vst.msk [vmem:[#allocation4 + $0x20] sm:$0x3f] %vm5733, 0.0
        %5739 = vst.msk [vmem:[#allocation4 + $0x28] sm:$0x3f] %vm5733, 0.0
        %v5756 = vlaneseq
        %v5757 = vshrl.u32 %v5756, 7
        %v5758 = vsub.s32 0, %v5757
        %v5759 = vrot.slane %v5717, %v5758
        %v5760 = vlaneseq
        %v5761 = vshrl.u32 %v5760, 7
        %v5762 = vsub.s32 0, %v5761
        %v5763 = vrot.slane %v5718, %v5762
        %v5764 = vlaneseq
        %v5765 = vshrl.u32 %v5764, 7
        %v5766 = vsub.s32 0, %v5765
        %v5767 = vrot.slane %v5719, %v5766
        %v5768 = vlaneseq
        %v5769 = vshrl.u32 %v5768, 7
        %v5770 = vsub.s32 0, %v5769
        %v5771 = vrot.slane %v5720, %v5770
        %v5772 = vlaneseq
        %v5773 = vshrl.u32 %v5772, 7
        %v5774 = vsub.s32 0, %v5773
        %v5775 = vrot.slane %v5721, %v5774
        %v5776 = vlaneseq
        %v5777 = vshrl.u32 %v5776, 7
        %v5778 = vsub.s32 0, %v5777
        %v5779 = vrot.slane %v5722, %v5778
        %v5780 = vlaneseq
        %v5781 = vshrl.u32 %v5780, 7
        %v5782 = vsub.s32 0, %v5781
        %v5783 = vrot.slane %v5723, %v5782
        %v5784 = vlaneseq
        %v5785 = vshrl.u32 %v5784, 7
        %v5786 = vsub.s32 0, %v5785
        %v5787 = vrot.slane %v5724, %v5786
        %v5788 = vlaneseq
        %v5789 = vshrl.u32 %v5788, 7
        %v5790 = vsub.s32 0, %v5789
        %v5791 = vrot.slane %v5725, %v5790
        %v5792 = vlaneseq
        %v5793 = vshrl.u32 %v5792, 7
        %v5794 = vsub.s32 0, %v5793
        %v5795 = vrot.slane %v5726, %v5794
        %v5796 = vlaneseq
        %v5797 = vshrl.u32 %v5796, 7
        %v5798 = vsub.s32 0, %v5797
        %v5799 = vrot.slane %v5727, %v5798
        %v5800 = vlaneseq
        %v5801 = vshrl.u32 %v5800, 7
        %v5802 = vsub.s32 0, %v5801
        %v5803 = vrot.slane %v5728, %v5802
        %v5804 = vlaneseq
        %v5805 = vshrl.u32 %v5804, 7
        %v5806 = vsub.s32 0, %v5805
        %v5807 = vrot.slane %v5729, %v5806
        %v5808 = vlaneseq
        %v5809 = vshrl.u32 %v5808, 7
        %v5810 = vsub.s32 0, %v5809
        %v5811 = vrot.slane %v5730, %v5810
        %v5812 = vlaneseq
        %v5813 = vshrl.u32 %v5812, 7
        %v5814 = vsub.s32 0, %v5813
        %v5815 = vrot.slane %v5731, %v5814
        %v5816 = vlaneseq
        %v5817 = vshrl.u32 %v5816, 7
        %v5818 = vsub.s32 0, %v5817
        %v5819 = vrot.slane %v5732, %v5818
        %v5820 = vsel %vm4897, %v5763, %v5759
        %v5821 = vsel %vm4899, %v5767, %v5820
        %v5822 = vsel %vm4901, %v5771, %v5821
        %v5823 = vsel %vm4897, %v5779, %v5775
        %v5824 = vsel %vm4899, %v5783, %v5823
        %v5825 = vsel %vm4901, %v5787, %v5824
        %v5826 = vsel %vm4897, %v5795, %v5791
        %v5827 = vsel %vm4899, %v5799, %v5826
        %v5828 = vsel %vm4901, %v5803, %v5827
        %v5829 = vsel %vm4897, %v5811, %v5807
        %v5830 = vsel %vm4899, %v5815, %v5829
        %v5831 = vsel %vm4901, %v5819, %v5830
        %s5836 = scalar_lea.vmem [#allocation4], 8
        %vm5837 = vcmask 519168
        %5838 = vst.msk [vmem:[%s5836 + $0x1] sm:$0xf] %vm5837, %v5822
        %5839 = vst.msk [vmem:[%s5836 + $0x9] sm:$0xf] %vm5837, %v5825
        %5840 = vst.msk [vmem:[%s5836 + $0x11] sm:$0xf] %vm5837, %v5828
        %5841 = vst.msk [vmem:[%s5836 + $0x19] sm:$0xf] %vm5837, %v5831
        %v5842 = vld [vmem:[%s5] sm:$0xff]
        %v5843 = vld [vmem:[%s5 + $0x8] sm:$0xff]
        %v5844 = vld [vmem:[%s5 + $0x10] sm:$0xff]
        %v5845 = vld [vmem:[%s5 + $0x18] sm:$0xff]
        %v5846 = vld [vmem:[%s5 + $0x20] sm:$0xff]
        %v5847 = vld [vmem:[%s5 + $0x28] sm:$0xff]
        %v5848 = vld [vmem:[%s5 + $0x30] sm:$0xff]
        %v5849 = vld [vmem:[%s5 + $0x38] sm:$0xff]
        %v5850 = vld [vmem:[%s5 + $0x40] sm:$0xff]
        %v5851 = vld [vmem:[%s5 + $0x48] sm:$0xff]
        %v5852 = vld [vmem:[%s5 + $0x50] sm:$0xff]
        %v5853 = vld [vmem:[%s5 + $0x58] sm:$0xff]
        %v5854 = vld [vmem:[%s5 + $0x60] sm:$0xff]
        %v5855 = vld [vmem:[%s5 + $0x68] sm:$0xff]
        %v5856 = vld [vmem:[%s5 + $0x70] sm:$0xff]
        %v5857 = vld [vmem:[%s5 + $0x78] sm:$0xff]
        %v5858 = vld [vmem:[%s5 + $0x80] sm:$0xff]
        %v5859 = vld [vmem:[%s5 + $0x88] sm:$0xff]
        %v5860 = vld [vmem:[%s5 + $0x90] sm:$0xff]
        %v5861 = vld [vmem:[%s5 + $0x98] sm:$0xff]
        %v5862 = vld [vmem:[%s5 + $0xa0] sm:$0xff]
        %v5863 = vld [vmem:[%s5 + $0xa8] sm:$0xff]
        %v5864 = vld [vmem:[%s5 + $0xb0] sm:$0xff]
        %v5865 = vld [vmem:[%s5 + $0xb8] sm:$0xff]
        %v5866 = vld [vmem:[%s5 + $0xc0] sm:$0xff]
        %v5867 = vld [vmem:[%s5 + $0xc8] sm:$0xff]
        %v5868 = vld [vmem:[%s5 + $0xd0] sm:$0xff]
        %v5869 = vld [vmem:[%s5 + $0xd8] sm:$0xff]
        %v5870 = vld [vmem:[%s5 + $0xe0] sm:$0xff]
        %v5871 = vld [vmem:[%s5 + $0xe8] sm:$0xff]
        %v5872 = vld [vmem:[%s5 + $0xf0] sm:$0xff]
        %v5873 = vld [vmem:[%s5 + $0xf8] sm:$0xff]
        %v5874 = vld [vmem:[%s5 + $0x100] sm:$0xff]
        %v5875 = vld [vmem:[%s5 + $0x108] sm:$0xff]
        %v5876 = vld [vmem:[%s5 + $0x110] sm:$0xff]
        %v5877 = vld [vmem:[%s5 + $0x118] sm:$0xff]
        %v5878 = vld [vmem:[%s5 + $0x120] sm:$0xff]
        %v5879 = vld [vmem:[%s5 + $0x128] sm:$0xff]
        %v5880 = vld [vmem:[%s5 + $0x130] sm:$0xff]
        %v5881 = vld [vmem:[%s5 + $0x138] sm:$0xff]
        %v5882 = vld [vmem:[%s5 + $0x140] sm:$0xff]
        %v5883 = vld [vmem:[%s5 + $0x148] sm:$0xff]
        %v5884 = vld [vmem:[%s5 + $0x150] sm:$0xff]
        %v5885 = vld [vmem:[%s5 + $0x158] sm:$0xff]
        %v5886 = vld [vmem:[%s5 + $0x160] sm:$0xff]
        %v5887 = vld [vmem:[%s5 + $0x168] sm:$0xff]
        %v5888 = vld [vmem:[%s5 + $0x170] sm:$0xff]
        %v5889 = vld [vmem:[%s5 + $0x178] sm:$0xff]
        %v5890 = vld [vmem:[%s5 + $0x180] sm:$0xff]
        %v5891 = vld [vmem:[%s5 + $0x188] sm:$0xff]
        %v5892 = vld [vmem:[%s5 + $0x190] sm:$0xff]
        %v5893 = vld [vmem:[%s5 + $0x198] sm:$0xff]
        %v5894 = vld [vmem:[%s5 + $0x1a0] sm:$0xff]
        %v5895 = vld [vmem:[%s5 + $0x1a8] sm:$0xff]
        %v5896 = vld [vmem:[%s5 + $0x1b0] sm:$0xff]
        %v5897 = vld [vmem:[%s5 + $0x1b8] sm:$0xff]
        %v5898 = vld [vmem:[%s5 + $0x1c0] sm:$0xff]
        %v5899 = vld [vmem:[%s5 + $0x1c8] sm:$0xff]
        %v5900 = vld [vmem:[%s5 + $0x1d0] sm:$0xff]
        %v5901 = vld [vmem:[%s5 + $0x1d8] sm:$0xff]
        %v5902 = vld [vmem:[%s5 + $0x1e0] sm:$0xff]
        %v5903 = vld [vmem:[%s5 + $0x1e8] sm:$0xff]
        %v5904 = vld [vmem:[%s5 + $0x1f0] sm:$0xff]
        %v5905 = vld [vmem:[%s5 + $0x1f8] sm:$0xff]
        %v5906 = vld [vmem:[%s5 + $0x200] sm:$0xff]
        %v5907 = vld [vmem:[%s5 + $0x208] sm:$0xff]
        %v5908 = vld [vmem:[%s5 + $0x210] sm:$0xff]
        %v5909 = vld [vmem:[%s5 + $0x218] sm:$0xff]
        %v5910 = vld [vmem:[%s5 + $0x220] sm:$0xff]
        %v5911 = vld [vmem:[%s5 + $0x228] sm:$0xff]
        %v5912 = vld [vmem:[%s5 + $0x230] sm:$0xff]
        %v5913 = vld [vmem:[%s5 + $0x238] sm:$0xff]
        %v5914 = vld [vmem:[%s6] sm:$0x1]
        %v5915 = vld [vmem:[#allocation4] sm:$0xf]
        %v5916 = vld [vmem:[#allocation4 + $0x8] sm:$0xf]
        %v5917 = vld [vmem:[#allocation4 + $0x10] sm:$0xf]
        %v5918 = vld [vmem:[#allocation4 + $0x18] sm:$0xf]
        %v5919 = vld [vmem:[#allocation4 + $0x1] sm:$0xf]
        %v5920 = vld [vmem:[#allocation4 + $0x9] sm:$0xf]
        %v5921 = vld [vmem:[#allocation4 + $0x11] sm:$0xf]
        %v5922 = vld [vmem:[#allocation4 + $0x19] sm:$0xf]
        %v5923 = vld [vmem:[#allocation4 + $0x2] sm:$0xf]
        %v5924 = vld [vmem:[#allocation4 + $0xa] sm:$0xf]
        %v5925 = vld [vmem:[#allocation4 + $0x12] sm:$0xf]
        %v5926 = vld [vmem:[#allocation4 + $0x1a] sm:$0xf]
        %v5927 = vld [vmem:[%s5836] sm:$0xf]
        %v5928 = vld [vmem:[%s5836 + $0x8] sm:$0xf]
        %v5929 = vld [vmem:[%s5836 + $0x10] sm:$0xf]
        %v5930 = vld [vmem:[%s5836 + $0x18] sm:$0xf]
        %v5931 = vld [vmem:[%s5836 + $0x1] sm:$0xf]
        %v5932 = vld [vmem:[%s5836 + $0x9] sm:$0xf]
        %v5933 = vld [vmem:[%s5836 + $0x11] sm:$0xf]
        %v5934 = vld [vmem:[%s5836 + $0x19] sm:$0xf]
        %v5935 = vld [vmem:[%s5836 + $0x2] sm:$0xf]
        %v5936 = vld [vmem:[%s5836 + $0xa] sm:$0xf]
        %v5937 = vld [vmem:[%s5836 + $0x12] sm:$0xf]
        %v5938 = vld [vmem:[%s5836 + $0x1a] sm:$0xf]
        %s5939 = scalar_lea.vmem [#allocation4], 16
        %v5940 = vld [vmem:[%s5939] sm:$0xf]
        %v5941 = vld [vmem:[%s5939 + $0x8] sm:$0xf]
        %v5942 = vld [vmem:[%s5939 + $0x10] sm:$0xf]
        %v5943 = vld [vmem:[%s5939 + $0x18] sm:$0xf]
        %v5944 = vld [vmem:[%s5939 + $0x1] sm:$0xf]
        %v5945 = vld [vmem:[%s5939 + $0x9] sm:$0xf]
        %v5946 = vld [vmem:[%s5939 + $0x11] sm:$0xf]
        %v5947 = vld [vmem:[%s5939 + $0x19] sm:$0xf]
        %v5948 = vld [vmem:[%s5939 + $0x2] sm:$0xf]
        %v5949 = vld [vmem:[%s5939 + $0xa] sm:$0xf]
        %v5950 = vld [vmem:[%s5939 + $0x12] sm:$0xf]
        %v5951 = vld [vmem:[%s5939 + $0x1a] sm:$0xf]
        %v5956 = vcombine.low %v5915, %v5916
        %v5957 = vcombine.low %v5917, %v5918
        %v5964 = vcombine.low %v5919, %v5920
        %v5965 = vcombine.low %v5921, %v5922
        %5966 = vrot.lane.b32.xlu0 %v5964, 64
        %v5967 = vpop.permute.xlu0 %5966
        %5968 = vrot.lane.b32.xlu0 %v5965, 64
        %v5969 = vpop.permute.xlu0 %5968
        %v5976 = vcombine.low %v5923, %v5924
        %v5977 = vcombine.low %v5925, %v5926
        %v5984 = vcombine.low %v5927, %v5928
        %v5985 = vcombine.low %v5929, %v5930
        %5986 = vrot.lane.b32.xlu0 %v5984, 64
        %v5987 = vpop.permute.xlu0 %5986
        %5988 = vrot.lane.b32.xlu0 %v5985, 64
        %v5989 = vpop.permute.xlu0 %5988
        %v5996 = vcombine.low %v5931, %v5932
        %v5997 = vcombine.low %v5933, %v5934
        %v6004 = vcombine.low %v5935, %v5936
        %v6005 = vcombine.low %v5937, %v5938
        %6006 = vrot.lane.b32.xlu0 %v6004, 64
        %v6007 = vpop.permute.xlu0 %6006
        %6008 = vrot.lane.b32.xlu0 %v6005, 64
        %v6009 = vpop.permute.xlu0 %6008
        %v6016 = vcombine.low %v5940, %v5941
        %v6017 = vcombine.low %v5942, %v5943
        %v6024 = vcombine.low %v5944, %v5945
        %v6025 = vcombine.low %v5946, %v5947
        %6026 = vrot.lane.b32.xlu0 %v6024, 64
        %v6027 = vpop.permute.xlu0 %6026
        %6028 = vrot.lane.b32.xlu0 %v6025, 64
        %v6029 = vpop.permute.xlu0 %6028
        %v6036 = vcombine.low %v5948, %v5949
        %v6037 = vcombine.low %v5950, %v5951
        %v6038 = vsel %vm5287, %v5956, %v5967
        %v6039 = vsel %vm5287, %v5957, %v5969
        %v6040 = vsel %vm5287, %v5976, %v5987
        %v6041 = vsel %vm5287, %v5977, %v5989
        %v6042 = vsel %vm5287, %v5996, %v6007
        %v6043 = vsel %vm5287, %v5997, %v6009
        %v6044 = vsel %vm5287, %v6016, %v6027
        %v6045 = vsel %vm5287, %v6017, %v6029
        %v6047 = vlaneseq
        %v6048 = vshrl.u32 %v6047, 7
        %v6049 = vsub.s32 0, %v6048
        %v6050 = vrot.slane %v5914, %v6049
        %v6052 = vsel %vm5287, %v6036, 0
        %v6054 = vsel %vm5287, %v6037, 0
        %6056 = vmatprep.subr.mxu0 0.0
        %6057 = vmatpush1.msra.mxu0 %v5842
        %6058 = vmatprep.subr.mxu0 0.0
        %6059 = vmatpush1.msra.mxu0 %v5843
        %6060 = vmatprep.subr.mxu0 0.0
        %6061 = vmatpush1.msra.mxu0 %v5844
        %6062 = vmatprep.subr.mxu0 0.0
        %6063 = vmatpush1.msra.mxu0 %v5845
        %6064 = vmatprep.subr.mxu0 0.0
        %6065 = vmatpush1.msra.mxu0 %v5846
        %6066 = vmatprep.subr.mxu0 0.0
        %6067 = vmatpush1.msra.mxu0 %v5847
        %6068 = vmatprep.subr.mxu0 0.0
        %6069 = vmatpush1.msra.mxu0 %v5848
        %6070 = vmatprep.subr.mxu0 0.0
        %6071 = vmatpush1.msra.mxu0 %v5849
        %6072 = vmatprep.subr.mxu0 0.0
        %6073 = vmatpush1.msra.mxu0 %v5850
        %6074 = vmatprep.subr.mxu0 0.0
        %6075 = vmatpush1.msra.mxu0 %v5851
        %6076 = vmatprep.subr.mxu0 0.0
        %6077 = vmatpush1.msra.mxu0 %v5852
        %6078 = vmatprep.subr.mxu0 0.0
        %6079 = vmatpush1.msra.mxu0 %v5853
        %6080 = vmatprep.subr.mxu0 0.0
        %6081 = vmatpush1.msra.mxu0 %v5854
        %6082 = vmatprep.subr.mxu0 0.0
        %6083 = vmatpush1.msra.mxu0 %v5855
        %6084 = vmatprep.subr.mxu0 0.0
        %6085 = vmatpush1.msra.mxu0 %v5856
        %6086 = vmatprep.subr.mxu0 0.0
        %6087 = vmatpush1.msra.mxu0 %v5857
        %6088 = vmatprep.subr.mxu0 0.0
        %6089 = vmatpush1.msra.mxu0 %v5858
        %6090 = vmatprep.subr.mxu0 0.0
        %6091 = vmatpush1.msra.mxu0 %v5859
        %6092 = vmatprep.subr.mxu0 0.0
        %6093 = vmatpush1.msra.mxu0 %v5860
        %6094 = vmatprep.subr.mxu0 0.0
        %6095 = vmatpush1.msra.mxu0 %v5861
        %6096 = vmatprep.subr.mxu0 0.0
        %6097 = vmatpush1.msra.mxu0 %v5862
        %6098 = vmatprep.subr.mxu0 0.0
        %6099 = vmatpush1.msra.mxu0 %v5863
        %6100 = vmatprep.subr.mxu0 0.0
        %6101 = vmatpush1.msra.mxu0 %v5864
        %6102 = vmatprep.subr.mxu0 0.0
        %6103 = vmatpush1.msra.mxu0 %v5865
        %6104 = vmatprep.subr.mxu0 0.0
        %6105 = vmatpush1.msra.mxu0 %v5866
        %6106 = vmatprep.subr.mxu0 0.0
        %6107 = vmatpush1.msra.mxu0 %v5867
        %6108 = vmatprep.subr.mxu0 0.0
        %6109 = vmatpush1.msra.mxu0 %v5868
        %6110 = vmatprep.subr.mxu0 0.0
        %6111 = vmatpush1.msra.mxu0 %v5869
        %6112 = vmatprep.subr.mxu0 0.0
        %6113 = vmatpush1.msra.mxu0 %v5870
        %6114 = vmatprep.subr.mxu0 0.0
        %6115 = vmatpush1.msra.mxu0 %v5871
        %6116 = vmatprep.subr.mxu0 0.0
        %6117 = vmatpush1.msra.mxu0 %v5872
        %6118 = vmatprep.subr.mxu0 0.0
        %6119 = vmatpush1.msra.mxu0 %v5873
        %6120 = vmatprep.mubr.f32.mxu0 %v6040
        %6121 = vmatmul.mubr.f32.gmra.mrb[0].mxu0 %v6038
        %v6122 = vpop.f32.mrb[0].mxu0
        %v6123 = vadd.f32 %v6050, %v6122
        %v6124 = vpop.f32.mrb[0].mxu0
        %6125 = vmatprep.mubr.f32.mxu0 %v6041
        %6126 = vmatmul.mubr.f32.gmra.mrb[0].mxu0 %v6039
        %v6127 = vpop.f32.mrb[0].mxu0
        %v6128 = vadd.f32 %v6050, %v6127
        %v6129 = vpop.f32.mrb[0].mxu0
        %6130 = vdwg.mxu0
        %6131 = vmatprep.subr.mxu0 0.0
        %6132 = vmatpush1.msra.mxu0 %v5874
        %6133 = vmatprep.subr.mxu0 0.0
        %6134 = vmatpush1.msra.mxu0 %v5875
        %6135 = vmatprep.subr.mxu0 0.0
        %6136 = vmatpush1.msra.mxu0 %v5876
        %6137 = vmatprep.subr.mxu0 0.0
        %6138 = vmatpush1.msra.mxu0 %v5877
        %6139 = vmatprep.subr.mxu0 0.0
        %6140 = vmatpush1.msra.mxu0 %v5878
        %6141 = vmatprep.subr.mxu0 0.0
        %6142 = vmatpush1.msra.mxu0 %v5879
        %6143 = vmatprep.subr.mxu0 0.0
        %6144 = vmatpush1.msra.mxu0 %v5880
        %6145 = vmatprep.subr.mxu0 0.0
        %6146 = vmatpush1.msra.mxu0 %v5881
        %6147 = vmatprep.subr.mxu0 0.0
        %6148 = vmatpush1.msra.mxu0 %v5882
        %6149 = vmatprep.subr.mxu0 0.0
        %6150 = vmatpush1.msra.mxu0 %v5883
        %6151 = vmatprep.subr.mxu0 0.0
        %6152 = vmatpush1.msra.mxu0 %v5884
        %6153 = vmatprep.subr.mxu0 0.0
        %6154 = vmatpush1.msra.mxu0 %v5885
        %6155 = vmatprep.subr.mxu0 0.0
        %6156 = vmatpush1.msra.mxu0 %v5886
        %6157 = vmatprep.subr.mxu0 0.0
        %6158 = vmatpush1.msra.mxu0 %v5887
        %6159 = vmatprep.subr.mxu0 0.0
        %6160 = vmatpush1.msra.mxu0 %v5888
        %6161 = vmatprep.subr.mxu0 0.0
        %6162 = vmatpush1.msra.mxu0 %v5889
        %6163 = vmatprep.subr.mxu0 0.0
        %6164 = vmatpush1.msra.mxu0 %v5890
        %6165 = vmatprep.subr.mxu0 0.0
        %6166 = vmatpush1.msra.mxu0 %v5891
        %6167 = vmatprep.subr.mxu0 0.0
        %6168 = vmatpush1.msra.mxu0 %v5892
        %6169 = vmatprep.subr.mxu0 0.0
        %6170 = vmatpush1.msra.mxu0 %v5893
        %6171 = vmatprep.subr.mxu0 0.0
        %6172 = vmatpush1.msra.mxu0 %v5894
        %6173 = vmatprep.subr.mxu0 0.0
        %6174 = vmatpush1.msra.mxu0 %v5895
        %6175 = vmatprep.subr.mxu0 0.0
        %6176 = vmatpush1.msra.mxu0 %v5896
        %6177 = vmatprep.subr.mxu0 0.0
        %6178 = vmatpush1.msra.mxu0 %v5897
        %6179 = vmatprep.subr.mxu0 0.0
        %6180 = vmatpush1.msra.mxu0 %v5898
        %6181 = vmatprep.subr.mxu0 0.0
        %6182 = vmatpush1.msra.mxu0 %v5899
        %6183 = vmatprep.subr.mxu0 0.0
        %6184 = vmatpush1.msra.mxu0 %v5900
        %6185 = vmatprep.subr.mxu0 0.0
        %6186 = vmatpush1.msra.mxu0 %v5901
        %6187 = vmatprep.subr.mxu0 0.0
        %6188 = vmatpush1.msra.mxu0 %v5902
        %6189 = vmatprep.subr.mxu0 0.0
        %6190 = vmatpush1.msra.mxu0 %v5903
        %6191 = vmatprep.subr.mxu0 0.0
        %6192 = vmatpush1.msra.mxu0 %v5904
        %6193 = vmatprep.subr.mxu0 0.0
        %6194 = vmatpush1.msra.mxu0 %v5905
        %6195 = vmatprep.mubr.f32.mxu0 %v6044
        %6196 = vmatmul.mubr.f32.gmra.mrb[0].mxu0 %v6042
        %v6197 = vpop.f32.mrb[0].mxu0
        %v6198 = vadd.f32 %v6123, %v6197
        %v6199 = vpop.f32.mrb[0].mxu0
        %6200 = vmatprep.mubr.f32.mxu0 %v6045
        %6201 = vmatmul.mubr.f32.gmra.mrb[0].mxu0 %v6043
        %v6202 = vpop.f32.mrb[0].mxu0
        %v6203 = vadd.f32 %v6128, %v6202
        %v6204 = vpop.f32.mrb[0].mxu0
        %6205 = vdwg.mxu0
        %6206 = vmatprep.subr.mxu0 0.0
        %6207 = vmatpush1.msra.mxu0 %v5906
        %6208 = vmatprep.subr.mxu0 0.0
        %6209 = vmatpush1.msra.mxu0 %v5907
        %6210 = vmatprep.subr.mxu0 0.0
        %6211 = vmatpush1.msra.mxu0 %v5908
        %6212 = vmatprep.subr.mxu0 0.0
        %6213 = vmatpush1.msra.mxu0 %v5909
        %6214 = vmatprep.subr.mxu0 0.0
        %6215 = vmatpush1.msra.mxu0 %v5910
        %6216 = vmatprep.subr.mxu0 0.0
        %6217 = vmatpush1.msra.mxu0 %v5911
        %6218 = vmatprep.subr.mxu0 0.0
        %6219 = vmatpush1.msra.mxu0 %v5912
        %6220 = vmatprep.subr.mxu0 0.0
        %6221 = vmatpush1.msra.mxu0 %v5913
        %6222 = vmatprep.subr.mxu0 0.0
        %6223 = vmatpush1.msra.mxu0 0.0
        %6224 = vmatprep.subr.mxu0 0.0
        %6225 = vmatpush1.msra.mxu0 0.0
        %6226 = vmatprep.subr.mxu0 0.0
        %6227 = vmatpush1.msra.mxu0 0.0
        %6228 = vmatprep.subr.mxu0 0.0
        %6229 = vmatpush1.msra.mxu0 0.0
        %6230 = vmatprep.subr.mxu0 0.0
        %6231 = vmatpush1.msra.mxu0 0.0
        %6232 = vmatprep.subr.mxu0 0.0
        %6233 = vmatpush1.msra.mxu0 0.0
        %6234 = vmatprep.subr.mxu0 0.0
        %6235 = vmatpush1.msra.mxu0 0.0
        %6236 = vmatprep.subr.mxu0 0.0
        %6237 = vmatpush1.msra.mxu0 0.0
        %6238 = vmatprep.subr.mxu0 0.0
        %6239 = vmatpush1.msra.mxu0 0.0
        %6240 = vmatprep.subr.mxu0 0.0
        %6241 = vmatpush1.msra.mxu0 0.0
        %6242 = vmatprep.subr.mxu0 0.0
        %6243 = vmatpush1.msra.mxu0 0.0
        %6244 = vmatprep.subr.mxu0 0.0
        %6245 = vmatpush1.msra.mxu0 0.0
        %6246 = vmatprep.subr.mxu0 0.0
        %6247 = vmatpush1.msra.mxu0 0.0
        %6248 = vmatprep.subr.mxu0 0.0
        %6249 = vmatpush1.msra.mxu0 0.0
        %6250 = vmatprep.subr.mxu0 0.0
        %6251 = vmatpush1.msra.mxu0 0.0
        %6252 = vmatprep.subr.mxu0 0.0
        %6253 = vmatpush1.msra.mxu0 0.0
        %6254 = vmatprep.subr.mxu0 0.0
        %6255 = vmatpush1.msra.mxu0 0.0
        %6256 = vmatprep.subr.mxu0 0.0
        %6257 = vmatpush1.msra.mxu0 0.0
        %6258 = vmatprep.subr.mxu0 0.0
        %6259 = vmatpush1.msra.mxu0 0.0
        %6260 = vmatprep.subr.mxu0 0.0
        %6261 = vmatpush1.msra.mxu0 0.0
        %6262 = vmatprep.subr.mxu0 0.0
        %6263 = vmatpush1.msra.mxu0 0.0
        %6264 = vmatprep.subr.mxu0 0.0
        %6265 = vmatpush1.msra.mxu0 0.0
        %6266 = vmatprep.subr.mxu0 0.0
        %6267 = vmatpush1.msra.mxu0 0.0
        %6268 = vmatprep.subr.mxu0 0.0
        %6269 = vmatpush1.msra.mxu0 0.0
        %6270 = vmatprep.mubr.f32.mxu0 0.0
        %6271 = vmatmul.mubr.f32.gmra.mrb[0].mxu0 %v6052
        %v6272 = vpop.f32.mrb[0].mxu0
        %v6273 = vadd.f32 %v6198, %v6272
        %v6274 = vpop.f32.mrb[0].mxu0
        %6275 = vmatprep.mubr.f32.mxu0 0.0
        %6276 = vmatmul.mubr.f32.gmra.mrb[0].mxu0 %v6054
        %v6277 = vpop.f32.mrb[0].mxu0
        %v6278 = vadd.f32 %v6203, %v6277
        %v6279 = vpop.f32.mrb[0].mxu0
        %6280 = vdwg.mxu0
        %v6281 = vmax.f32 %v6273, 0.0
        %v6282 = vmax.f32 %v6278, 0.0
        %v6285 = vcombine.high %v6281, %v6281
        %v6286 = vcombine.high %v6282, %v6282
        %6289 = vst [vmem:[%s286] sm:$0xf] %v6281
        %6290 = vst [vmem:[%s286 + $0x4] sm:$0xf] %v6285
        %6291 = vst [vmem:[%s286 + $0x8] sm:$0xf] %v6282
        %6292 = vst [vmem:[%s286 + $0xc] sm:$0xf] %v6286
        %s6293 = sand.u32 %s182, 1
        %s6294 = scalar_lea.sflag [#allocation7], %s6293
        %s6295 = sand.u32 %s182, 1
        %s6296 = smul.addr %s6295, 16
        %s6297 = scalar_lea.vmem [#allocation8], %s6296
        // Predicated region
        $region53: #{encoder_forward.1} parent=47 // pred_check
          %p6298 = pneg %p192
        $region54: #{encoder_forward.1} parent=47 // pred_check_branch
          %6300 = sbr.rel (%p6298) target = $region56
        $region55: #{encoder_forward.1} parent=47 // pred_region
          %s6302 = ssub.s32 256, 256
          %6303 = vsyncadd %s6294, %s6302
          %s6304 = smul.addr %s22, 4
          %s6305 = smul.addr %s6304, 64
          %s6306 = scalar_lea.hbm %s7, %s6305
          %s6307 = sshll.u32 %s6297, 4
          %s6308 = int_to_ptr.vmem [resolvable:$true] %s6307
          %6313 = dma.vmem_to_hbm [thread:$0]  %s6308, 256, %s6306, %s6294, 64, 64, 4
        $region56: #{encoder_forward.1} parent=47 // pred_fallthru
          _
      $region48: #{encoder_forward.1} parent=5 // pred_fallthru
        _
      %p6314 = scmp.le.s32.totalorder 2, %s17
      // Predicated region
      $region57: #{encoder_forward.1} parent=5 // pred_check
        %p6315 = pneg %p6314
      $region58: #{encoder_forward.1} parent=5 // pred_check_branch
        %6317 = sbr.rel (%p6315) target = $region60
      $region59: #{encoder_forward.1} parent=5 // pred_region
        %s6318 = ssub.s32 %s17, 2
        // Predicated region
        $region61: #{encoder_forward.1} parent=59 // pred_check
          %p6319 = pneg %p198
        $region62: #{encoder_forward.1} parent=59 // pred_check_branch
          %6321 = sbr.rel (%p6319) target = $region64
        $region63: #{encoder_forward.1} parent=59 // pred_region
          %s6322 = sand.u32 %s183, 1
          %s6323 = scalar_lea.sflag [#allocation7], %s6322
          %s6324 = sand.u32 %s183, 1
          %s6325 = smul.addr %s6324, 16
          %s6326 = scalar_lea.vmem [#allocation8], %s6325
          %6327 = dma.done %s6323, 256
        $region64: #{encoder_forward.1} parent=59 // pred_fallthru
          _
      $region60: #{encoder_forward.1} parent=5 // pred_fallthru
        _
    $region6: #{encoder_forward.1} parent=1 // loop_footer
      %s21 = sadd.s32 1, %s17
    $region7: #{encoder_forward.1} parent=1 // loop_footer_branch
      %16 = sbr.rel target = $region3
    $region8: #{encoder_forward.1} parent=1 // loop_exit
      _
    %6328 = vsyncpa [#allocation6], 1
    %s6329 = scalar_lea.sflag [#allocation6], 1
    %6330 = vsyncpa %s6329, 1
    %6331 = vsyncpa [#allocation7], 1
    %s6332 = scalar_lea.sflag [#allocation7], 1
    %6333 = vsyncpa %s6332, 1

</llo_original>
